<compile_context>
chip_gen: v5e
topology: v5e:2x2
jax: 0.10.0
libtpu: 0.0.40
codegen_flags: <defaults>
</compile_context>

<pallas_src>
import numpy as np

import jax
import jax.numpy as jnp
from jax.experimental import pallas as pl
from jax.experimental.pallas import tpu as pltpu


# ---------------------------------------------------------------------------
# Fused kernel: conv1 -> pool -> conv2 -> pool -> fc1 -> fc2   (one batch tile)
# ---------------------------------------------------------------------------
def net_kernel(x_ref, w1t_ref, b1_ref, w2t_ref, b2_ref,
               fw1_ref, fb1_ref, fw2_ref, fb2_ref,
               o_ref, y1_scr, y2_scr, a1_scr):
    bt = x_ref.shape[1]

    # ---- conv1: 5 row-Toeplitz matmuls (K=28 input row), f32 scratch accumulation --
    # LHS rows are ordered (output-row i, batch b); output lanes are
    # (aj*128 + pooled-col pj*10 + channel c), aj = column pool member.
    for di in range(5):
        lhs = x_ref[di:di + 24].reshape(24 * bt, 28)            # bf16, (i, b) rows
        part = jnp.dot(lhs, w1t_ref[di], preferred_element_type=jnp.float32)
        if di == 0:
            y1_scr[...] = part
        else:
            y1_scr[...] += part

    # ---- 2x2 max-pool: columns via aligned lane halves, rows via outer-row pairs ---
    m1 = jnp.maximum(y1_scr[:, :128], y1_scr[:, 128:]).reshape(24, bt, 128)
    b1 = b1_ref[...]                                            # (1, 128) f32
    for pi in range(12):
        a = jnp.maximum(m1[2 * pi], m1[2 * pi + 1]) + b1        # (bt, 128)
        a1_scr[pi] = jnp.maximum(a, 0.0).astype(jnp.bfloat16)   # lane-dense bf16

    # ---- conv2: 5 row-Toeplitz matmuls (K=128 pooled row), f32 scratch accumulation -
    for di in range(5):
        lhs2 = a1_scr[di:di + 8].reshape(8 * bt, 128)           # bf16, (i2, b) rows
        part = jnp.dot(lhs2, w2t_ref[di], preferred_element_type=jnp.float32)
        if di == 0:
            y2_scr[...] = part
        else:
            y2_scr[...] += part

    # ---- conv2 pool + bias + ReLU; assemble the fc1 input as ONE (bt, 512) slab ----
    m2 = jnp.maximum(y2_scr[:, :128], y2_scr[:, 128:]).reshape(8, bt, 128)
    b2 = b2_ref[...]                                            # (1, 128) f32
    hs = []
    for pi2 in range(4):
        h = jnp.maximum(m2[2 * pi2], m2[2 * pi2 + 1]) + b2      # (bt, 128)
        hs.append(jnp.maximum(h, 0.0).astype(jnp.bfloat16))
    hcat = jnp.concatenate(hs, axis=-1)                         # (bt, 512) lane-aligned

    # ---- fc1 (single K=512 matmul) -> ReLU -> fc2 (output padded to 128 lanes) -----
    h1 = jnp.dot(hcat, fw1_ref[...], preferred_element_type=jnp.float32) + fb1_ref[...]
    h1 = jnp.maximum(h1, 0.0).astype(jnp.bfloat16)              # (bt, 50)
    y = jnp.dot(h1, fw2_ref[...], preferred_element_type=jnp.float32) + fb2_ref[...]
    o_ref[...] = y.astype(o_ref.dtype)                          # (bt, 128) lane-dense


# ---------------------------------------------------------------------------
# pallas_call wrapper (matches torch Net.forward; returns raw logits)
# ---------------------------------------------------------------------------
def net_forward(x_nchw, params, *, batch_tile=128):
    """batch_tile is the per-grid-step batch.  Guidance from the perf review:
    128-192 on v7x (64 MiB VMEM/TC, and keep grid >= 2 so both TCs get work),
    256-512 on v6e / v5e (128 MiB VMEM)."""
    B = x_nchw.shape[0]
    b8 = ((B + 7) // 8) * 8                     # batch rounded up to sublane multiple
    bt = max(8, min(((batch_tile + 7) // 8) * 8, b8))
    n_tiles = (B + bt - 1) // bt
    bpad = n_tiles * bt

    # Raw image, transposed to (row, batch, col) so conv1 matmul rows are (i, b):
    # ~1.6 KB/sample HBM read vs 38 KB/sample for the old pre-built im2col tensor.
    xt = jnp.transpose(x_nchw.reshape(B, 28, 28), (1, 0, 2)).astype(jnp.bfloat16)
    if bpad != B:
        xt = jnp.pad(xt, ((0, 0), (0, bpad - B), (0, 0)))

    flops = 2 * (24 * 28 * 256 * 5 + 8 * 128 * 256 * 5 + 512 * 50 + 50 * 128) * bpad
    w_bytes = sum(int(v.size) * v.dtype.itemsize for v in params.values())
    bytes_accessed = int(xt.size) * 2 + bpad * 128 * 4 + w_bytes

    out = pl.pallas_call(
        net_kernel,
        out_shape=jax.ShapeDtypeStruct((bpad, 128), jnp.float32),
        grid=(bpad // bt,),
        in_specs=[
            pl.BlockSpec((28, bt, 28), lambda i: (0, i, 0)),      # raw image block
            pl.BlockSpec((5, 28, 256), lambda i: (0, 0, 0)),      # conv1 Toeplitz w
            pl.BlockSpec((1, 128), lambda i: (0, 0)),             # conv1 bias row
            pl.BlockSpec((5, 128, 256), lambda i: (0, 0, 0)),     # conv2 Toeplitz w
            pl.BlockSpec((1, 128), lambda i: (0, 0)),             # conv2 bias row
            pl.BlockSpec((512, 50), lambda i: (0, 0)),            # fc1 weight
            pl.BlockSpec((1, 50), lambda i: (0, 0)),              # fc1 bias
            pl.BlockSpec((50, 128), lambda i: (0, 0)),            # fc2 weight (padded)
            pl.BlockSpec((1, 128), lambda i: (0, 0)),             # fc2 bias  (padded)
        ],
        out_specs=pl.BlockSpec((bt, 128), lambda i: (i, 0)),
        scratch_shapes=[
            pltpu.VMEM((24 * bt, 256), jnp.float32),   # conv1 pre-pool accumulator
            pltpu.VMEM((8 * bt, 256), jnp.float32),    # conv2 pre-pool accumulator
            pltpu.VMEM((12, bt, 128), jnp.bfloat16),   # pooled conv1 acts (lane-dense)
        ],
        compiler_params=pltpu.CompilerParams(
            dimension_semantics=("parallel",),
            vmem_limit_bytes=48 * 1024 * 1024,
        ),
        cost_estimate=pl.CostEstimate(
            flops=flops, transcendentals=0, bytes_accessed=bytes_accessed),
    )(xt, params["w1t"], params["b1"], params["w2t"], params["b2"],
      params["fw1"], params["fb1"], params["fw2"], params["fb2"])
    return out[:B, :10]


# ---------------------------------------------------------------------------
# Parameter packing: torch-layout weights -> kernel Toeplitz / lane-dense layouts
# ---------------------------------------------------------------------------
def pack_params(conv1_w, conv1_b, conv2_w, conv2_b, fc1_w, fc1_b, fc2_w, fc2_b):
    conv1_w = np.asarray(conv1_w, np.float32)   # (10, 1, 5, 5)
    conv1_b = np.asarray(conv1_b, np.float32)
    conv2_w = np.asarray(conv2_w, np.float32)   # (20, 10, 5, 5)
    conv2_b = np.asarray(conv2_b, np.float32)
    fc1_w = np.asarray(fc1_w, np.float32)       # (50, 320), col = c*16 + pi*4 + pj
    fc1_b = np.asarray(fc1_b, np.float32)
    fc2_w = np.asarray(fc2_w, np.float32)       # (10, 50)
    fc2_b = np.asarray(fc2_b, np.float32)

    # conv1 row-Toeplitz: out lane = aj*128 + pj*10 + c, contraction over input col k.
    w1t = np.zeros((5, 28, 256), np.float32)
    for di in range(5):
        for aj in range(2):
            for pj in range(12):
                j = 2 * pj + aj
                for dj in range(5):
                    base = aj * 128 + pj * 10
                    w1t[di, j + dj, base:base + 10] = conv1_w[:, 0, di, dj]
    b1row = np.zeros((1, 128), np.float32)
    for pj in range(12):
        b1row[0, pj * 10:pj * 10 + 10] = conv1_b

    # conv2 row-Toeplitz: in lane = pjsrc*10 + cin, out lane = aj*128 + pj2*20 + cout.
    w2t = np.zeros((5, 128, 256), np.float32)
    for di in range(5):
        for aj in range(2):
            for pj2 in range(4):
                j2 = 2 * pj2 + aj
                for dj in range(5):
                    pjs = j2 + dj
                    base = aj * 128 + pj2 * 20
                    for ci in range(10):
                        w2t[di, pjs * 10 + ci, base:base + 20] = conv2_w[:, ci, di, dj]
    b2row = np.zeros((1, 128), np.float32)
    for pj2 in range(4):
        b2row[0, pj2 * 20:pj2 * 20 + 20] = conv2_b

    # fc1: kernel lane pi2*128 + pj2*20 + c  <->  torch column c*16 + pi2*4 + pj2.
    fw1 = np.zeros((512, 50), np.float32)
    for pi2 in range(4):
        for pj2 in range(4):
            for c in range(20):
                fw1[pi2 * 128 + pj2 * 20 + c, :] = fc1_w[:, c * 16 + pi2 * 4 + pj2]

    fw2 = np.zeros((50, 128), np.float32)
    fw2[:, :10] = fc2_w.T
    fb2 = np.zeros((1, 128), np.float32)
    fb2[0, :10] = fc2_b

    return {
        "w1t": jnp.asarray(w1t, jnp.bfloat16),
        "b1": jnp.asarray(b1row, jnp.float32),
        "w2t": jnp.asarray(w2t, jnp.bfloat16),
        "b2": jnp.asarray(b2row, jnp.float32),
        "fw1": jnp.asarray(fw1, jnp.bfloat16),
        "fb1": jnp.asarray(fc1_b.reshape(1, 50), jnp.float32),
        "fw2": jnp.asarray(fw2, jnp.bfloat16),
        "fb2": jnp.asarray(fb2, jnp.float32),
    }


def init_params(key):
    """PyTorch-style uniform(-1/sqrt(fan_in), +) init in torch layouts, then packed."""
    ks = jax.random.split(key, 8)

    def u(k, shape, fan_in):
        bound = float(1.0 / np.sqrt(fan_in))
        return jax.random.uniform(k, shape, jnp.float32, -bound, bound)

    conv1_w = u(ks[0], (10, 1, 5, 5), 25)
    conv1_b = u(ks[1], (10,), 25)
    conv2_w = u(ks[2], (20, 10, 5, 5), 250)
    conv2_b = u(ks[3], (20,), 250)
    fc1_w = u(ks[4], (50, 320), 320)
    fc1_b = u(ks[5], (50,), 320)
    fc2_w = u(ks[6], (10, 50), 50)
    fc2_b = u(ks[7], (10,), 50)
    return pack_params(conv1_w, conv1_b, conv2_w, conv2_b,
                       fc1_w, fc1_b, fc2_w, fc2_b)


if __name__ == "__main__":
    key = jax.random.PRNGKey(0)
    kx, kp = jax.random.split(key)
    x = jax.random.normal(kx, (2, 1, 28, 28), jnp.float32)
    params = init_params(kp)

    out = jax.jit(net_forward)(x, params)
    out = jax.block_until_ready(out)

    assert out.shape == (2, 10), out.shape
    assert bool(jnp.all(jnp.isfinite(out)))
    print("KERNEL_OK")
</pallas_src>

<mosaic_0001>
module attributes {stable_mosaic.version = 11 : i64} {
  func.func @net_kernel(%arg0: i32, %arg1: memref<28x8x28xbf16, #tpu.memory_space<vmem>>, %arg2: memref<5x28x256xbf16, #tpu.memory_space<vmem>>, %arg3: memref<1x128xf32, #tpu.memory_space<vmem>>, %arg4: memref<5x128x256xbf16, #tpu.memory_space<vmem>>, %arg5: memref<1x128xf32, #tpu.memory_space<vmem>>, %arg6: memref<512x50xbf16, #tpu.memory_space<vmem>>, %arg7: memref<1x50xf32, #tpu.memory_space<vmem>>, %arg8: memref<50x128xbf16, #tpu.memory_space<vmem>>, %arg9: memref<1x128xf32, #tpu.memory_space<vmem>>, %arg10: memref<8x128xf32, #tpu.memory_space<vmem>>, %arg11: memref<192x256xf32, #tpu.memory_space<vmem>>, %arg12: memref<64x256xf32, #tpu.memory_space<vmem>>, %arg13: memref<12x8x128xbf16, #tpu.memory_space<vmem>>) attributes {dimension_semantics = [#tpu.dimension_semantics<parallel>], iteration_bounds = array<i64: 1>, scalar_prefetch = 0 : i64, scratch_operands = 3 : i64, tpu.core_type = #tpu.core_type<tc>, window_params = [{transform_indices = @transform_0, window_bounds = array<i64: 28, 8, 28>}, {pipeline_mode = #tpu.pipeline_mode<synchronous>, transform_indices = @transform_1, window_bounds = array<i64: 5, 28, 256>}, {pipeline_mode = #tpu.pipeline_mode<synchronous>, transform_indices = @transform_2, window_bounds = array<i64: 1, 128>}, {pipeline_mode = #tpu.pipeline_mode<synchronous>, transform_indices = @transform_3, window_bounds = array<i64: 5, 128, 256>}, {pipeline_mode = #tpu.pipeline_mode<synchronous>, transform_indices = @transform_4, window_bounds = array<i64: 1, 128>}, {pipeline_mode = #tpu.pipeline_mode<synchronous>, transform_indices = @transform_5, window_bounds = array<i64: 512, 50>}, {pipeline_mode = #tpu.pipeline_mode<synchronous>, transform_indices = @transform_6, window_bounds = array<i64: 1, 50>}, {pipeline_mode = #tpu.pipeline_mode<synchronous>, transform_indices = @transform_7, window_bounds = array<i64: 50, 128>}, {pipeline_mode = #tpu.pipeline_mode<synchronous>, transform_indices = @transform_8, window_bounds = array<i64: 1, 128>}, {transform_indices = @transform_9, window_bounds = array<i64: 8, 128>}]} {
    %c0 = arith.constant 0 : index
    %c0_0 = arith.constant 0 : index
    %c0_1 = arith.constant 0 : index
    %0 = vector.load %arg1[%c0, %c0_0, %c0_1] : memref<28x8x28xbf16, #tpu.memory_space<vmem>>, vector<24x8x28xbf16>
    %1 = vector.shape_cast %0 : vector<24x8x28xbf16> to vector<192x28xbf16>
    %c0_2 = arith.constant 0 : index
    %c0_3 = arith.constant 0 : index
    %c0_4 = arith.constant 0 : index
    %2 = vector.load %arg2[%c0_2, %c0_3, %c0_4] : memref<5x28x256xbf16, #tpu.memory_space<vmem>>, vector<1x28x256xbf16>
    %3 = vector.shape_cast %2 : vector<1x28x256xbf16> to vector<28x256xbf16>
    %cst = arith.constant dense<0.000000e+00> : vector<192x256xf32>
    %4 = tpu.matmul %1, %3, %cst {dimension_numbers = #tpu.dot_dimension_numbers<[1], [0], [0], [1], [0, 0, 1, 1], [], []>} : vector<192x28xbf16>, vector<28x256xbf16>, vector<192x256xf32> -> vector<192x256xf32>
    %c0_5 = arith.constant 0 : index
    %c0_6 = arith.constant 0 : index
    %5 = vector.load %arg11[%c0_5, %c0_6] : memref<192x256xf32, #tpu.memory_space<vmem>>, vector<192x256xf32>
    tpu.vector_store %arg11[%c0_5, %c0_6], %4 {strides = array<i32>} : memref<192x256xf32, #tpu.memory_space<vmem>>, vector<192x256xf32>,
    %c1 = arith.constant 1 : index
    %c0_7 = arith.constant 0 : index
    %c0_8 = arith.constant 0 : index
    %6 = vector.load %arg1[%c1, %c0_7, %c0_8] : memref<28x8x28xbf16, #tpu.memory_space<vmem>>, vector<24x8x28xbf16>
    %7 = vector.shape_cast %6 : vector<24x8x28xbf16> to vector<192x28xbf16>
    %c1_9 = arith.constant 1 : index
    %c0_10 = arith.constant 0 : index
    %c0_11 = arith.constant 0 : index
    %8 = vector.load %arg2[%c1_9, %c0_10, %c0_11] : memref<5x28x256xbf16, #tpu.memory_space<vmem>>, vector<1x28x256xbf16>
    %9 = vector.shape_cast %8 : vector<1x28x256xbf16> to vector<28x256xbf16>
    %cst_12 = arith.constant dense<0.000000e+00> : vector<192x256xf32>
    %10 = tpu.matmul %7, %9, %cst_12 {dimension_numbers = #tpu.dot_dimension_numbers<[1], [0], [0], [1], [0, 0, 1, 1], [], []>} : vector<192x28xbf16>, vector<28x256xbf16>, vector<192x256xf32> -> vector<192x256xf32>
    %c0_13 = arith.constant 0 : index
    %c0_14 = arith.constant 0 : index
    %11 = vector.load %arg11[%c0_13, %c0_14] : memref<192x256xf32, #tpu.memory_space<vmem>>, vector<192x256xf32>
    %12 = arith.addf %11, %10 : vector<192x256xf32>
    %c0_15 = arith.constant 0 : index
    %c0_16 = arith.constant 0 : index
    %13 = vector.load %arg11[%c0_15, %c0_16] : memref<192x256xf32, #tpu.memory_space<vmem>>, vector<192x256xf32>
    tpu.vector_store %arg11[%c0_15, %c0_16], %12 {strides = array<i32>} : memref<192x256xf32, #tpu.memory_space<vmem>>, vector<192x256xf32>,
    %c2 = arith.constant 2 : index
    %c0_17 = arith.constant 0 : index
    %c0_18 = arith.constant 0 : index
    %14 = vector.load %arg1[%c2, %c0_17, %c0_18] : memref<28x8x28xbf16, #tpu.memory_space<vmem>>, vector<24x8x28xbf16>
    %15 = vector.shape_cast %14 : vector<24x8x28xbf16> to vector<192x28xbf16>
    %c2_19 = arith.constant 2 : index
    %c0_20 = arith.constant 0 : index
    %c0_21 = arith.constant 0 : index
    %16 = vector.load %arg2[%c2_19, %c0_20, %c0_21] : memref<5x28x256xbf16, #tpu.memory_space<vmem>>, vector<1x28x256xbf16>
    %17 = vector.shape_cast %16 : vector<1x28x256xbf16> to vector<28x256xbf16>
    %cst_22 = arith.constant dense<0.000000e+00> : vector<192x256xf32>
    %18 = tpu.matmul %15, %17, %cst_22 {dimension_numbers = #tpu.dot_dimension_numbers<[1], [0], [0], [1], [0, 0, 1, 1], [], []>} : vector<192x28xbf16>, vector<28x256xbf16>, vector<192x256xf32> -> vector<192x256xf32>
    %c0_23 = arith.constant 0 : index
    %c0_24 = arith.constant 0 : index
    %19 = vector.load %arg11[%c0_23, %c0_24] : memref<192x256xf32, #tpu.memory_space<vmem>>, vector<192x256xf32>
    %20 = arith.addf %19, %18 : vector<192x256xf32>
    %c0_25 = arith.constant 0 : index
    %c0_26 = arith.constant 0 : index
    %21 = vector.load %arg11[%c0_25, %c0_26] : memref<192x256xf32, #tpu.memory_space<vmem>>, vector<192x256xf32>
    tpu.vector_store %arg11[%c0_25, %c0_26], %20 {strides = array<i32>} : memref<192x256xf32, #tpu.memory_space<vmem>>, vector<192x256xf32>,
    %c3 = arith.constant 3 : index
    %c0_27 = arith.constant 0 : index
    %c0_28 = arith.constant 0 : index
    %22 = vector.load %arg1[%c3, %c0_27, %c0_28] : memref<28x8x28xbf16, #tpu.memory_space<vmem>>, vector<24x8x28xbf16>
    %23 = vector.shape_cast %22 : vector<24x8x28xbf16> to vector<192x28xbf16>
    %c3_29 = arith.constant 3 : index
    %c0_30 = arith.constant 0 : index
    %c0_31 = arith.constant 0 : index
    %24 = vector.load %arg2[%c3_29, %c0_30, %c0_31] : memref<5x28x256xbf16, #tpu.memory_space<vmem>>, vector<1x28x256xbf16>
    %25 = vector.shape_cast %24 : vector<1x28x256xbf16> to vector<28x256xbf16>
    %cst_32 = arith.constant dense<0.000000e+00> : vector<192x256xf32>
    %26 = tpu.matmul %23, %25, %cst_32 {dimension_numbers = #tpu.dot_dimension_numbers<[1], [0], [0], [1], [0, 0, 1, 1], [], []>} : vector<192x28xbf16>, vector<28x256xbf16>, vector<192x256xf32> -> vector<192x256xf32>
    %c0_33 = arith.constant 0 : index
    %c0_34 = arith.constant 0 : index
    %27 = vector.load %arg11[%c0_33, %c0_34] : memref<192x256xf32, #tpu.memory_space<vmem>>, vector<192x256xf32>
    %28 = arith.addf %27, %26 : vector<192x256xf32>
    %c0_35 = arith.constant 0 : index
    %c0_36 = arith.constant 0 : index
    %29 = vector.load %arg11[%c0_35, %c0_36] : memref<192x256xf32, #tpu.memory_space<vmem>>, vector<192x256xf32>
    tpu.vector_store %arg11[%c0_35, %c0_36], %28 {strides = array<i32>} : memref<192x256xf32, #tpu.memory_space<vmem>>, vector<192x256xf32>,
    %c4 = arith.constant 4 : index
    %c0_37 = arith.constant 0 : index
    %c0_38 = arith.constant 0 : index
    %30 = vector.load %arg1[%c4, %c0_37, %c0_38] : memref<28x8x28xbf16, #tpu.memory_space<vmem>>, vector<24x8x28xbf16>
    %31 = vector.shape_cast %30 : vector<24x8x28xbf16> to vector<192x28xbf16>
    %c4_39 = arith.constant 4 : index
    %c0_40 = arith.constant 0 : index
    %c0_41 = arith.constant 0 : index
    %32 = vector.load %arg2[%c4_39, %c0_40, %c0_41] : memref<5x28x256xbf16, #tpu.memory_space<vmem>>, vector<1x28x256xbf16>
    %33 = vector.shape_cast %32 : vector<1x28x256xbf16> to vector<28x256xbf16>
    %cst_42 = arith.constant dense<0.000000e+00> : vector<192x256xf32>
    %34 = tpu.matmul %31, %33, %cst_42 {dimension_numbers = #tpu.dot_dimension_numbers<[1], [0], [0], [1], [0, 0, 1, 1], [], []>} : vector<192x28xbf16>, vector<28x256xbf16>, vector<192x256xf32> -> vector<192x256xf32>
    %c0_43 = arith.constant 0 : index
    %c0_44 = arith.constant 0 : index
    %35 = vector.load %arg11[%c0_43, %c0_44] : memref<192x256xf32, #tpu.memory_space<vmem>>, vector<192x256xf32>
    %36 = arith.addf %35, %34 : vector<192x256xf32>
    %c0_45 = arith.constant 0 : index
    %c0_46 = arith.constant 0 : index
    %37 = vector.load %arg11[%c0_45, %c0_46] : memref<192x256xf32, #tpu.memory_space<vmem>>, vector<192x256xf32>
    tpu.vector_store %arg11[%c0_45, %c0_46], %36 {strides = array<i32>} : memref<192x256xf32, #tpu.memory_space<vmem>>, vector<192x256xf32>,
    %c0_47 = arith.constant 0 : index
    %c0_48 = arith.constant 0 : index
    %38 = vector.load %arg11[%c0_47, %c0_48] : memref<192x256xf32, #tpu.memory_space<vmem>>, vector<192x128xf32>
    %c0_49 = arith.constant 0 : index
    %c128 = arith.constant 128 : index
    %39 = vector.load %arg11[%c0_49, %c128] : memref<192x256xf32, #tpu.memory_space<vmem>>, vector<192x128xf32>
    %40 = arith.maximumf %38, %39 : vector<192x128xf32>
    %41 = vector.shape_cast %40 : vector<192x128xf32> to vector<24x8x128xf32>
    %c0_50 = arith.constant 0 : index
    %c0_51 = arith.constant 0 : index
    %42 = vector.load %arg3[%c0_50, %c0_51] : memref<1x128xf32, #tpu.memory_space<vmem>>, vector<1x128xf32>
    %43 = vector.extract_strided_slice %41 {offsets = [0, 0, 0], sizes = [1, 8, 128], strides = [1, 1, 1]} : vector<24x8x128xf32> to vector<1x8x128xf32>
    %44 = vector.shape_cast %43 : vector<1x8x128xf32> to vector<8x128xf32>
    %45 = vector.extract_strided_slice %41 {offsets = [1, 0, 0], sizes = [1, 8, 128], strides = [1, 1, 1]} : vector<24x8x128xf32> to vector<1x8x128xf32>
    %46 = vector.shape_cast %45 : vector<1x8x128xf32> to vector<8x128xf32>
    %47 = arith.maximumf %44, %46 : vector<8x128xf32>
    %48 = vector.broadcast %42 : vector<1x128xf32> to vector<8x128xf32>
    %49 = arith.addf %47, %48 : vector<8x128xf32>
    %cst_52 = arith.constant 0.000000e+00 : f32
    %50 = vector.broadcast %cst_52 : f32 to vector<8x128xf32>
    %51 = arith.maximumf %49, %50 : vector<8x128xf32>
    %52 = arith.truncf %51 : vector<8x128xf32> to vector<8x128xbf16>
    %c0_53 = arith.constant 0 : index
    %c0_54 = arith.constant 0 : index
    %c0_55 = arith.constant 0 : index
    %53 = vector.load %arg13[%c0_53, %c0_54, %c0_55] : memref<12x8x128xbf16, #tpu.memory_space<vmem>>, vector<1x8x128xbf16>
    %54 = vector.shape_cast %53 : vector<1x8x128xbf16> to vector<8x128xbf16>
    %55 = vector.shape_cast %52 : vector<8x128xbf16> to vector<1x8x128xbf16>
    tpu.vector_store %arg13[%c0_53, %c0_54, %c0_55], %55 {strides = array<i32>} : memref<12x8x128xbf16, #tpu.memory_space<vmem>>, vector<1x8x128xbf16>,
    %56 = vector.extract_strided_slice %41 {offsets = [2, 0, 0], sizes = [1, 8, 128], strides = [1, 1, 1]} : vector<24x8x128xf32> to vector<1x8x128xf32>
    %57 = vector.shape_cast %56 : vector<1x8x128xf32> to vector<8x128xf32>
    %58 = vector.extract_strided_slice %41 {offsets = [3, 0, 0], sizes = [1, 8, 128], strides = [1, 1, 1]} : vector<24x8x128xf32> to vector<1x8x128xf32>
    %59 = vector.shape_cast %58 : vector<1x8x128xf32> to vector<8x128xf32>
    %60 = arith.maximumf %57, %59 : vector<8x128xf32>
    %61 = vector.broadcast %42 : vector<1x128xf32> to vector<8x128xf32>
    %62 = arith.addf %60, %61 : vector<8x128xf32>
    %cst_56 = arith.constant 0.000000e+00 : f32
    %63 = vector.broadcast %cst_56 : f32 to vector<8x128xf32>
    %64 = arith.maximumf %62, %63 : vector<8x128xf32>
    %65 = arith.truncf %64 : vector<8x128xf32> to vector<8x128xbf16>
    %c1_57 = arith.constant 1 : index
    %c0_58 = arith.constant 0 : index
    %c0_59 = arith.constant 0 : index
    %66 = vector.load %arg13[%c1_57, %c0_58, %c0_59] : memref<12x8x128xbf16, #tpu.memory_space<vmem>>, vector<1x8x128xbf16>
    %67 = vector.shape_cast %66 : vector<1x8x128xbf16> to vector<8x128xbf16>
    %68 = vector.shape_cast %65 : vector<8x128xbf16> to vector<1x8x128xbf16>
    tpu.vector_store %arg13[%c1_57, %c0_58, %c0_59], %68 {strides = array<i32>} : memref<12x8x128xbf16, #tpu.memory_space<vmem>>, vector<1x8x128xbf16>,
    %69 = vector.extract_strided_slice %41 {offsets = [4, 0, 0], sizes = [1, 8, 128], strides = [1, 1, 1]} : vector<24x8x128xf32> to vector<1x8x128xf32>
    %70 = vector.shape_cast %69 : vector<1x8x128xf32> to vector<8x128xf32>
    %71 = vector.extract_strided_slice %41 {offsets = [5, 0, 0], sizes = [1, 8, 128], strides = [1, 1, 1]} : vector<24x8x128xf32> to vector<1x8x128xf32>
    %72 = vector.shape_cast %71 : vector<1x8x128xf32> to vector<8x128xf32>
    %73 = arith.maximumf %70, %72 : vector<8x128xf32>
    %74 = vector.broadcast %42 : vector<1x128xf32> to vector<8x128xf32>
    %75 = arith.addf %73, %74 : vector<8x128xf32>
    %cst_60 = arith.constant 0.000000e+00 : f32
    %76 = vector.broadcast %cst_60 : f32 to vector<8x128xf32>
    %77 = arith.maximumf %75, %76 : vector<8x128xf32>
    %78 = arith.truncf %77 : vector<8x128xf32> to vector<8x128xbf16>
    %c2_61 = arith.constant 2 : index
    %c0_62 = arith.constant 0 : index
    %c0_63 = arith.constant 0 : index
    %79 = vector.load %arg13[%c2_61, %c0_62, %c0_63] : memref<12x8x128xbf16, #tpu.memory_space<vmem>>, vector<1x8x128xbf16>
    %80 = vector.shape_cast %79 : vector<1x8x128xbf16> to vector<8x128xbf16>
    %81 = vector.shape_cast %78 : vector<8x128xbf16> to vector<1x8x128xbf16>
    tpu.vector_store %arg13[%c2_61, %c0_62, %c0_63], %81 {strides = array<i32>} : memref<12x8x128xbf16, #tpu.memory_space<vmem>>, vector<1x8x128xbf16>,
    %82 = vector.extract_strided_slice %41 {offsets = [6, 0, 0], sizes = [1, 8, 128], strides = [1, 1, 1]} : vector<24x8x128xf32> to vector<1x8x128xf32>
    %83 = vector.shape_cast %82 : vector<1x8x128xf32> to vector<8x128xf32>
    %84 = vector.extract_strided_slice %41 {offsets = [7, 0, 0], sizes = [1, 8, 128], strides = [1, 1, 1]} : vector<24x8x128xf32> to vector<1x8x128xf32>
    %85 = vector.shape_cast %84 : vector<1x8x128xf32> to vector<8x128xf32>
    %86 = arith.maximumf %83, %85 : vector<8x128xf32>
    %87 = vector.broadcast %42 : vector<1x128xf32> to vector<8x128xf32>
    %88 = arith.addf %86, %87 : vector<8x128xf32>
    %cst_64 = arith.constant 0.000000e+00 : f32
    %89 = vector.broadcast %cst_64 : f32 to vector<8x128xf32>
    %90 = arith.maximumf %88, %89 : vector<8x128xf32>
    %91 = arith.truncf %90 : vector<8x128xf32> to vector<8x128xbf16>
    %c3_65 = arith.constant 3 : index
    %c0_66 = arith.constant 0 : index
    %c0_67 = arith.constant 0 : index
    %92 = vector.load %arg13[%c3_65, %c0_66, %c0_67] : memref<12x8x128xbf16, #tpu.memory_space<vmem>>, vector<1x8x128xbf16>
    %93 = vector.shape_cast %92 : vector<1x8x128xbf16> to vector<8x128xbf16>
    %94 = vector.shape_cast %91 : vector<8x128xbf16> to vector<1x8x128xbf16>
    tpu.vector_store %arg13[%c3_65, %c0_66, %c0_67], %94 {strides = array<i32>} : memref<12x8x128xbf16, #tpu.memory_space<vmem>>, vector<1x8x128xbf16>,
    %95 = vector.extract_strided_slice %41 {offsets = [8, 0, 0], sizes = [1, 8, 128], strides = [1, 1, 1]} : vector<24x8x128xf32> to vector<1x8x128xf32>
    %96 = vector.shape_cast %95 : vector<1x8x128xf32> to vector<8x128xf32>
    %97 = vector.extract_strided_slice %41 {offsets = [9, 0, 0], sizes = [1, 8, 128], strides = [1, 1, 1]} : vector<24x8x128xf32> to vector<1x8x128xf32>
    %98 = vector.shape_cast %97 : vector<1x8x128xf32> to vector<8x128xf32>
    %99 = arith.maximumf %96, %98 : vector<8x128xf32>
    %100 = vector.broadcast %42 : vector<1x128xf32> to vector<8x128xf32>
    %101 = arith.addf %99, %100 : vector<8x128xf32>
    %cst_68 = arith.constant 0.000000e+00 : f32
    %102 = vector.broadcast %cst_68 : f32 to vector<8x128xf32>
    %103 = arith.maximumf %101, %102 : vector<8x128xf32>
    %104 = arith.truncf %103 : vector<8x128xf32> to vector<8x128xbf16>
    %c4_69 = arith.constant 4 : index
    %c0_70 = arith.constant 0 : index
    %c0_71 = arith.constant 0 : index
    %105 = vector.load %arg13[%c4_69, %c0_70, %c0_71] : memref<12x8x128xbf16, #tpu.memory_space<vmem>>, vector<1x8x128xbf16>
    %106 = vector.shape_cast %105 : vector<1x8x128xbf16> to vector<8x128xbf16>
    %107 = vector.shape_cast %104 : vector<8x128xbf16> to vector<1x8x128xbf16>
    tpu.vector_store %arg13[%c4_69, %c0_70, %c0_71], %107 {strides = array<i32>} : memref<12x8x128xbf16, #tpu.memory_space<vmem>>, vector<1x8x128xbf16>,
    %108 = vector.extract_strided_slice %41 {offsets = [10, 0, 0], sizes = [1, 8, 128], strides = [1, 1, 1]} : vector<24x8x128xf32> to vector<1x8x128xf32>
    %109 = vector.shape_cast %108 : vector<1x8x128xf32> to vector<8x128xf32>
    %110 = vector.extract_strided_slice %41 {offsets = [11, 0, 0], sizes = [1, 8, 128], strides = [1, 1, 1]} : vector<24x8x128xf32> to vector<1x8x128xf32>
    %111 = vector.shape_cast %110 : vector<1x8x128xf32> to vector<8x128xf32>
    %112 = arith.maximumf %109, %111 : vector<8x128xf32>
    %113 = vector.broadcast %42 : vector<1x128xf32> to vector<8x128xf32>
    %114 = arith.addf %112, %113 : vector<8x128xf32>
    %cst_72 = arith.constant 0.000000e+00 : f32
    %115 = vector.broadcast %cst_72 : f32 to vector<8x128xf32>
    %116 = arith.maximumf %114, %115 : vector<8x128xf32>
    %117 = arith.truncf %116 : vector<8x128xf32> to vector<8x128xbf16>
    %c5 = arith.constant 5 : index
    %c0_73 = arith.constant 0 : index
    %c0_74 = arith.constant 0 : index
    %118 = vector.load %arg13[%c5, %c0_73, %c0_74] : memref<12x8x128xbf16, #tpu.memory_space<vmem>>, vector<1x8x128xbf16>
    %119 = vector.shape_cast %118 : vector<1x8x128xbf16> to vector<8x128xbf16>
    %120 = vector.shape_cast %117 : vector<8x128xbf16> to vector<1x8x128xbf16>
    tpu.vector_store %arg13[%c5, %c0_73, %c0_74], %120 {strides = array<i32>} : memref<12x8x128xbf16, #tpu.memory_space<vmem>>, vector<1x8x128xbf16>,
    %121 = vector.extract_strided_slice %41 {offsets = [12, 0, 0], sizes = [1, 8, 128], strides = [1, 1, 1]} : vector<24x8x128xf32> to vector<1x8x128xf32>
    %122 = vector.shape_cast %121 : vector<1x8x128xf32> to vector<8x128xf32>
    %123 = vector.extract_strided_slice %41 {offsets = [13, 0, 0], sizes = [1, 8, 128], strides = [1, 1, 1]} : vector<24x8x128xf32> to vector<1x8x128xf32>
    %124 = vector.shape_cast %123 : vector<1x8x128xf32> to vector<8x128xf32>
    %125 = arith.maximumf %122, %124 : vector<8x128xf32>
    %126 = vector.broadcast %42 : vector<1x128xf32> to vector<8x128xf32>
    %127 = arith.addf %125, %126 : vector<8x128xf32>
    %cst_75 = arith.constant 0.000000e+00 : f32
    %128 = vector.broadcast %cst_75 : f32 to vector<8x128xf32>
    %129 = arith.maximumf %127, %128 : vector<8x128xf32>
    %130 = arith.truncf %129 : vector<8x128xf32> to vector<8x128xbf16>
    %c6 = arith.constant 6 : index
    %c0_76 = arith.constant 0 : index
    %c0_77 = arith.constant 0 : index
    %131 = vector.load %arg13[%c6, %c0_76, %c0_77] : memref<12x8x128xbf16, #tpu.memory_space<vmem>>, vector<1x8x128xbf16>
    %132 = vector.shape_cast %131 : vector<1x8x128xbf16> to vector<8x128xbf16>
    %133 = vector.shape_cast %130 : vector<8x128xbf16> to vector<1x8x128xbf16>
    tpu.vector_store %arg13[%c6, %c0_76, %c0_77], %133 {strides = array<i32>} : memref<12x8x128xbf16, #tpu.memory_space<vmem>>, vector<1x8x128xbf16>,
    %134 = vector.extract_strided_slice %41 {offsets = [14, 0, 0], sizes = [1, 8, 128], strides = [1, 1, 1]} : vector<24x8x128xf32> to vector<1x8x128xf32>
    %135 = vector.shape_cast %134 : vector<1x8x128xf32> to vector<8x128xf32>
    %136 = vector.extract_strided_slice %41 {offsets = [15, 0, 0], sizes = [1, 8, 128], strides = [1, 1, 1]} : vector<24x8x128xf32> to vector<1x8x128xf32>
    %137 = vector.shape_cast %136 : vector<1x8x128xf32> to vector<8x128xf32>
    %138 = arith.maximumf %135, %137 : vector<8x128xf32>
    %139 = vector.broadcast %42 : vector<1x128xf32> to vector<8x128xf32>
    %140 = arith.addf %138, %139 : vector<8x128xf32>
    %cst_78 = arith.constant 0.000000e+00 : f32
    %141 = vector.broadcast %cst_78 : f32 to vector<8x128xf32>
    %142 = arith.maximumf %140, %141 : vector<8x128xf32>
    %143 = arith.truncf %142 : vector<8x128xf32> to vector<8x128xbf16>
    %c7 = arith.constant 7 : index
    %c0_79 = arith.constant 0 : index
    %c0_80 = arith.constant 0 : index
    %144 = vector.load %arg13[%c7, %c0_79, %c0_80] : memref<12x8x128xbf16, #tpu.memory_space<vmem>>, vector<1x8x128xbf16>
    %145 = vector.shape_cast %144 : vector<1x8x128xbf16> to vector<8x128xbf16>
    %146 = vector.shape_cast %143 : vector<8x128xbf16> to vector<1x8x128xbf16>
    tpu.vector_store %arg13[%c7, %c0_79, %c0_80], %146 {strides = array<i32>} : memref<12x8x128xbf16, #tpu.memory_space<vmem>>, vector<1x8x128xbf16>,
    %147 = vector.extract_strided_slice %41 {offsets = [16, 0, 0], sizes = [1, 8, 128], strides = [1, 1, 1]} : vector<24x8x128xf32> to vector<1x8x128xf32>
    %148 = vector.shape_cast %147 : vector<1x8x128xf32> to vector<8x128xf32>
    %149 = vector.extract_strided_slice %41 {offsets = [17, 0, 0], sizes = [1, 8, 128], strides = [1, 1, 1]} : vector<24x8x128xf32> to vector<1x8x128xf32>
    %150 = vector.shape_cast %149 : vector<1x8x128xf32> to vector<8x128xf32>
    %151 = arith.maximumf %148, %150 : vector<8x128xf32>
    %152 = vector.broadcast %42 : vector<1x128xf32> to vector<8x128xf32>
    %153 = arith.addf %151, %152 : vector<8x128xf32>
    %cst_81 = arith.constant 0.000000e+00 : f32
    %154 = vector.broadcast %cst_81 : f32 to vector<8x128xf32>
    %155 = arith.maximumf %153, %154 : vector<8x128xf32>
    %156 = arith.truncf %155 : vector<8x128xf32> to vector<8x128xbf16>
    %c8 = arith.constant 8 : index
    %c0_82 = arith.constant 0 : index
    %c0_83 = arith.constant 0 : index
    %157 = vector.load %arg13[%c8, %c0_82, %c0_83] : memref<12x8x128xbf16, #tpu.memory_space<vmem>>, vector<1x8x128xbf16>
    %158 = vector.shape_cast %157 : vector<1x8x128xbf16> to vector<8x128xbf16>
    %159 = vector.shape_cast %156 : vector<8x128xbf16> to vector<1x8x128xbf16>
    tpu.vector_store %arg13[%c8, %c0_82, %c0_83], %159 {strides = array<i32>} : memref<12x8x128xbf16, #tpu.memory_space<vmem>>, vector<1x8x128xbf16>,
    %160 = vector.extract_strided_slice %41 {offsets = [18, 0, 0], sizes = [1, 8, 128], strides = [1, 1, 1]} : vector<24x8x128xf32> to vector<1x8x128xf32>
    %161 = vector.shape_cast %160 : vector<1x8x128xf32> to vector<8x128xf32>
    %162 = vector.extract_strided_slice %41 {offsets = [19, 0, 0], sizes = [1, 8, 128], strides = [1, 1, 1]} : vector<24x8x128xf32> to vector<1x8x128xf32>
    %163 = vector.shape_cast %162 : vector<1x8x128xf32> to vector<8x128xf32>
    %164 = arith.maximumf %161, %163 : vector<8x128xf32>
    %165 = vector.broadcast %42 : vector<1x128xf32> to vector<8x128xf32>
    %166 = arith.addf %164, %165 : vector<8x128xf32>
    %cst_84 = arith.constant 0.000000e+00 : f32
    %167 = vector.broadcast %cst_84 : f32 to vector<8x128xf32>
    %168 = arith.maximumf %166, %167 : vector<8x128xf32>
    %169 = arith.truncf %168 : vector<8x128xf32> to vector<8x128xbf16>
    %c9 = arith.constant 9 : index
    %c0_85 = arith.constant 0 : index
    %c0_86 = arith.constant 0 : index
    %170 = vector.load %arg13[%c9, %c0_85, %c0_86] : memref<12x8x128xbf16, #tpu.memory_space<vmem>>, vector<1x8x128xbf16>
    %171 = vector.shape_cast %170 : vector<1x8x128xbf16> to vector<8x128xbf16>
    %172 = vector.shape_cast %169 : vector<8x128xbf16> to vector<1x8x128xbf16>
    tpu.vector_store %arg13[%c9, %c0_85, %c0_86], %172 {strides = array<i32>} : memref<12x8x128xbf16, #tpu.memory_space<vmem>>, vector<1x8x128xbf16>,
    %173 = vector.extract_strided_slice %41 {offsets = [20, 0, 0], sizes = [1, 8, 128], strides = [1, 1, 1]} : vector<24x8x128xf32> to vector<1x8x128xf32>
    %174 = vector.shape_cast %173 : vector<1x8x128xf32> to vector<8x128xf32>
    %175 = vector.extract_strided_slice %41 {offsets = [21, 0, 0], sizes = [1, 8, 128], strides = [1, 1, 1]} : vector<24x8x128xf32> to vector<1x8x128xf32>
    %176 = vector.shape_cast %175 : vector<1x8x128xf32> to vector<8x128xf32>
    %177 = arith.maximumf %174, %176 : vector<8x128xf32>
    %178 = vector.broadcast %42 : vector<1x128xf32> to vector<8x128xf32>
    %179 = arith.addf %177, %178 : vector<8x128xf32>
    %cst_87 = arith.constant 0.000000e+00 : f32
    %180 = vector.broadcast %cst_87 : f32 to vector<8x128xf32>
    %181 = arith.maximumf %179, %180 : vector<8x128xf32>
    %182 = arith.truncf %181 : vector<8x128xf32> to vector<8x128xbf16>
    %c10 = arith.constant 10 : index
    %c0_88 = arith.constant 0 : index
    %c0_89 = arith.constant 0 : index
    %183 = vector.load %arg13[%c10, %c0_88, %c0_89] : memref<12x8x128xbf16, #tpu.memory_space<vmem>>, vector<1x8x128xbf16>
    %184 = vector.shape_cast %183 : vector<1x8x128xbf16> to vector<8x128xbf16>
    %185 = vector.shape_cast %182 : vector<8x128xbf16> to vector<1x8x128xbf16>
    tpu.vector_store %arg13[%c10, %c0_88, %c0_89], %185 {strides = array<i32>} : memref<12x8x128xbf16, #tpu.memory_space<vmem>>, vector<1x8x128xbf16>,
    %186 = vector.extract_strided_slice %41 {offsets = [22, 0, 0], sizes = [1, 8, 128], strides = [1, 1, 1]} : vector<24x8x128xf32> to vector<1x8x128xf32>
    %187 = vector.shape_cast %186 : vector<1x8x128xf32> to vector<8x128xf32>
    %188 = vector.extract_strided_slice %41 {offsets = [23, 0, 0], sizes = [1, 8, 128], strides = [1, 1, 1]} : vector<24x8x128xf32> to vector<1x8x128xf32>
    %189 = vector.shape_cast %188 : vector<1x8x128xf32> to vector<8x128xf32>
    %190 = arith.maximumf %187, %189 : vector<8x128xf32>
    %191 = vector.broadcast %42 : vector<1x128xf32> to vector<8x128xf32>
    %192 = arith.addf %190, %191 : vector<8x128xf32>
    %cst_90 = arith.constant 0.000000e+00 : f32
    %193 = vector.broadcast %cst_90 : f32 to vector<8x128xf32>
    %194 = arith.maximumf %192, %193 : vector<8x128xf32>
    %195 = arith.truncf %194 : vector<8x128xf32> to vector<8x128xbf16>
    %c11 = arith.constant 11 : index
    %c0_91 = arith.constant 0 : index
    %c0_92 = arith.constant 0 : index
    %196 = vector.load %arg13[%c11, %c0_91, %c0_92] : memref<12x8x128xbf16, #tpu.memory_space<vmem>>, vector<1x8x128xbf16>
    %197 = vector.shape_cast %196 : vector<1x8x128xbf16> to vector<8x128xbf16>
    %198 = vector.shape_cast %195 : vector<8x128xbf16> to vector<1x8x128xbf16>
    tpu.vector_store %arg13[%c11, %c0_91, %c0_92], %198 {strides = array<i32>} : memref<12x8x128xbf16, #tpu.memory_space<vmem>>, vector<1x8x128xbf16>,
    %c0_93 = arith.constant 0 : index
    %c0_94 = arith.constant 0 : index
    %c0_95 = arith.constant 0 : index
    %199 = vector.load %arg13[%c0_93, %c0_94, %c0_95] : memref<12x8x128xbf16, #tpu.memory_space<vmem>>, vector<8x8x128xbf16>
    %200 = vector.shape_cast %199 : vector<8x8x128xbf16> to vector<64x128xbf16>
    %c0_96 = arith.constant 0 : index
    %c0_97 = arith.constant 0 : index
    %c0_98 = arith.constant 0 : index
    %201 = vector.load %arg4[%c0_96, %c0_97, %c0_98] : memref<5x128x256xbf16, #tpu.memory_space<vmem>>, vector<1x128x256xbf16>
    %202 = vector.shape_cast %201 : vector<1x128x256xbf16> to vector<128x256xbf16>
    %cst_99 = arith.constant dense<0.000000e+00> : vector<64x256xf32>
    %203 = tpu.matmul %200, %202, %cst_99 {dimension_numbers = #tpu.dot_dimension_numbers<[1], [0], [0], [1], [0, 0, 1, 1], [], []>} : vector<64x128xbf16>, vector<128x256xbf16>, vector<64x256xf32> -> vector<64x256xf32>
    %c0_100 = arith.constant 0 : index
    %c0_101 = arith.constant 0 : index
    %204 = vector.load %arg12[%c0_100, %c0_101] : memref<64x256xf32, #tpu.memory_space<vmem>>, vector<64x256xf32>
    tpu.vector_store %arg12[%c0_100, %c0_101], %203 {strides = array<i32>} : memref<64x256xf32, #tpu.memory_space<vmem>>, vector<64x256xf32>,
    %c1_102 = arith.constant 1 : index
    %c0_103 = arith.constant 0 : index
    %c0_104 = arith.constant 0 : index
    %205 = vector.load %arg13[%c1_102, %c0_103, %c0_104] : memref<12x8x128xbf16, #tpu.memory_space<vmem>>, vector<8x8x128xbf16>
    %206 = vector.shape_cast %205 : vector<8x8x128xbf16> to vector<64x128xbf16>
    %c1_105 = arith.constant 1 : index
    %c0_106 = arith.constant 0 : index
    %c0_107 = arith.constant 0 : index
    %207 = vector.load %arg4[%c1_105, %c0_106, %c0_107] : memref<5x128x256xbf16, #tpu.memory_space<vmem>>, vector<1x128x256xbf16>
    %208 = vector.shape_cast %207 : vector<1x128x256xbf16> to vector<128x256xbf16>
    %cst_108 = arith.constant dense<0.000000e+00> : vector<64x256xf32>
    %209 = tpu.matmul %206, %208, %cst_108 {dimension_numbers = #tpu.dot_dimension_numbers<[1], [0], [0], [1], [0, 0, 1, 1], [], []>} : vector<64x128xbf16>, vector<128x256xbf16>, vector<64x256xf32> -> vector<64x256xf32>
    %c0_109 = arith.constant 0 : index
    %c0_110 = arith.constant 0 : index
    %210 = vector.load %arg12[%c0_109, %c0_110] : memref<64x256xf32, #tpu.memory_space<vmem>>, vector<64x256xf32>
    %211 = arith.addf %210, %209 : vector<64x256xf32>
    %c0_111 = arith.constant 0 : index
    %c0_112 = arith.constant 0 : index
    %212 = vector.load %arg12[%c0_111, %c0_112] : memref<64x256xf32, #tpu.memory_space<vmem>>, vector<64x256xf32>
    tpu.vector_store %arg12[%c0_111, %c0_112], %211 {strides = array<i32>} : memref<64x256xf32, #tpu.memory_space<vmem>>, vector<64x256xf32>,
    %c2_113 = arith.constant 2 : index
    %c0_114 = arith.constant 0 : index
    %c0_115 = arith.constant 0 : index
    %213 = vector.load %arg13[%c2_113, %c0_114, %c0_115] : memref<12x8x128xbf16, #tpu.memory_space<vmem>>, vector<8x8x128xbf16>
    %214 = vector.shape_cast %213 : vector<8x8x128xbf16> to vector<64x128xbf16>
    %c2_116 = arith.constant 2 : index
    %c0_117 = arith.constant 0 : index
    %c0_118 = arith.constant 0 : index
    %215 = vector.load %arg4[%c2_116, %c0_117, %c0_118] : memref<5x128x256xbf16, #tpu.memory_space<vmem>>, vector<1x128x256xbf16>
    %216 = vector.shape_cast %215 : vector<1x128x256xbf16> to vector<128x256xbf16>
    %cst_119 = arith.constant dense<0.000000e+00> : vector<64x256xf32>
    %217 = tpu.matmul %214, %216, %cst_119 {dimension_numbers = #tpu.dot_dimension_numbers<[1], [0], [0], [1], [0, 0, 1, 1], [], []>} : vector<64x128xbf16>, vector<128x256xbf16>, vector<64x256xf32> -> vector<64x256xf32>
    %c0_120 = arith.constant 0 : index
    %c0_121 = arith.constant 0 : index
    %218 = vector.load %arg12[%c0_120, %c0_121] : memref<64x256xf32, #tpu.memory_space<vmem>>, vector<64x256xf32>
    %219 = arith.addf %218, %217 : vector<64x256xf32>
    %c0_122 = arith.constant 0 : index
    %c0_123 = arith.constant 0 : index
    %220 = vector.load %arg12[%c0_122, %c0_123] : memref<64x256xf32, #tpu.memory_space<vmem>>, vector<64x256xf32>
    tpu.vector_store %arg12[%c0_122, %c0_123], %219 {strides = array<i32>} : memref<64x256xf32, #tpu.memory_space<vmem>>, vector<64x256xf32>,
    %c3_124 = arith.constant 3 : index
    %c0_125 = arith.constant 0 : index
    %c0_126 = arith.constant 0 : index
    %221 = vector.load %arg13[%c3_124, %c0_125, %c0_126] : memref<12x8x128xbf16, #tpu.memory_space<vmem>>, vector<8x8x128xbf16>
    %222 = vector.shape_cast %221 : vector<8x8x128xbf16> to vector<64x128xbf16>
    %c3_127 = arith.constant 3 : index
    %c0_128 = arith.constant 0 : index
    %c0_129 = arith.constant 0 : index
    %223 = vector.load %arg4[%c3_127, %c0_128, %c0_129] : memref<5x128x256xbf16, #tpu.memory_space<vmem>>, vector<1x128x256xbf16>
    %224 = vector.shape_cast %223 : vector<1x128x256xbf16> to vector<128x256xbf16>
    %cst_130 = arith.constant dense<0.000000e+00> : vector<64x256xf32>
    %225 = tpu.matmul %222, %224, %cst_130 {dimension_numbers = #tpu.dot_dimension_numbers<[1], [0], [0], [1], [0, 0, 1, 1], [], []>} : vector<64x128xbf16>, vector<128x256xbf16>, vector<64x256xf32> -> vector<64x256xf32>
    %c0_131 = arith.constant 0 : index
    %c0_132 = arith.constant 0 : index
    %226 = vector.load %arg12[%c0_131, %c0_132] : memref<64x256xf32, #tpu.memory_space<vmem>>, vector<64x256xf32>
    %227 = arith.addf %226, %225 : vector<64x256xf32>
    %c0_133 = arith.constant 0 : index
    %c0_134 = arith.constant 0 : index
    %228 = vector.load %arg12[%c0_133, %c0_134] : memref<64x256xf32, #tpu.memory_space<vmem>>, vector<64x256xf32>
    tpu.vector_store %arg12[%c0_133, %c0_134], %227 {strides = array<i32>} : memref<64x256xf32, #tpu.memory_space<vmem>>, vector<64x256xf32>,
    %c4_135 = arith.constant 4 : index
    %c0_136 = arith.constant 0 : index
    %c0_137 = arith.constant 0 : index
    %229 = vector.load %arg13[%c4_135, %c0_136, %c0_137] : memref<12x8x128xbf16, #tpu.memory_space<vmem>>, vector<8x8x128xbf16>
    %230 = vector.shape_cast %229 : vector<8x8x128xbf16> to vector<64x128xbf16>
    %c4_138 = arith.constant 4 : index
    %c0_139 = arith.constant 0 : index
    %c0_140 = arith.constant 0 : index
    %231 = vector.load %arg4[%c4_138, %c0_139, %c0_140] : memref<5x128x256xbf16, #tpu.memory_space<vmem>>, vector<1x128x256xbf16>
    %232 = vector.shape_cast %231 : vector<1x128x256xbf16> to vector<128x256xbf16>
    %cst_141 = arith.constant dense<0.000000e+00> : vector<64x256xf32>
    %233 = tpu.matmul %230, %232, %cst_141 {dimension_numbers = #tpu.dot_dimension_numbers<[1], [0], [0], [1], [0, 0, 1, 1], [], []>} : vector<64x128xbf16>, vector<128x256xbf16>, vector<64x256xf32> -> vector<64x256xf32>
    %c0_142 = arith.constant 0 : index
    %c0_143 = arith.constant 0 : index
    %234 = vector.load %arg12[%c0_142, %c0_143] : memref<64x256xf32, #tpu.memory_space<vmem>>, vector<64x256xf32>
    %235 = arith.addf %234, %233 : vector<64x256xf32>
    %c0_144 = arith.constant 0 : index
    %c0_145 = arith.constant 0 : index
    %236 = vector.load %arg12[%c0_144, %c0_145] : memref<64x256xf32, #tpu.memory_space<vmem>>, vector<64x256xf32>
    tpu.vector_store %arg12[%c0_144, %c0_145], %235 {strides = array<i32>} : memref<64x256xf32, #tpu.memory_space<vmem>>, vector<64x256xf32>,
    %c0_146 = arith.constant 0 : index
    %c0_147 = arith.constant 0 : index
    %237 = vector.load %arg12[%c0_146, %c0_147] : memref<64x256xf32, #tpu.memory_space<vmem>>, vector<64x128xf32>
    %c0_148 = arith.constant 0 : index
    %c128_149 = arith.constant 128 : index
    %238 = vector.load %arg12[%c0_148, %c128_149] : memref<64x256xf32, #tpu.memory_space<vmem>>, vector<64x128xf32>
    %239 = arith.maximumf %237, %238 : vector<64x128xf32>
    %240 = vector.shape_cast %239 : vector<64x128xf32> to vector<8x8x128xf32>
    %c0_150 = arith.constant 0 : index
    %c0_151 = arith.constant 0 : index
    %241 = vector.load %arg5[%c0_150, %c0_151] : memref<1x128xf32, #tpu.memory_space<vmem>>, vector<1x128xf32>
    %242 = vector.extract_strided_slice %240 {offsets = [0, 0, 0], sizes = [1, 8, 128], strides = [1, 1, 1]} : vector<8x8x128xf32> to vector<1x8x128xf32>
    %243 = vector.shape_cast %242 : vector<1x8x128xf32> to vector<8x128xf32>
    %244 = vector.extract_strided_slice %240 {offsets = [1, 0, 0], sizes = [1, 8, 128], strides = [1, 1, 1]} : vector<8x8x128xf32> to vector<1x8x128xf32>
    %245 = vector.shape_cast %244 : vector<1x8x128xf32> to vector<8x128xf32>
    %246 = arith.maximumf %243, %245 : vector<8x128xf32>
    %247 = vector.broadcast %241 : vector<1x128xf32> to vector<8x128xf32>
    %248 = arith.addf %246, %247 : vector<8x128xf32>
    %cst_152 = arith.constant 0.000000e+00 : f32
    %249 = vector.broadcast %cst_152 : f32 to vector<8x128xf32>
    %250 = arith.maximumf %248, %249 : vector<8x128xf32>
    %251 = arith.truncf %250 : vector<8x128xf32> to vector<8x128xbf16>
    %252 = vector.extract_strided_slice %240 {offsets = [2, 0, 0], sizes = [1, 8, 128], strides = [1, 1, 1]} : vector<8x8x128xf32> to vector<1x8x128xf32>
    %253 = vector.shape_cast %252 : vector<1x8x128xf32> to vector<8x128xf32>
    %254 = vector.extract_strided_slice %240 {offsets = [3, 0, 0], sizes = [1, 8, 128], strides = [1, 1, 1]} : vector<8x8x128xf32> to vector<1x8x128xf32>
    %255 = vector.shape_cast %254 : vector<1x8x128xf32> to vector<8x128xf32>
    %256 = arith.maximumf %253, %255 : vector<8x128xf32>
    %257 = vector.broadcast %241 : vector<1x128xf32> to vector<8x128xf32>
    %258 = arith.addf %256, %257 : vector<8x128xf32>
    %cst_153 = arith.constant 0.000000e+00 : f32
    %259 = vector.broadcast %cst_153 : f32 to vector<8x128xf32>
    %260 = arith.maximumf %258, %259 : vector<8x128xf32>
    %261 = arith.truncf %260 : vector<8x128xf32> to vector<8x128xbf16>
    %262 = vector.extract_strided_slice %240 {offsets = [4, 0, 0], sizes = [1, 8, 128], strides = [1, 1, 1]} : vector<8x8x128xf32> to vector<1x8x128xf32>
    %263 = vector.shape_cast %262 : vector<1x8x128xf32> to vector<8x128xf32>
    %264 = vector.extract_strided_slice %240 {offsets = [5, 0, 0], sizes = [1, 8, 128], strides = [1, 1, 1]} : vector<8x8x128xf32> to vector<1x8x128xf32>
    %265 = vector.shape_cast %264 : vector<1x8x128xf32> to vector<8x128xf32>
    %266 = arith.maximumf %263, %265 : vector<8x128xf32>
    %267 = vector.broadcast %241 : vector<1x128xf32> to vector<8x128xf32>
    %268 = arith.addf %266, %267 : vector<8x128xf32>
    %cst_154 = arith.constant 0.000000e+00 : f32
    %269 = vector.broadcast %cst_154 : f32 to vector<8x128xf32>
    %270 = arith.maximumf %268, %269 : vector<8x128xf32>
    %271 = arith.truncf %270 : vector<8x128xf32> to vector<8x128xbf16>
    %272 = vector.extract_strided_slice %240 {offsets = [6, 0, 0], sizes = [1, 8, 128], strides = [1, 1, 1]} : vector<8x8x128xf32> to vector<1x8x128xf32>
    %273 = vector.shape_cast %272 : vector<1x8x128xf32> to vector<8x128xf32>
    %274 = vector.extract_strided_slice %240 {offsets = [7, 0, 0], sizes = [1, 8, 128], strides = [1, 1, 1]} : vector<8x8x128xf32> to vector<1x8x128xf32>
    %275 = vector.shape_cast %274 : vector<1x8x128xf32> to vector<8x128xf32>
    %276 = arith.maximumf %273, %275 : vector<8x128xf32>
    %277 = vector.broadcast %241 : vector<1x128xf32> to vector<8x128xf32>
    %278 = arith.addf %276, %277 : vector<8x128xf32>
    %cst_155 = arith.constant 0.000000e+00 : f32
    %279 = vector.broadcast %cst_155 : f32 to vector<8x128xf32>
    %280 = arith.maximumf %278, %279 : vector<8x128xf32>
    %281 = arith.truncf %280 : vector<8x128xf32> to vector<8x128xbf16>
    %282 = tpu.concatenate %251, %261, %271, %281 in 1 : vector<8x128xbf16>, vector<8x128xbf16>, vector<8x128xbf16>, vector<8x128xbf16> -> vector<8x512xbf16>
    %c0_156 = arith.constant 0 : index
    %c0_157 = arith.constant 0 : index
    %283 = vector.load %arg6[%c0_156, %c0_157] : memref<512x50xbf16, #tpu.memory_space<vmem>>, vector<512x50xbf16>
    %cst_158 = arith.constant dense<0.000000e+00> : vector<8x50xf32>
    %284 = tpu.matmul %282, %283, %cst_158 {dimension_numbers = #tpu.dot_dimension_numbers<[1], [0], [0], [1], [0, 0, 1, 1], [], []>} : vector<8x512xbf16>, vector<512x50xbf16>, vector<8x50xf32> -> vector<8x50xf32>
    %c0_159 = arith.constant 0 : index
    %c0_160 = arith.constant 0 : index
    %285 = vector.load %arg7[%c0_159, %c0_160] : memref<1x50xf32, #tpu.memory_space<vmem>>, vector<1x50xf32>
    %286 = vector.broadcast %285 : vector<1x50xf32> to vector<8x50xf32>
    %287 = arith.addf %284, %286 : vector<8x50xf32>
    %cst_161 = arith.constant 0.000000e+00 : f32
    %288 = vector.broadcast %cst_161 : f32 to vector<8x50xf32>
    %289 = arith.maximumf %287, %288 : vector<8x50xf32>
    %290 = arith.truncf %289 : vector<8x50xf32> to vector<8x50xbf16>
    %c0_162 = arith.constant 0 : index
    %c0_163 = arith.constant 0 : index
    %291 = vector.load %arg8[%c0_162, %c0_163] : memref<50x128xbf16, #tpu.memory_space<vmem>>, vector<50x128xbf16>
    %cst_164 = arith.constant dense<0.000000e+00> : vector<8x128xf32>
    %292 = tpu.matmul %290, %291, %cst_164 {dimension_numbers = #tpu.dot_dimension_numbers<[1], [0], [0], [1], [0, 0, 1, 1], [], []>} : vector<8x50xbf16>, vector<50x128xbf16>, vector<8x128xf32> -> vector<8x128xf32>
    %c0_165 = arith.constant 0 : index
    %c0_166 = arith.constant 0 : index
    %293 = vector.load %arg9[%c0_165, %c0_166] : memref<1x128xf32, #tpu.memory_space<vmem>>, vector<1x128xf32>
    %294 = vector.broadcast %293 : vector<1x128xf32> to vector<8x128xf32>
    %295 = arith.addf %292, %294 : vector<8x128xf32>
    %c0_167 = arith.constant 0 : index
    %c0_168 = arith.constant 0 : index
    %296 = vector.load %arg10[%c0_167, %c0_168] : memref<8x128xf32, #tpu.memory_space<vmem>>, vector<8x128xf32>
    tpu.vector_store %arg10[%c0_167, %c0_168], %295 {strides = array<i32>} : memref<8x128xf32, #tpu.memory_space<vmem>>, vector<8x128xf32>,
    return
  }
  func.func @transform_0(%arg0: i32) -> (i32, i32, i32) {
    %c0_i32 = arith.constant 0 : i32
    %c0_i32_0 = arith.constant 0 : i32
    %c0_i32_1 = arith.constant 0 : i32
    return %c0_i32, %arg0, %c0_i32_0 : i32, i32, i32
  }
  func.func @transform_1(%arg0: i32) -> (i32, i32, i32) {
    %c0_i32 = arith.constant 0 : i32
    %c0_i32_0 = arith.constant 0 : i32
    %c0_i32_1 = arith.constant 0 : i32
    %c0_i32_2 = arith.constant 0 : i32
    return %c0_i32, %c0_i32_0, %c0_i32_1 : i32, i32, i32
  }
  func.func @transform_2(%arg0: i32) -> (i32, i32) {
    %c0_i32 = arith.constant 0 : i32
    %c0_i32_0 = arith.constant 0 : i32
    %c0_i32_1 = arith.constant 0 : i32
    return %c0_i32, %c0_i32_0 : i32, i32
  }
  func.func @transform_3(%arg0: i32) -> (i32, i32, i32) {
    %c0_i32 = arith.constant 0 : i32
    %c0_i32_0 = arith.constant 0 : i32
    %c0_i32_1 = arith.constant 0 : i32
    %c0_i32_2 = arith.constant 0 : i32
    return %c0_i32, %c0_i32_0, %c0_i32_1 : i32, i32, i32
  }
  func.func @transform_4(%arg0: i32) -> (i32, i32) {
    %c0_i32 = arith.constant 0 : i32
    %c0_i32_0 = arith.constant 0 : i32
    %c0_i32_1 = arith.constant 0 : i32
    return %c0_i32, %c0_i32_0 : i32, i32
  }
  func.func @transform_5(%arg0: i32) -> (i32, i32) {
    %c0_i32 = arith.constant 0 : i32
    %c0_i32_0 = arith.constant 0 : i32
    %c0_i32_1 = arith.constant 0 : i32
    return %c0_i32, %c0_i32_0 : i32, i32
  }
  func.func @transform_6(%arg0: i32) -> (i32, i32) {
    %c0_i32 = arith.constant 0 : i32
    %c0_i32_0 = arith.constant 0 : i32
    %c0_i32_1 = arith.constant 0 : i32
    return %c0_i32, %c0_i32_0 : i32, i32
  }
  func.func @transform_7(%arg0: i32) -> (i32, i32) {
    %c0_i32 = arith.constant 0 : i32
    %c0_i32_0 = arith.constant 0 : i32
    %c0_i32_1 = arith.constant 0 : i32
    return %c0_i32, %c0_i32_0 : i32, i32
  }
  func.func @transform_8(%arg0: i32) -> (i32, i32) {
    %c0_i32 = arith.constant 0 : i32
    %c0_i32_0 = arith.constant 0 : i32
    %c0_i32_1 = arith.constant 0 : i32
    return %c0_i32, %c0_i32_0 : i32, i32
  }
  func.func @transform_9(%arg0: i32) -> (i32, i32) {
    %c0_i32 = arith.constant 0 : i32
    %c0_i32_0 = arith.constant 0 : i32
    return %arg0, %c0_i32 : i32, i32
  }
}

</mosaic_0001>

<llo_original>
// kernel: net_forward.1
$region0: #{net_forward.1}
  #allocation0 [shape = 'u32[]', space=smem, size = 0x4, offset = 0x4, fixed_abs, tag = 'smem constant byte address 0x4 - core index']
  #allocation1 [shape = 'u32[72,128]{1,0:T(1,128)}', space=vmem, size = 0x9000, scoped, tag = 'internal scratch']
  #allocation2 [shape = 'f32[192,256]{1,0:T(8,128)}', space=vmem, size = 0x30000, scoped, tag = 'scratch operand']
  #allocation3 [shape = 'f32[64,256]{1,0:T(8,128)}', space=vmem, size = 0x10000, scoped, tag = 'scratch operand']
  #allocation4 [shape = 'bf16[12,8,128]{2,1,0:T(8,128)(2,1)}', space=vmem, size = 0x6000, scoped, tag = 'scratch operand']
  %s0 = inlined_call_operand.vmem [shape: bf16[28,8,28], index: 0, kind: input, shape index: {}]
  %s1 = inlined_call_operand.vmem [shape: bf16[5,28,256], index: 1, kind: input, shape index: {}]
  %s2 = inlined_call_operand.vmem [shape: f32[1,128], index: 2, kind: input, shape index: {}]
  %s3 = inlined_call_operand.hbm [shape: bf16[5,128,256], index: 3, kind: input, shape index: {}]
  %s4 = inlined_call_operand.vmem [shape: f32[1,128], index: 4, kind: input, shape index: {}]
  %s5 = inlined_call_operand.vmem [shape: bf16[512,50], index: 5, kind: input, shape index: {}]
  %s6 = inlined_call_operand.vmem [shape: f32[1,50], index: 6, kind: input, shape index: {}]
  %s7 = inlined_call_operand.vmem [shape: bf16[50,128], index: 7, kind: input, shape index: {}]
  %s8 = inlined_call_operand.vmem [shape: f32[1,128], index: 8, kind: input, shape index: {}]
  %s9 = inlined_call_operand.vmem [shape: f32[8,128], index: 9, kind: output, shape index: {}]
  %s10 = sld [smem:[#allocation0]]
  $region50: #{net_forward.1} parent=0
    _
  %s12 = ssub.s32 1, %s10
  %s13 = scalar_select 0, %s12, %s10
  $region1: #{net_forward.1} parent=0
    #allocation5 [shape = 'u8[327680]{0}', space=vmem, size = 0x50000, scoped, tag = 'input window, operand 3, single buffered']
    #allocation6 [shape = 's32[1]{0}', space=sflag, size = 0x4, scoped, tag = 'scoped memory for net_forward.1']
    %14 = vsyncpa [#allocation6], 0
    // Predicated region
    $region2: #{net_forward.1} parent=1 // pred_check
      _
    $region3: #{net_forward.1} parent=1 // pred_check_branch
      %16 = sbr.rel (0) target = $region5
    $region4: #{net_forward.1} parent=1 // pred_region
      _
    $region5: #{net_forward.1} parent=1 // pred_fallthru
      _
    // Predicated region
    $region6: #{net_forward.1} parent=1 // pred_check
      _
    $region7: #{net_forward.1} parent=1 // pred_check_branch
      %18 = sbr.rel (0) target = $region9
    $region8: #{net_forward.1} parent=1 // pred_region
      _
    $region9: #{net_forward.1} parent=1 // pred_fallthru
      _
    // Predicated region
    $region10: #{net_forward.1} parent=1 // pred_check
      _
    $region11: #{net_forward.1} parent=1 // pred_check_branch
      %20 = sbr.rel (0) target = $region13
    $region12: #{net_forward.1} parent=1 // pred_region
      _
    $region13: #{net_forward.1} parent=1 // pred_fallthru
      _
    // Predicated region
    $region14: #{net_forward.1} parent=1 // pred_check
      _
    $region15: #{net_forward.1} parent=1 // pred_check_branch
      %22 = sbr.rel (0) target = $region17
    $region16: #{net_forward.1} parent=1 // pred_region
      %24 = vsyncadd [#allocation6], 0
      %s25 = sshll.u32 %s3, 4
      %s26 = int_to_ptr.hbm [resolvable:$true] %s25
      %s27 = sshll.u32 [#allocation5], 4
      %s28 = int_to_ptr.vmem [resolvable:$true] %s27
      %33 = dma.hbm_to_vmem [thread:$0]  %s26, 10240, %s28, [#allocation6], 128, 128, 8
    $region17: #{net_forward.1} parent=1 // pred_fallthru
      _
    // Predicated region
    $region18: #{net_forward.1} parent=1 // pred_check
      _
    $region19: #{net_forward.1} parent=1 // pred_check_branch
      %35 = sbr.rel (0) target = $region21
    $region20: #{net_forward.1} parent=1 // pred_region
      _
    $region21: #{net_forward.1} parent=1 // pred_fallthru
      _
    // Predicated region
    $region22: #{net_forward.1} parent=1 // pred_check
      _
    $region23: #{net_forward.1} parent=1 // pred_check_branch
      %37 = sbr.rel (0) target = $region25
    $region24: #{net_forward.1} parent=1 // pred_region
      _
    $region25: #{net_forward.1} parent=1 // pred_fallthru
      _
    // Predicated region
    $region26: #{net_forward.1} parent=1 // pred_check
      _
    $region27: #{net_forward.1} parent=1 // pred_check_branch
      %39 = sbr.rel (0) target = $region29
    $region28: #{net_forward.1} parent=1 // pred_region
      _
    $region29: #{net_forward.1} parent=1 // pred_fallthru
      _
    // Predicated region
    $region30: #{net_forward.1} parent=1 // pred_check
      _
    $region31: #{net_forward.1} parent=1 // pred_check_branch
      %41 = sbr.rel (0) target = $region33
    $region32: #{net_forward.1} parent=1 // pred_region
      _
    $region33: #{net_forward.1} parent=1 // pred_fallthru
      _
    // Predicated region
    $region34: #{net_forward.1} parent=1 // pred_check
      _
    $region35: #{net_forward.1} parent=1 // pred_check_branch
      %43 = sbr.rel (0) target = $region37
    $region36: #{net_forward.1} parent=1 // pred_region
      _
    $region37: #{net_forward.1} parent=1 // pred_fallthru
      _
    // Predicated region
    $region38: #{net_forward.1} parent=1 // pred_check
      _
    $region39: #{net_forward.1} parent=1 // pred_check_branch
      %45 = sbr.rel (0) target = $region41
    $region40: #{net_forward.1} parent=1 // pred_region
      %47 = dma.done [#allocation6], 10240
    $region41: #{net_forward.1} parent=1 // pred_fallthru
      _
    %v49 = vld [vmem:[%s0] sm:$0xf]
    %v50 = vld [vmem:[%s0 + $0x4] sm:$0xf]
    %v51 = vld [vmem:[%s0 + $0x8] sm:$0xf]
    %v52 = vld [vmem:[%s0 + $0xc] sm:$0xf]
    %v53 = vld [vmem:[%s0 + $0x10] sm:$0xf]
    %v54 = vld [vmem:[%s0 + $0x14] sm:$0xf]
    %v55 = vld [vmem:[%s0 + $0x18] sm:$0xf]
    %v56 = vld [vmem:[%s0 + $0x1c] sm:$0xf]
    %v57 = vld [vmem:[%s0 + $0x20] sm:$0xf]
    %v58 = vld [vmem:[%s0 + $0x24] sm:$0xf]
    %v59 = vld [vmem:[%s0 + $0x28] sm:$0xf]
    %v60 = vld [vmem:[%s0 + $0x2c] sm:$0xf]
    %v61 = vld [vmem:[%s0 + $0x30] sm:$0xf]
    %v62 = vld [vmem:[%s0 + $0x34] sm:$0xf]
    %v63 = vld [vmem:[%s0 + $0x38] sm:$0xf]
    %v64 = vld [vmem:[%s0 + $0x3c] sm:$0xf]
    %v65 = vld [vmem:[%s0 + $0x40] sm:$0xf]
    %v66 = vld [vmem:[%s0 + $0x44] sm:$0xf]
    %v67 = vld [vmem:[%s0 + $0x48] sm:$0xf]
    %v68 = vld [vmem:[%s0 + $0x4c] sm:$0xf]
    %v69 = vld [vmem:[%s0 + $0x50] sm:$0xf]
    %v70 = vld [vmem:[%s0 + $0x54] sm:$0xf]
    %v71 = vld [vmem:[%s0 + $0x58] sm:$0xf]
    %v72 = vld [vmem:[%s0 + $0x5c] sm:$0xf]
    %v73 = vld [vmem:[%s1] sm:$0xff]
    %v74 = vld [vmem:[%s1 + $0x8] sm:$0xff]
    %v75 = vld [vmem:[%s1 + $0x10] sm:$0xff]
    %v76 = vld [vmem:[%s1 + $0x18] sm:$0x33]
    %v101 = vunpack.c.l.b16 %v49
    %v102 = vunpack.c.l.b16 %v50
    %v103 = vunpack.c.l.b16 %v51
    %v104 = vunpack.c.l.b16 %v52
    %v105 = vunpack.c.l.b16 %v53
    %v106 = vunpack.c.l.b16 %v54
    %v107 = vunpack.c.l.b16 %v55
    %v108 = vunpack.c.l.b16 %v56
    %v109 = vunpack.c.l.b16 %v57
    %v110 = vunpack.c.l.b16 %v58
    %v111 = vunpack.c.l.b16 %v59
    %v112 = vunpack.c.l.b16 %v60
    %v113 = vunpack.c.l.b16 %v61
    %v114 = vunpack.c.l.b16 %v62
    %v115 = vunpack.c.l.b16 %v63
    %v116 = vunpack.c.l.b16 %v64
    %v117 = vunpack.c.l.b16 %v65
    %v118 = vunpack.c.l.b16 %v66
    %v119 = vunpack.c.l.b16 %v67
    %v120 = vunpack.c.l.b16 %v68
    %v121 = vunpack.c.l.b16 %v69
    %v122 = vunpack.c.l.b16 %v70
    %v123 = vunpack.c.l.b16 %v71
    %v124 = vunpack.c.l.b16 %v72
    %v125 = vpack.c.b16 %v102, %v101
    %v126 = vpack.c.b16 %v104, %v103
    %v127 = vpack.c.b16 %v106, %v105
    %v128 = vpack.c.b16 %v108, %v107
    %v129 = vpack.c.b16 %v110, %v109
    %v130 = vpack.c.b16 %v112, %v111
    %v131 = vpack.c.b16 %v114, %v113
    %v132 = vpack.c.b16 %v116, %v115
    %v133 = vpack.c.b16 %v118, %v117
    %v134 = vpack.c.b16 %v120, %v119
    %v135 = vpack.c.b16 %v122, %v121
    %v136 = vpack.c.b16 %v124, %v123
    %v141 = vunpack.c.l.b16 %v73
    %v142 = vunpack.c.h.b16 %v73
    %v143 = vunpack.c.l.b16 %v74
    %v144 = vunpack.c.h.b16 %v74
    %v145 = vunpack.c.l.b16 %v75
    %v146 = vunpack.c.h.b16 %v75
    %v147 = vunpack.c.l.b16 %v76
    %v148 = vunpack.c.h.b16 %v76
    %v149 = vpack.c.b16 %v143, %v141
    %v150 = vpack.c.b16 %v144, %v142
    %v151 = vpack.c.b16 %v147, %v145
    %v152 = vpack.c.b16 %v148, %v146
    %vm155 = vcmask 228352
    %v157 = vsel %vm155, %v125, 0
    %v160 = vsel %vm155, %v126, 0
    %v163 = vsel %vm155, %v127, 0
    %v166 = vsel %vm155, %v128, 0
    %v169 = vsel %vm155, %v129, 0
    %v172 = vsel %vm155, %v130, 0
    %v175 = vsel %vm155, %v131, 0
    %v178 = vsel %vm155, %v132, 0
    %v181 = vsel %vm155, %v133, 0
    %v184 = vsel %vm155, %v134, 0
    %v187 = vsel %vm155, %v135, 0
    %v190 = vsel %vm155, %v136, 0
    %vm192 = vcmask 1045504
    %v194 = vsel %vm192, %v151, 0
    %v197 = vsel %vm192, %v152, 0
    %199 = vmatpush.bf16.msra.mxu0 0
    %200 = vmatpush.bf16.msra.mxu0 0
    %201 = vmatpush.bf16.msra.mxu0 0
    %202 = vmatpush.bf16.msra.mxu0 0
    %203 = vmatpush.bf16.msra.mxu0 0
    %204 = vmatpush.bf16.msra.mxu0 0
    %205 = vmatpush.bf16.msra.mxu0 %v194
    %206 = vmatpush.bf16.msra.mxu0 %v149
    %207 = vmatmul.bf16.gmra.mxu0 %v157
    %v208 = vpop.f32.mrf.mxu0
    %v209 = vadd.f32 0.0, %v208
    %v210 = vpop.f32.mrf.mxu0
    %v211 = vadd.f32 0.0, %v210
    %212 = vmatmul.bf16.gmra.mxu0 %v160
    %v213 = vpop.f32.mrf.mxu0
    %v214 = vadd.f32 0.0, %v213
    %v215 = vpop.f32.mrf.mxu0
    %v216 = vadd.f32 0.0, %v215
    %217 = vmatmul.bf16.gmra.mxu0 %v163
    %v218 = vpop.f32.mrf.mxu0
    %v219 = vadd.f32 0.0, %v218
    %v220 = vpop.f32.mrf.mxu0
    %v221 = vadd.f32 0.0, %v220
    %222 = vmatmul.bf16.gmra.mxu0 %v166
    %v223 = vpop.f32.mrf.mxu0
    %v224 = vadd.f32 0.0, %v223
    %v225 = vpop.f32.mrf.mxu0
    %v226 = vadd.f32 0.0, %v225
    %227 = vmatmul.bf16.gmra.mxu0 %v169
    %v228 = vpop.f32.mrf.mxu0
    %v229 = vadd.f32 0.0, %v228
    %v230 = vpop.f32.mrf.mxu0
    %v231 = vadd.f32 0.0, %v230
    %232 = vmatmul.bf16.gmra.mxu0 %v172
    %v233 = vpop.f32.mrf.mxu0
    %v234 = vadd.f32 0.0, %v233
    %v235 = vpop.f32.mrf.mxu0
    %v236 = vadd.f32 0.0, %v235
    %237 = vmatmul.bf16.gmra.mxu0 %v175
    %v238 = vpop.f32.mrf.mxu0
    %v239 = vadd.f32 0.0, %v238
    %v240 = vpop.f32.mrf.mxu0
    %v241 = vadd.f32 0.0, %v240
    %242 = vmatmul.bf16.gmra.mxu0 %v178
    %v243 = vpop.f32.mrf.mxu0
    %v244 = vadd.f32 0.0, %v243
    %v245 = vpop.f32.mrf.mxu0
    %v246 = vadd.f32 0.0, %v245
    %247 = vmatmul.bf16.gmra.mxu0 %v181
    %v248 = vpop.f32.mrf.mxu0
    %v249 = vadd.f32 0.0, %v248
    %v250 = vpop.f32.mrf.mxu0
    %v251 = vadd.f32 0.0, %v250
    %252 = vmatmul.bf16.gmra.mxu0 %v184
    %v253 = vpop.f32.mrf.mxu0
    %v254 = vadd.f32 0.0, %v253
    %v255 = vpop.f32.mrf.mxu0
    %v256 = vadd.f32 0.0, %v255
    %257 = vmatmul.bf16.gmra.mxu0 %v187
    %v258 = vpop.f32.mrf.mxu0
    %v259 = vadd.f32 0.0, %v258
    %v260 = vpop.f32.mrf.mxu0
    %v261 = vadd.f32 0.0, %v260
    %262 = vmatmul.bf16.gmra.mxu0 %v190
    %v263 = vpop.f32.mrf.mxu0
    %v264 = vadd.f32 0.0, %v263
    %v265 = vpop.f32.mrf.mxu0
    %v266 = vadd.f32 0.0, %v265
    %267 = vdwg.mxu0
    %268 = vmatpush.bf16.msra.mxu0 0
    %269 = vmatpush.bf16.msra.mxu0 0
    %270 = vmatpush.bf16.msra.mxu0 0
    %271 = vmatpush.bf16.msra.mxu0 0
    %272 = vmatpush.bf16.msra.mxu0 0
    %273 = vmatpush.bf16.msra.mxu0 0
    %274 = vmatpush.bf16.msra.mxu0 %v197
    %275 = vmatpush.bf16.msra.mxu0 %v150
    %276 = vmatmul.bf16.gmra.mxu0 %v157
    %v277 = vpop.f32.mrf.mxu0
    %v278 = vadd.f32 0.0, %v277
    %v279 = vpop.f32.mrf.mxu0
    %v280 = vadd.f32 0.0, %v279
    %281 = vmatmul.bf16.gmra.mxu0 %v160
    %v282 = vpop.f32.mrf.mxu0
    %v283 = vadd.f32 0.0, %v282
    %v284 = vpop.f32.mrf.mxu0
    %v285 = vadd.f32 0.0, %v284
    %286 = vmatmul.bf16.gmra.mxu0 %v163
    %v287 = vpop.f32.mrf.mxu0
    %v288 = vadd.f32 0.0, %v287
    %v289 = vpop.f32.mrf.mxu0
    %v290 = vadd.f32 0.0, %v289
    %291 = vmatmul.bf16.gmra.mxu0 %v166
    %v292 = vpop.f32.mrf.mxu0
    %v293 = vadd.f32 0.0, %v292
    %v294 = vpop.f32.mrf.mxu0
    %v295 = vadd.f32 0.0, %v294
    %296 = vmatmul.bf16.gmra.mxu0 %v169
    %v297 = vpop.f32.mrf.mxu0
    %v298 = vadd.f32 0.0, %v297
    %v299 = vpop.f32.mrf.mxu0
    %v300 = vadd.f32 0.0, %v299
    %301 = vmatmul.bf16.gmra.mxu0 %v172
    %v302 = vpop.f32.mrf.mxu0
    %v303 = vadd.f32 0.0, %v302
    %v304 = vpop.f32.mrf.mxu0
    %v305 = vadd.f32 0.0, %v304
    %306 = vmatmul.bf16.gmra.mxu0 %v175
    %v307 = vpop.f32.mrf.mxu0
    %v308 = vadd.f32 0.0, %v307
    %v309 = vpop.f32.mrf.mxu0
    %v310 = vadd.f32 0.0, %v309
    %311 = vmatmul.bf16.gmra.mxu0 %v178
    %v312 = vpop.f32.mrf.mxu0
    %v313 = vadd.f32 0.0, %v312
    %v314 = vpop.f32.mrf.mxu0
    %v315 = vadd.f32 0.0, %v314
    %316 = vmatmul.bf16.gmra.mxu0 %v181
    %v317 = vpop.f32.mrf.mxu0
    %v318 = vadd.f32 0.0, %v317
    %v319 = vpop.f32.mrf.mxu0
    %v320 = vadd.f32 0.0, %v319
    %321 = vmatmul.bf16.gmra.mxu0 %v184
    %v322 = vpop.f32.mrf.mxu0
    %v323 = vadd.f32 0.0, %v322
    %v324 = vpop.f32.mrf.mxu0
    %v325 = vadd.f32 0.0, %v324
    %326 = vmatmul.bf16.gmra.mxu0 %v187
    %v327 = vpop.f32.mrf.mxu0
    %v328 = vadd.f32 0.0, %v327
    %v329 = vpop.f32.mrf.mxu0
    %v330 = vadd.f32 0.0, %v329
    %331 = vmatmul.bf16.gmra.mxu0 %v190
    %v332 = vpop.f32.mrf.mxu0
    %v333 = vadd.f32 0.0, %v332
    %v334 = vpop.f32.mrf.mxu0
    %v335 = vadd.f32 0.0, %v334
    %336 = vdwg.mxu0
    %337 = vst [vmem:[#allocation2] sm:$0xff] %v209
    %338 = vst [vmem:[#allocation2 + $0x8] sm:$0xff] %v278
    %339 = vst [vmem:[#allocation2 + $0x10] sm:$0xff] %v211
    %340 = vst [vmem:[#allocation2 + $0x18] sm:$0xff] %v280
    %341 = vst [vmem:[#allocation2 + $0x20] sm:$0xff] %v214
    %342 = vst [vmem:[#allocation2 + $0x28] sm:$0xff] %v283
    %343 = vst [vmem:[#allocation2 + $0x30] sm:$0xff] %v216
    %344 = vst [vmem:[#allocation2 + $0x38] sm:$0xff] %v285
    %345 = vst [vmem:[#allocation2 + $0x40] sm:$0xff] %v219
    %346 = vst [vmem:[#allocation2 + $0x48] sm:$0xff] %v288
    %347 = vst [vmem:[#allocation2 + $0x50] sm:$0xff] %v221
    %348 = vst [vmem:[#allocation2 + $0x58] sm:$0xff] %v290
    %349 = vst [vmem:[#allocation2 + $0x60] sm:$0xff] %v224
    %350 = vst [vmem:[#allocation2 + $0x68] sm:$0xff] %v293
    %351 = vst [vmem:[#allocation2 + $0x70] sm:$0xff] %v226
    %352 = vst [vmem:[#allocation2 + $0x78] sm:$0xff] %v295
    %353 = vst [vmem:[#allocation2 + $0x80] sm:$0xff] %v229
    %354 = vst [vmem:[#allocation2 + $0x88] sm:$0xff] %v298
    %355 = vst [vmem:[#allocation2 + $0x90] sm:$0xff] %v231
    %356 = vst [vmem:[#allocation2 + $0x98] sm:$0xff] %v300
    %357 = vst [vmem:[#allocation2 + $0xa0] sm:$0xff] %v234
    %358 = vst [vmem:[#allocation2 + $0xa8] sm:$0xff] %v303
    %359 = vst [vmem:[#allocation2 + $0xb0] sm:$0xff] %v236
    %360 = vst [vmem:[#allocation2 + $0xb8] sm:$0xff] %v305
    %361 = vst [vmem:[#allocation2 + $0xc0] sm:$0xff] %v239
    %362 = vst [vmem:[#allocation2 + $0xc8] sm:$0xff] %v308
    %363 = vst [vmem:[#allocation2 + $0xd0] sm:$0xff] %v241
    %364 = vst [vmem:[#allocation2 + $0xd8] sm:$0xff] %v310
    %365 = vst [vmem:[#allocation2 + $0xe0] sm:$0xff] %v244
    %366 = vst [vmem:[#allocation2 + $0xe8] sm:$0xff] %v313
    %367 = vst [vmem:[#allocation2 + $0xf0] sm:$0xff] %v246
    %368 = vst [vmem:[#allocation2 + $0xf8] sm:$0xff] %v315
    %369 = vst [vmem:[#allocation2 + $0x100] sm:$0xff] %v249
    %370 = vst [vmem:[#allocation2 + $0x108] sm:$0xff] %v318
    %371 = vst [vmem:[#allocation2 + $0x110] sm:$0xff] %v251
    %372 = vst [vmem:[#allocation2 + $0x118] sm:$0xff] %v320
    %373 = vst [vmem:[#allocation2 + $0x120] sm:$0xff] %v254
    %374 = vst [vmem:[#allocation2 + $0x128] sm:$0xff] %v323
    %375 = vst [vmem:[#allocation2 + $0x130] sm:$0xff] %v256
    %376 = vst [vmem:[#allocation2 + $0x138] sm:$0xff] %v325
    %377 = vst [vmem:[#allocation2 + $0x140] sm:$0xff] %v259
    %378 = vst [vmem:[#allocation2 + $0x148] sm:$0xff] %v328
    %379 = vst [vmem:[#allocation2 + $0x150] sm:$0xff] %v261
    %380 = vst [vmem:[#allocation2 + $0x158] sm:$0xff] %v330
    %381 = vst [vmem:[#allocation2 + $0x160] sm:$0xff] %v264
    %382 = vst [vmem:[#allocation2 + $0x168] sm:$0xff] %v333
    %383 = vst [vmem:[#allocation2 + $0x170] sm:$0xff] %v266
    %384 = vst [vmem:[#allocation2 + $0x178] sm:$0xff] %v335
    %s385 = scalar_lea.vmem %s0, 4
    %v386 = vld [vmem:[%s385] sm:$0xf]
    %v387 = vld [vmem:[%s385 + $0x4] sm:$0xf]
    %v388 = vld [vmem:[%s385 + $0x8] sm:$0xf]
    %v389 = vld [vmem:[%s385 + $0xc] sm:$0xf]
    %v390 = vld [vmem:[%s385 + $0x10] sm:$0xf]
    %v391 = vld [vmem:[%s385 + $0x14] sm:$0xf]
    %v392 = vld [vmem:[%s385 + $0x18] sm:$0xf]
    %v393 = vld [vmem:[%s385 + $0x1c] sm:$0xf]
    %v394 = vld [vmem:[%s385 + $0x20] sm:$0xf]
    %v395 = vld [vmem:[%s385 + $0x24] sm:$0xf]
    %v396 = vld [vmem:[%s385 + $0x28] sm:$0xf]
    %v397 = vld [vmem:[%s385 + $0x2c] sm:$0xf]
    %v398 = vld [vmem:[%s385 + $0x30] sm:$0xf]
    %v399 = vld [vmem:[%s385 + $0x34] sm:$0xf]
    %v400 = vld [vmem:[%s385 + $0x38] sm:$0xf]
    %v401 = vld [vmem:[%s385 + $0x3c] sm:$0xf]
    %v402 = vld [vmem:[%s385 + $0x40] sm:$0xf]
    %v403 = vld [vmem:[%s385 + $0x44] sm:$0xf]
    %v404 = vld [vmem:[%s385 + $0x48] sm:$0xf]
    %v405 = vld [vmem:[%s385 + $0x4c] sm:$0xf]
    %v406 = vld [vmem:[%s385 + $0x50] sm:$0xf]
    %v407 = vld [vmem:[%s385 + $0x54] sm:$0xf]
    %v408 = vld [vmem:[%s385 + $0x58] sm:$0xf]
    %v409 = vld [vmem:[%s385 + $0x5c] sm:$0xf]
    %s410 = scalar_lea.vmem %s1, 32
    %v411 = vld [vmem:[%s410] sm:$0xff]
    %v412 = vld [vmem:[%s410 + $0x8] sm:$0xff]
    %v413 = vld [vmem:[%s410 + $0x10] sm:$0xff]
    %v414 = vld [vmem:[%s410 + $0x18] sm:$0x33]
    %v439 = vunpack.c.l.b16 %v386
    %v440 = vunpack.c.l.b16 %v387
    %v441 = vunpack.c.l.b16 %v388
    %v442 = vunpack.c.l.b16 %v389
    %v443 = vunpack.c.l.b16 %v390
    %v444 = vunpack.c.l.b16 %v391
    %v445 = vunpack.c.l.b16 %v392
    %v446 = vunpack.c.l.b16 %v393
    %v447 = vunpack.c.l.b16 %v394
    %v448 = vunpack.c.l.b16 %v395
    %v449 = vunpack.c.l.b16 %v396
    %v450 = vunpack.c.l.b16 %v397
    %v451 = vunpack.c.l.b16 %v398
    %v452 = vunpack.c.l.b16 %v399
    %v453 = vunpack.c.l.b16 %v400
    %v454 = vunpack.c.l.b16 %v401
    %v455 = vunpack.c.l.b16 %v402
    %v456 = vunpack.c.l.b16 %v403
    %v457 = vunpack.c.l.b16 %v404
    %v458 = vunpack.c.l.b16 %v405
    %v459 = vunpack.c.l.b16 %v406
    %v460 = vunpack.c.l.b16 %v407
    %v461 = vunpack.c.l.b16 %v408
    %v462 = vunpack.c.l.b16 %v409
    %v463 = vpack.c.b16 %v440, %v439
    %v464 = vpack.c.b16 %v442, %v441
    %v465 = vpack.c.b16 %v444, %v443
    %v466 = vpack.c.b16 %v446, %v445
    %v467 = vpack.c.b16 %v448, %v447
    %v468 = vpack.c.b16 %v450, %v449
    %v469 = vpack.c.b16 %v452, %v451
    %v470 = vpack.c.b16 %v454, %v453
    %v471 = vpack.c.b16 %v456, %v455
    %v472 = vpack.c.b16 %v458, %v457
    %v473 = vpack.c.b16 %v460, %v459
    %v474 = vpack.c.b16 %v462, %v461
    %v479 = vunpack.c.l.b16 %v411
    %v480 = vunpack.c.h.b16 %v411
    %v481 = vunpack.c.l.b16 %v412
    %v482 = vunpack.c.h.b16 %v412
    %v483 = vunpack.c.l.b16 %v413
    %v484 = vunpack.c.h.b16 %v413
    %v485 = vunpack.c.l.b16 %v414
    %v486 = vunpack.c.h.b16 %v414
    %v487 = vpack.c.b16 %v481, %v479
    %v488 = vpack.c.b16 %v482, %v480
    %v489 = vpack.c.b16 %v485, %v483
    %v490 = vpack.c.b16 %v486, %v484
    %v494 = vsel %vm155, %v463, 0
    %v497 = vsel %vm155, %v464, 0
    %v500 = vsel %vm155, %v465, 0
    %v503 = vsel %vm155, %v466, 0
    %v506 = vsel %vm155, %v467, 0
    %v509 = vsel %vm155, %v468, 0
    %v512 = vsel %vm155, %v469, 0
    %v515 = vsel %vm155, %v470, 0
    %v518 = vsel %vm155, %v471, 0
    %v521 = vsel %vm155, %v472, 0
    %v524 = vsel %vm155, %v473, 0
    %v527 = vsel %vm155, %v474, 0
    %v530 = vsel %vm192, %v489, 0
    %v533 = vsel %vm192, %v490, 0
    %535 = vmatpush.bf16.msra.mxu0 0
    %536 = vmatpush.bf16.msra.mxu0 0
    %537 = vmatpush.bf16.msra.mxu0 0
    %538 = vmatpush.bf16.msra.mxu0 0
    %539 = vmatpush.bf16.msra.mxu0 0
    %540 = vmatpush.bf16.msra.mxu0 0
    %541 = vmatpush.bf16.msra.mxu0 %v530
    %542 = vmatpush.bf16.msra.mxu0 %v487
    %543 = vmatmul.bf16.gmra.mxu0 %v494
    %v544 = vpop.f32.mrf.mxu0
    %v545 = vadd.f32 0.0, %v544
    %v546 = vpop.f32.mrf.mxu0
    %v547 = vadd.f32 0.0, %v546
    %548 = vmatmul.bf16.gmra.mxu0 %v497
    %v549 = vpop.f32.mrf.mxu0
    %v550 = vadd.f32 0.0, %v549
    %v551 = vpop.f32.mrf.mxu0
    %v552 = vadd.f32 0.0, %v551
    %553 = vmatmul.bf16.gmra.mxu0 %v500
    %v554 = vpop.f32.mrf.mxu0
    %v555 = vadd.f32 0.0, %v554
    %v556 = vpop.f32.mrf.mxu0
    %v557 = vadd.f32 0.0, %v556
    %558 = vmatmul.bf16.gmra.mxu0 %v503
    %v559 = vpop.f32.mrf.mxu0
    %v560 = vadd.f32 0.0, %v559
    %v561 = vpop.f32.mrf.mxu0
    %v562 = vadd.f32 0.0, %v561
    %563 = vmatmul.bf16.gmra.mxu0 %v506
    %v564 = vpop.f32.mrf.mxu0
    %v565 = vadd.f32 0.0, %v564
    %v566 = vpop.f32.mrf.mxu0
    %v567 = vadd.f32 0.0, %v566
    %568 = vmatmul.bf16.gmra.mxu0 %v509
    %v569 = vpop.f32.mrf.mxu0
    %v570 = vadd.f32 0.0, %v569
    %v571 = vpop.f32.mrf.mxu0
    %v572 = vadd.f32 0.0, %v571
    %573 = vmatmul.bf16.gmra.mxu0 %v512
    %v574 = vpop.f32.mrf.mxu0
    %v575 = vadd.f32 0.0, %v574
    %v576 = vpop.f32.mrf.mxu0
    %v577 = vadd.f32 0.0, %v576
    %578 = vmatmul.bf16.gmra.mxu0 %v515
    %v579 = vpop.f32.mrf.mxu0
    %v580 = vadd.f32 0.0, %v579
    %v581 = vpop.f32.mrf.mxu0
    %v582 = vadd.f32 0.0, %v581
    %583 = vmatmul.bf16.gmra.mxu0 %v518
    %v584 = vpop.f32.mrf.mxu0
    %v585 = vadd.f32 0.0, %v584
    %v586 = vpop.f32.mrf.mxu0
    %v587 = vadd.f32 0.0, %v586
    %588 = vmatmul.bf16.gmra.mxu0 %v521
    %v589 = vpop.f32.mrf.mxu0
    %v590 = vadd.f32 0.0, %v589
    %v591 = vpop.f32.mrf.mxu0
    %v592 = vadd.f32 0.0, %v591
    %593 = vmatmul.bf16.gmra.mxu0 %v524
    %v594 = vpop.f32.mrf.mxu0
    %v595 = vadd.f32 0.0, %v594
    %v596 = vpop.f32.mrf.mxu0
    %v597 = vadd.f32 0.0, %v596
    %598 = vmatmul.bf16.gmra.mxu0 %v527
    %v599 = vpop.f32.mrf.mxu0
    %v600 = vadd.f32 0.0, %v599
    %v601 = vpop.f32.mrf.mxu0
    %v602 = vadd.f32 0.0, %v601
    %603 = vdwg.mxu0
    %604 = vmatpush.bf16.msra.mxu0 0
    %605 = vmatpush.bf16.msra.mxu0 0
    %606 = vmatpush.bf16.msra.mxu0 0
    %607 = vmatpush.bf16.msra.mxu0 0
    %608 = vmatpush.bf16.msra.mxu0 0
    %609 = vmatpush.bf16.msra.mxu0 0
    %610 = vmatpush.bf16.msra.mxu0 %v533
    %611 = vmatpush.bf16.msra.mxu0 %v488
    %612 = vmatmul.bf16.gmra.mxu0 %v494
    %v613 = vpop.f32.mrf.mxu0
    %v614 = vadd.f32 0.0, %v613
    %v615 = vpop.f32.mrf.mxu0
    %v616 = vadd.f32 0.0, %v615
    %617 = vmatmul.bf16.gmra.mxu0 %v497
    %v618 = vpop.f32.mrf.mxu0
    %v619 = vadd.f32 0.0, %v618
    %v620 = vpop.f32.mrf.mxu0
    %v621 = vadd.f32 0.0, %v620
    %622 = vmatmul.bf16.gmra.mxu0 %v500
    %v623 = vpop.f32.mrf.mxu0
    %v624 = vadd.f32 0.0, %v623
    %v625 = vpop.f32.mrf.mxu0
    %v626 = vadd.f32 0.0, %v625
    %627 = vmatmul.bf16.gmra.mxu0 %v503
    %v628 = vpop.f32.mrf.mxu0
    %v629 = vadd.f32 0.0, %v628
    %v630 = vpop.f32.mrf.mxu0
    %v631 = vadd.f32 0.0, %v630
    %632 = vmatmul.bf16.gmra.mxu0 %v506
    %v633 = vpop.f32.mrf.mxu0
    %v634 = vadd.f32 0.0, %v633
    %v635 = vpop.f32.mrf.mxu0
    %v636 = vadd.f32 0.0, %v635
    %637 = vmatmul.bf16.gmra.mxu0 %v509
    %v638 = vpop.f32.mrf.mxu0
    %v639 = vadd.f32 0.0, %v638
    %v640 = vpop.f32.mrf.mxu0
    %v641 = vadd.f32 0.0, %v640
    %642 = vmatmul.bf16.gmra.mxu0 %v512
    %v643 = vpop.f32.mrf.mxu0
    %v644 = vadd.f32 0.0, %v643
    %v645 = vpop.f32.mrf.mxu0
    %v646 = vadd.f32 0.0, %v645
    %647 = vmatmul.bf16.gmra.mxu0 %v515
    %v648 = vpop.f32.mrf.mxu0
    %v649 = vadd.f32 0.0, %v648
    %v650 = vpop.f32.mrf.mxu0
    %v651 = vadd.f32 0.0, %v650
    %652 = vmatmul.bf16.gmra.mxu0 %v518
    %v653 = vpop.f32.mrf.mxu0
    %v654 = vadd.f32 0.0, %v653
    %v655 = vpop.f32.mrf.mxu0
    %v656 = vadd.f32 0.0, %v655
    %657 = vmatmul.bf16.gmra.mxu0 %v521
    %v658 = vpop.f32.mrf.mxu0
    %v659 = vadd.f32 0.0, %v658
    %v660 = vpop.f32.mrf.mxu0
    %v661 = vadd.f32 0.0, %v660
    %662 = vmatmul.bf16.gmra.mxu0 %v524
    %v663 = vpop.f32.mrf.mxu0
    %v664 = vadd.f32 0.0, %v663
    %v665 = vpop.f32.mrf.mxu0
    %v666 = vadd.f32 0.0, %v665
    %667 = vmatmul.bf16.gmra.mxu0 %v527
    %v668 = vpop.f32.mrf.mxu0
    %v669 = vadd.f32 0.0, %v668
    %v670 = vpop.f32.mrf.mxu0
    %v671 = vadd.f32 0.0, %v670
    %672 = vdwg.mxu0
    %v673 = vld [vmem:[#allocation2] sm:$0xff]
    %v674 = vld [vmem:[#allocation2 + $0x8] sm:$0xff]
    %v675 = vld [vmem:[#allocation2 + $0x10] sm:$0xff]
    %v676 = vld [vmem:[#allocation2 + $0x18] sm:$0xff]
    %v677 = vld [vmem:[#allocation2 + $0x20] sm:$0xff]
    %v678 = vld [vmem:[#allocation2 + $0x28] sm:$0xff]
    %v679 = vld [vmem:[#allocation2 + $0x30] sm:$0xff]
    %v680 = vld [vmem:[#allocation2 + $0x38] sm:$0xff]
    %v681 = vld [vmem:[#allocation2 + $0x40] sm:$0xff]
    %v682 = vld [vmem:[#allocation2 + $0x48] sm:$0xff]
    %v683 = vld [vmem:[#allocation2 + $0x50] sm:$0xff]
    %v684 = vld [vmem:[#allocation2 + $0x58] sm:$0xff]
    %v685 = vld [vmem:[#allocation2 + $0x60] sm:$0xff]
    %v686 = vld [vmem:[#allocation2 + $0x68] sm:$0xff]
    %v687 = vld [vmem:[#allocation2 + $0x70] sm:$0xff]
    %v688 = vld [vmem:[#allocation2 + $0x78] sm:$0xff]
    %v689 = vld [vmem:[#allocation2 + $0x80] sm:$0xff]
    %v690 = vld [vmem:[#allocation2 + $0x88] sm:$0xff]
    %v691 = vld [vmem:[#allocation2 + $0x90] sm:$0xff]
    %v692 = vld [vmem:[#allocation2 + $0x98] sm:$0xff]
    %v693 = vld [vmem:[#allocation2 + $0xa0] sm:$0xff]
    %v694 = vld [vmem:[#allocation2 + $0xa8] sm:$0xff]
    %v695 = vld [vmem:[#allocation2 + $0xb0] sm:$0xff]
    %v696 = vld [vmem:[#allocation2 + $0xb8] sm:$0xff]
    %v697 = vld [vmem:[#allocation2 + $0xc0] sm:$0xff]
    %v698 = vld [vmem:[#allocation2 + $0xc8] sm:$0xff]
    %v699 = vld [vmem:[#allocation2 + $0xd0] sm:$0xff]
    %v700 = vld [vmem:[#allocation2 + $0xd8] sm:$0xff]
    %v701 = vld [vmem:[#allocation2 + $0xe0] sm:$0xff]
    %v702 = vld [vmem:[#allocation2 + $0xe8] sm:$0xff]
    %v703 = vld [vmem:[#allocation2 + $0xf0] sm:$0xff]
    %v704 = vld [vmem:[#allocation2 + $0xf8] sm:$0xff]
    %v705 = vld [vmem:[#allocation2 + $0x100] sm:$0xff]
    %v706 = vld [vmem:[#allocation2 + $0x108] sm:$0xff]
    %v707 = vld [vmem:[#allocation2 + $0x110] sm:$0xff]
    %v708 = vld [vmem:[#allocation2 + $0x118] sm:$0xff]
    %v709 = vld [vmem:[#allocation2 + $0x120] sm:$0xff]
    %v710 = vld [vmem:[#allocation2 + $0x128] sm:$0xff]
    %v711 = vld [vmem:[#allocation2 + $0x130] sm:$0xff]
    %v712 = vld [vmem:[#allocation2 + $0x138] sm:$0xff]
    %v713 = vld [vmem:[#allocation2 + $0x140] sm:$0xff]
    %v714 = vld [vmem:[#allocation2 + $0x148] sm:$0xff]
    %v715 = vld [vmem:[#allocation2 + $0x150] sm:$0xff]
    %v716 = vld [vmem:[#allocation2 + $0x158] sm:$0xff]
    %v717 = vld [vmem:[#allocation2 + $0x160] sm:$0xff]
    %v718 = vld [vmem:[#allocation2 + $0x168] sm:$0xff]
    %v719 = vld [vmem:[#allocation2 + $0x170] sm:$0xff]
    %v720 = vld [vmem:[#allocation2 + $0x178] sm:$0xff]
    %v721 = vadd.f32 %v673, %v545
    %v722 = vadd.f32 %v674, %v614
    %v723 = vadd.f32 %v675, %v547
    %v724 = vadd.f32 %v676, %v616
    %v725 = vadd.f32 %v677, %v550
    %v726 = vadd.f32 %v678, %v619
    %v727 = vadd.f32 %v679, %v552
    %v728 = vadd.f32 %v680, %v621
    %v729 = vadd.f32 %v681, %v555
    %v730 = vadd.f32 %v682, %v624
    %v731 = vadd.f32 %v683, %v557
    %v732 = vadd.f32 %v684, %v626
    %v733 = vadd.f32 %v685, %v560
    %v734 = vadd.f32 %v686, %v629
    %v735 = vadd.f32 %v687, %v562
    %v736 = vadd.f32 %v688, %v631
    %v737 = vadd.f32 %v689, %v565
    %v738 = vadd.f32 %v690, %v634
    %v739 = vadd.f32 %v691, %v567
    %v740 = vadd.f32 %v692, %v636
    %v741 = vadd.f32 %v693, %v570
    %v742 = vadd.f32 %v694, %v639
    %v743 = vadd.f32 %v695, %v572
    %v744 = vadd.f32 %v696, %v641
    %v745 = vadd.f32 %v697, %v575
    %v746 = vadd.f32 %v698, %v644
    %v747 = vadd.f32 %v699, %v577
    %v748 = vadd.f32 %v700, %v646
    %v749 = vadd.f32 %v701, %v580
    %v750 = vadd.f32 %v702, %v649
    %v751 = vadd.f32 %v703, %v582
    %v752 = vadd.f32 %v704, %v651
    %v753 = vadd.f32 %v705, %v585
    %v754 = vadd.f32 %v706, %v654
    %v755 = vadd.f32 %v707, %v587
    %v756 = vadd.f32 %v708, %v656
    %v757 = vadd.f32 %v709, %v590
    %v758 = vadd.f32 %v710, %v659
    %v759 = vadd.f32 %v711, %v592
    %v760 = vadd.f32 %v712, %v661
    %v761 = vadd.f32 %v713, %v595
    %v762 = vadd.f32 %v714, %v664
    %v763 = vadd.f32 %v715, %v597
    %v764 = vadd.f32 %v716, %v666
    %v765 = vadd.f32 %v717, %v600
    %v766 = vadd.f32 %v718, %v669
    %v767 = vadd.f32 %v719, %v602
    %v768 = vadd.f32 %v720, %v671
    %769 = vst [vmem:[#allocation2] sm:$0xff] %v721
    %770 = vst [vmem:[#allocation2 + $0x8] sm:$0xff] %v722
    %771 = vst [vmem:[#allocation2 + $0x10] sm:$0xff] %v723
    %772 = vst [vmem:[#allocation2 + $0x18] sm:$0xff] %v724
    %773 = vst [vmem:[#allocation2 + $0x20] sm:$0xff] %v725
    %774 = vst [vmem:[#allocation2 + $0x28] sm:$0xff] %v726
    %775 = vst [vmem:[#allocation2 + $0x30] sm:$0xff] %v727
    %776 = vst [vmem:[#allocation2 + $0x38] sm:$0xff] %v728
    %777 = vst [vmem:[#allocation2 + $0x40] sm:$0xff] %v729
    %778 = vst [vmem:[#allocation2 + $0x48] sm:$0xff] %v730
    %779 = vst [vmem:[#allocation2 + $0x50] sm:$0xff] %v731
    %780 = vst [vmem:[#allocation2 + $0x58] sm:$0xff] %v732
    %781 = vst [vmem:[#allocation2 + $0x60] sm:$0xff] %v733
    %782 = vst [vmem:[#allocation2 + $0x68] sm:$0xff] %v734
    %783 = vst [vmem:[#allocation2 + $0x70] sm:$0xff] %v735
    %784 = vst [vmem:[#allocation2 + $0x78] sm:$0xff] %v736
    %785 = vst [vmem:[#allocation2 + $0x80] sm:$0xff] %v737
    %786 = vst [vmem:[#allocation2 + $0x88] sm:$0xff] %v738
    %787 = vst [vmem:[#allocation2 + $0x90] sm:$0xff] %v739
    %788 = vst [vmem:[#allocation2 + $0x98] sm:$0xff] %v740
    %789 = vst [vmem:[#allocation2 + $0xa0] sm:$0xff] %v741
    %790 = vst [vmem:[#allocation2 + $0xa8] sm:$0xff] %v742
    %791 = vst [vmem:[#allocation2 + $0xb0] sm:$0xff] %v743
    %792 = vst [vmem:[#allocation2 + $0xb8] sm:$0xff] %v744
    %793 = vst [vmem:[#allocation2 + $0xc0] sm:$0xff] %v745
    %794 = vst [vmem:[#allocation2 + $0xc8] sm:$0xff] %v746
    %795 = vst [vmem:[#allocation2 + $0xd0] sm:$0xff] %v747
    %796 = vst [vmem:[#allocation2 + $0xd8] sm:$0xff] %v748
    %797 = vst [vmem:[#allocation2 + $0xe0] sm:$0xff] %v749
    %798 = vst [vmem:[#allocation2 + $0xe8] sm:$0xff] %v750
    %799 = vst [vmem:[#allocation2 + $0xf0] sm:$0xff] %v751
    %800 = vst [vmem:[#allocation2 + $0xf8] sm:$0xff] %v752
    %801 = vst [vmem:[#allocation2 + $0x100] sm:$0xff] %v753
    %802 = vst [vmem:[#allocation2 + $0x108] sm:$0xff] %v754
    %803 = vst [vmem:[#allocation2 + $0x110] sm:$0xff] %v755
    %804 = vst [vmem:[#allocation2 + $0x118] sm:$0xff] %v756
    %805 = vst [vmem:[#allocation2 + $0x120] sm:$0xff] %v757
    %806 = vst [vmem:[#allocation2 + $0x128] sm:$0xff] %v758
    %807 = vst [vmem:[#allocation2 + $0x130] sm:$0xff] %v759
    %808 = vst [vmem:[#allocation2 + $0x138] sm:$0xff] %v760
    %809 = vst [vmem:[#allocation2 + $0x140] sm:$0xff] %v761
    %810 = vst [vmem:[#allocation2 + $0x148] sm:$0xff] %v762
    %811 = vst [vmem:[#allocation2 + $0x150] sm:$0xff] %v763
    %812 = vst [vmem:[#allocation2 + $0x158] sm:$0xff] %v764
    %813 = vst [vmem:[#allocation2 + $0x160] sm:$0xff] %v765
    %814 = vst [vmem:[#allocation2 + $0x168] sm:$0xff] %v766
    %815 = vst [vmem:[#allocation2 + $0x170] sm:$0xff] %v767
    %816 = vst [vmem:[#allocation2 + $0x178] sm:$0xff] %v768
    %s817 = scalar_lea.vmem %s0, 8
    %v818 = vld [vmem:[%s817] sm:$0xf]
    %v819 = vld [vmem:[%s817 + $0x4] sm:$0xf]
    %v820 = vld [vmem:[%s817 + $0x8] sm:$0xf]
    %v821 = vld [vmem:[%s817 + $0xc] sm:$0xf]
    %v822 = vld [vmem:[%s817 + $0x10] sm:$0xf]
    %v823 = vld [vmem:[%s817 + $0x14] sm:$0xf]
    %v824 = vld [vmem:[%s817 + $0x18] sm:$0xf]
    %v825 = vld [vmem:[%s817 + $0x1c] sm:$0xf]
    %v826 = vld [vmem:[%s817 + $0x20] sm:$0xf]
    %v827 = vld [vmem:[%s817 + $0x24] sm:$0xf]
    %v828 = vld [vmem:[%s817 + $0x28] sm:$0xf]
    %v829 = vld [vmem:[%s817 + $0x2c] sm:$0xf]
    %v830 = vld [vmem:[%s817 + $0x30] sm:$0xf]
    %v831 = vld [vmem:[%s817 + $0x34] sm:$0xf]
    %v832 = vld [vmem:[%s817 + $0x38] sm:$0xf]
    %v833 = vld [vmem:[%s817 + $0x3c] sm:$0xf]
    %v834 = vld [vmem:[%s817 + $0x40] sm:$0xf]
    %v835 = vld [vmem:[%s817 + $0x44] sm:$0xf]
    %v836 = vld [vmem:[%s817 + $0x48] sm:$0xf]
    %v837 = vld [vmem:[%s817 + $0x4c] sm:$0xf]
    %v838 = vld [vmem:[%s817 + $0x50] sm:$0xf]
    %v839 = vld [vmem:[%s817 + $0x54] sm:$0xf]
    %v840 = vld [vmem:[%s817 + $0x58] sm:$0xf]
    %v841 = vld [vmem:[%s817 + $0x5c] sm:$0xf]
    %s842 = scalar_lea.vmem %s1, 64
    %v843 = vld [vmem:[%s842] sm:$0xff]
    %v844 = vld [vmem:[%s842 + $0x8] sm:$0xff]
    %v845 = vld [vmem:[%s842 + $0x10] sm:$0xff]
    %v846 = vld [vmem:[%s842 + $0x18] sm:$0x33]
    %v871 = vunpack.c.l.b16 %v818
    %v872 = vunpack.c.l.b16 %v819
    %v873 = vunpack.c.l.b16 %v820
    %v874 = vunpack.c.l.b16 %v821
    %v875 = vunpack.c.l.b16 %v822
    %v876 = vunpack.c.l.b16 %v823
    %v877 = vunpack.c.l.b16 %v824
    %v878 = vunpack.c.l.b16 %v825
    %v879 = vunpack.c.l.b16 %v826
    %v880 = vunpack.c.l.b16 %v827
    %v881 = vunpack.c.l.b16 %v828
    %v882 = vunpack.c.l.b16 %v829
    %v883 = vunpack.c.l.b16 %v830
    %v884 = vunpack.c.l.b16 %v831
    %v885 = vunpack.c.l.b16 %v832
    %v886 = vunpack.c.l.b16 %v833
    %v887 = vunpack.c.l.b16 %v834
    %v888 = vunpack.c.l.b16 %v835
    %v889 = vunpack.c.l.b16 %v836
    %v890 = vunpack.c.l.b16 %v837
    %v891 = vunpack.c.l.b16 %v838
    %v892 = vunpack.c.l.b16 %v839
    %v893 = vunpack.c.l.b16 %v840
    %v894 = vunpack.c.l.b16 %v841
    %v895 = vpack.c.b16 %v872, %v871
    %v896 = vpack.c.b16 %v874, %v873
    %v897 = vpack.c.b16 %v876, %v875
    %v898 = vpack.c.b16 %v878, %v877
    %v899 = vpack.c.b16 %v880, %v879
    %v900 = vpack.c.b16 %v882, %v881
    %v901 = vpack.c.b16 %v884, %v883
    %v902 = vpack.c.b16 %v886, %v885
    %v903 = vpack.c.b16 %v888, %v887
    %v904 = vpack.c.b16 %v890, %v889
    %v905 = vpack.c.b16 %v892, %v891
    %v906 = vpack.c.b16 %v894, %v893
    %v911 = vunpack.c.l.b16 %v843
    %v912 = vunpack.c.h.b16 %v843
    %v913 = vunpack.c.l.b16 %v844
    %v914 = vunpack.c.h.b16 %v844
    %v915 = vunpack.c.l.b16 %v845
    %v916 = vunpack.c.h.b16 %v845
    %v917 = vunpack.c.l.b16 %v846
    %v918 = vunpack.c.h.b16 %v846
    %v919 = vpack.c.b16 %v913, %v911
    %v920 = vpack.c.b16 %v914, %v912
    %v921 = vpack.c.b16 %v917, %v915
    %v922 = vpack.c.b16 %v918, %v916
    %v926 = vsel %vm155, %v895, 0
    %v929 = vsel %vm155, %v896, 0
    %v932 = vsel %vm155, %v897, 0
    %v935 = vsel %vm155, %v898, 0
    %v938 = vsel %vm155, %v899, 0
    %v941 = vsel %vm155, %v900, 0
    %v944 = vsel %vm155, %v901, 0
    %v947 = vsel %vm155, %v902, 0
    %v950 = vsel %vm155, %v903, 0
    %v953 = vsel %vm155, %v904, 0
    %v956 = vsel %vm155, %v905, 0
    %v959 = vsel %vm155, %v906, 0
    %v962 = vsel %vm192, %v921, 0
    %v965 = vsel %vm192, %v922, 0
    %967 = vmatpush.bf16.msra.mxu0 0
    %968 = vmatpush.bf16.msra.mxu0 0
    %969 = vmatpush.bf16.msra.mxu0 0
    %970 = vmatpush.bf16.msra.mxu0 0
    %971 = vmatpush.bf16.msra.mxu0 0
    %972 = vmatpush.bf16.msra.mxu0 0
    %973 = vmatpush.bf16.msra.mxu0 %v962
    %974 = vmatpush.bf16.msra.mxu0 %v919
    %975 = vmatmul.bf16.gmra.mxu0 %v926
    %v976 = vpop.f32.mrf.mxu0
    %v977 = vadd.f32 0.0, %v976
    %v978 = vpop.f32.mrf.mxu0
    %v979 = vadd.f32 0.0, %v978
    %980 = vmatmul.bf16.gmra.mxu0 %v929
    %v981 = vpop.f32.mrf.mxu0
    %v982 = vadd.f32 0.0, %v981
    %v983 = vpop.f32.mrf.mxu0
    %v984 = vadd.f32 0.0, %v983
    %985 = vmatmul.bf16.gmra.mxu0 %v932
    %v986 = vpop.f32.mrf.mxu0
    %v987 = vadd.f32 0.0, %v986
    %v988 = vpop.f32.mrf.mxu0
    %v989 = vadd.f32 0.0, %v988
    %990 = vmatmul.bf16.gmra.mxu0 %v935
    %v991 = vpop.f32.mrf.mxu0
    %v992 = vadd.f32 0.0, %v991
    %v993 = vpop.f32.mrf.mxu0
    %v994 = vadd.f32 0.0, %v993
    %995 = vmatmul.bf16.gmra.mxu0 %v938
    %v996 = vpop.f32.mrf.mxu0
    %v997 = vadd.f32 0.0, %v996
    %v998 = vpop.f32.mrf.mxu0
    %v999 = vadd.f32 0.0, %v998
    %1000 = vmatmul.bf16.gmra.mxu0 %v941
    %v1001 = vpop.f32.mrf.mxu0
    %v1002 = vadd.f32 0.0, %v1001
    %v1003 = vpop.f32.mrf.mxu0
    %v1004 = vadd.f32 0.0, %v1003
    %1005 = vmatmul.bf16.gmra.mxu0 %v944
    %v1006 = vpop.f32.mrf.mxu0
    %v1007 = vadd.f32 0.0, %v1006
    %v1008 = vpop.f32.mrf.mxu0
    %v1009 = vadd.f32 0.0, %v1008
    %1010 = vmatmul.bf16.gmra.mxu0 %v947
    %v1011 = vpop.f32.mrf.mxu0
    %v1012 = vadd.f32 0.0, %v1011
    %v1013 = vpop.f32.mrf.mxu0
    %v1014 = vadd.f32 0.0, %v1013
    %1015 = vmatmul.bf16.gmra.mxu0 %v950
    %v1016 = vpop.f32.mrf.mxu0
    %v1017 = vadd.f32 0.0, %v1016
    %v1018 = vpop.f32.mrf.mxu0
    %v1019 = vadd.f32 0.0, %v1018
    %1020 = vmatmul.bf16.gmra.mxu0 %v953
    %v1021 = vpop.f32.mrf.mxu0
    %v1022 = vadd.f32 0.0, %v1021
    %v1023 = vpop.f32.mrf.mxu0
    %v1024 = vadd.f32 0.0, %v1023
    %1025 = vmatmul.bf16.gmra.mxu0 %v956
    %v1026 = vpop.f32.mrf.mxu0
    %v1027 = vadd.f32 0.0, %v1026
    %v1028 = vpop.f32.mrf.mxu0
    %v1029 = vadd.f32 0.0, %v1028
    %1030 = vmatmul.bf16.gmra.mxu0 %v959
    %v1031 = vpop.f32.mrf.mxu0
    %v1032 = vadd.f32 0.0, %v1031
    %v1033 = vpop.f32.mrf.mxu0
    %v1034 = vadd.f32 0.0, %v1033
    %1035 = vdwg.mxu0
    %1036 = vmatpush.bf16.msra.mxu0 0
    %1037 = vmatpush.bf16.msra.mxu0 0
    %1038 = vmatpush.bf16.msra.mxu0 0
    %1039 = vmatpush.bf16.msra.mxu0 0
    %1040 = vmatpush.bf16.msra.mxu0 0
    %1041 = vmatpush.bf16.msra.mxu0 0
    %1042 = vmatpush.bf16.msra.mxu0 %v965
    %1043 = vmatpush.bf16.msra.mxu0 %v920
    %1044 = vmatmul.bf16.gmra.mxu0 %v926
    %v1045 = vpop.f32.mrf.mxu0
    %v1046 = vadd.f32 0.0, %v1045
    %v1047 = vpop.f32.mrf.mxu0
    %v1048 = vadd.f32 0.0, %v1047
    %1049 = vmatmul.bf16.gmra.mxu0 %v929
    %v1050 = vpop.f32.mrf.mxu0
    %v1051 = vadd.f32 0.0, %v1050
    %v1052 = vpop.f32.mrf.mxu0
    %v1053 = vadd.f32 0.0, %v1052
    %1054 = vmatmul.bf16.gmra.mxu0 %v932
    %v1055 = vpop.f32.mrf.mxu0
    %v1056 = vadd.f32 0.0, %v1055
    %v1057 = vpop.f32.mrf.mxu0
    %v1058 = vadd.f32 0.0, %v1057
    %1059 = vmatmul.bf16.gmra.mxu0 %v935
    %v1060 = vpop.f32.mrf.mxu0
    %v1061 = vadd.f32 0.0, %v1060
    %v1062 = vpop.f32.mrf.mxu0
    %v1063 = vadd.f32 0.0, %v1062
    %1064 = vmatmul.bf16.gmra.mxu0 %v938
    %v1065 = vpop.f32.mrf.mxu0
    %v1066 = vadd.f32 0.0, %v1065
    %v1067 = vpop.f32.mrf.mxu0
    %v1068 = vadd.f32 0.0, %v1067
    %1069 = vmatmul.bf16.gmra.mxu0 %v941
    %v1070 = vpop.f32.mrf.mxu0
    %v1071 = vadd.f32 0.0, %v1070
    %v1072 = vpop.f32.mrf.mxu0
    %v1073 = vadd.f32 0.0, %v1072
    %1074 = vmatmul.bf16.gmra.mxu0 %v944
    %v1075 = vpop.f32.mrf.mxu0
    %v1076 = vadd.f32 0.0, %v1075
    %v1077 = vpop.f32.mrf.mxu0
    %v1078 = vadd.f32 0.0, %v1077
    %1079 = vmatmul.bf16.gmra.mxu0 %v947
    %v1080 = vpop.f32.mrf.mxu0
    %v1081 = vadd.f32 0.0, %v1080
    %v1082 = vpop.f32.mrf.mxu0
    %v1083 = vadd.f32 0.0, %v1082
    %1084 = vmatmul.bf16.gmra.mxu0 %v950
    %v1085 = vpop.f32.mrf.mxu0
    %v1086 = vadd.f32 0.0, %v1085
    %v1087 = vpop.f32.mrf.mxu0
    %v1088 = vadd.f32 0.0, %v1087
    %1089 = vmatmul.bf16.gmra.mxu0 %v953
    %v1090 = vpop.f32.mrf.mxu0
    %v1091 = vadd.f32 0.0, %v1090
    %v1092 = vpop.f32.mrf.mxu0
    %v1093 = vadd.f32 0.0, %v1092
    %1094 = vmatmul.bf16.gmra.mxu0 %v956
    %v1095 = vpop.f32.mrf.mxu0
    %v1096 = vadd.f32 0.0, %v1095
    %v1097 = vpop.f32.mrf.mxu0
    %v1098 = vadd.f32 0.0, %v1097
    %1099 = vmatmul.bf16.gmra.mxu0 %v959
    %v1100 = vpop.f32.mrf.mxu0
    %v1101 = vadd.f32 0.0, %v1100
    %v1102 = vpop.f32.mrf.mxu0
    %v1103 = vadd.f32 0.0, %v1102
    %1104 = vdwg.mxu0
    %v1105 = vld [vmem:[#allocation2] sm:$0xff]
    %v1106 = vld [vmem:[#allocation2 + $0x8] sm:$0xff]
    %v1107 = vld [vmem:[#allocation2 + $0x10] sm:$0xff]
    %v1108 = vld [vmem:[#allocation2 + $0x18] sm:$0xff]
    %v1109 = vld [vmem:[#allocation2 + $0x20] sm:$0xff]
    %v1110 = vld [vmem:[#allocation2 + $0x28] sm:$0xff]
    %v1111 = vld [vmem:[#allocation2 + $0x30] sm:$0xff]
    %v1112 = vld [vmem:[#allocation2 + $0x38] sm:$0xff]
    %v1113 = vld [vmem:[#allocation2 + $0x40] sm:$0xff]
    %v1114 = vld [vmem:[#allocation2 + $0x48] sm:$0xff]
    %v1115 = vld [vmem:[#allocation2 + $0x50] sm:$0xff]
    %v1116 = vld [vmem:[#allocation2 + $0x58] sm:$0xff]
    %v1117 = vld [vmem:[#allocation2 + $0x60] sm:$0xff]
    %v1118 = vld [vmem:[#allocation2 + $0x68] sm:$0xff]
    %v1119 = vld [vmem:[#allocation2 + $0x70] sm:$0xff]
    %v1120 = vld [vmem:[#allocation2 + $0x78] sm:$0xff]
    %v1121 = vld [vmem:[#allocation2 + $0x80] sm:$0xff]
    %v1122 = vld [vmem:[#allocation2 + $0x88] sm:$0xff]
    %v1123 = vld [vmem:[#allocation2 + $0x90] sm:$0xff]
    %v1124 = vld [vmem:[#allocation2 + $0x98] sm:$0xff]
    %v1125 = vld [vmem:[#allocation2 + $0xa0] sm:$0xff]
    %v1126 = vld [vmem:[#allocation2 + $0xa8] sm:$0xff]
    %v1127 = vld [vmem:[#allocation2 + $0xb0] sm:$0xff]
    %v1128 = vld [vmem:[#allocation2 + $0xb8] sm:$0xff]
    %v1129 = vld [vmem:[#allocation2 + $0xc0] sm:$0xff]
    %v1130 = vld [vmem:[#allocation2 + $0xc8] sm:$0xff]
    %v1131 = vld [vmem:[#allocation2 + $0xd0] sm:$0xff]
    %v1132 = vld [vmem:[#allocation2 + $0xd8] sm:$0xff]
    %v1133 = vld [vmem:[#allocation2 + $0xe0] sm:$0xff]
    %v1134 = vld [vmem:[#allocation2 + $0xe8] sm:$0xff]
    %v1135 = vld [vmem:[#allocation2 + $0xf0] sm:$0xff]
    %v1136 = vld [vmem:[#allocation2 + $0xf8] sm:$0xff]
    %v1137 = vld [vmem:[#allocation2 + $0x100] sm:$0xff]
    %v1138 = vld [vmem:[#allocation2 + $0x108] sm:$0xff]
    %v1139 = vld [vmem:[#allocation2 + $0x110] sm:$0xff]
    %v1140 = vld [vmem:[#allocation2 + $0x118] sm:$0xff]
    %v1141 = vld [vmem:[#allocation2 + $0x120] sm:$0xff]
    %v1142 = vld [vmem:[#allocation2 + $0x128] sm:$0xff]
    %v1143 = vld [vmem:[#allocation2 + $0x130] sm:$0xff]
    %v1144 = vld [vmem:[#allocation2 + $0x138] sm:$0xff]
    %v1145 = vld [vmem:[#allocation2 + $0x140] sm:$0xff]
    %v1146 = vld [vmem:[#allocation2 + $0x148] sm:$0xff]
    %v1147 = vld [vmem:[#allocation2 + $0x150] sm:$0xff]
    %v1148 = vld [vmem:[#allocation2 + $0x158] sm:$0xff]
    %v1149 = vld [vmem:[#allocation2 + $0x160] sm:$0xff]
    %v1150 = vld [vmem:[#allocation2 + $0x168] sm:$0xff]
    %v1151 = vld [vmem:[#allocation2 + $0x170] sm:$0xff]
    %v1152 = vld [vmem:[#allocation2 + $0x178] sm:$0xff]
    %v1153 = vadd.f32 %v1105, %v977
    %v1154 = vadd.f32 %v1106, %v1046
    %v1155 = vadd.f32 %v1107, %v979
    %v1156 = vadd.f32 %v1108, %v1048
    %v1157 = vadd.f32 %v1109, %v982
    %v1158 = vadd.f32 %v1110, %v1051
    %v1159 = vadd.f32 %v1111, %v984
    %v1160 = vadd.f32 %v1112, %v1053
    %v1161 = vadd.f32 %v1113, %v987
    %v1162 = vadd.f32 %v1114, %v1056
    %v1163 = vadd.f32 %v1115, %v989
    %v1164 = vadd.f32 %v1116, %v1058
    %v1165 = vadd.f32 %v1117, %v992
    %v1166 = vadd.f32 %v1118, %v1061
    %v1167 = vadd.f32 %v1119, %v994
    %v1168 = vadd.f32 %v1120, %v1063
    %v1169 = vadd.f32 %v1121, %v997
    %v1170 = vadd.f32 %v1122, %v1066
    %v1171 = vadd.f32 %v1123, %v999
    %v1172 = vadd.f32 %v1124, %v1068
    %v1173 = vadd.f32 %v1125, %v1002
    %v1174 = vadd.f32 %v1126, %v1071
    %v1175 = vadd.f32 %v1127, %v1004
    %v1176 = vadd.f32 %v1128, %v1073
    %v1177 = vadd.f32 %v1129, %v1007
    %v1178 = vadd.f32 %v1130, %v1076
    %v1179 = vadd.f32 %v1131, %v1009
    %v1180 = vadd.f32 %v1132, %v1078
    %v1181 = vadd.f32 %v1133, %v1012
    %v1182 = vadd.f32 %v1134, %v1081
    %v1183 = vadd.f32 %v1135, %v1014
    %v1184 = vadd.f32 %v1136, %v1083
    %v1185 = vadd.f32 %v1137, %v1017
    %v1186 = vadd.f32 %v1138, %v1086
    %v1187 = vadd.f32 %v1139, %v1019
    %v1188 = vadd.f32 %v1140, %v1088
    %v1189 = vadd.f32 %v1141, %v1022
    %v1190 = vadd.f32 %v1142, %v1091
    %v1191 = vadd.f32 %v1143, %v1024
    %v1192 = vadd.f32 %v1144, %v1093
    %v1193 = vadd.f32 %v1145, %v1027
    %v1194 = vadd.f32 %v1146, %v1096
    %v1195 = vadd.f32 %v1147, %v1029
    %v1196 = vadd.f32 %v1148, %v1098
    %v1197 = vadd.f32 %v1149, %v1032
    %v1198 = vadd.f32 %v1150, %v1101
    %v1199 = vadd.f32 %v1151, %v1034
    %v1200 = vadd.f32 %v1152, %v1103
    %1201 = vst [vmem:[#allocation2] sm:$0xff] %v1153
    %1202 = vst [vmem:[#allocation2 + $0x8] sm:$0xff] %v1154
    %1203 = vst [vmem:[#allocation2 + $0x10] sm:$0xff] %v1155
    %1204 = vst [vmem:[#allocation2 + $0x18] sm:$0xff] %v1156
    %1205 = vst [vmem:[#allocation2 + $0x20] sm:$0xff] %v1157
    %1206 = vst [vmem:[#allocation2 + $0x28] sm:$0xff] %v1158
    %1207 = vst [vmem:[#allocation2 + $0x30] sm:$0xff] %v1159
    %1208 = vst [vmem:[#allocation2 + $0x38] sm:$0xff] %v1160
    %1209 = vst [vmem:[#allocation2 + $0x40] sm:$0xff] %v1161
    %1210 = vst [vmem:[#allocation2 + $0x48] sm:$0xff] %v1162
    %1211 = vst [vmem:[#allocation2 + $0x50] sm:$0xff] %v1163
    %1212 = vst [vmem:[#allocation2 + $0x58] sm:$0xff] %v1164
    %1213 = vst [vmem:[#allocation2 + $0x60] sm:$0xff] %v1165
    %1214 = vst [vmem:[#allocation2 + $0x68] sm:$0xff] %v1166
    %1215 = vst [vmem:[#allocation2 + $0x70] sm:$0xff] %v1167
    %1216 = vst [vmem:[#allocation2 + $0x78] sm:$0xff] %v1168
    %1217 = vst [vmem:[#allocation2 + $0x80] sm:$0xff] %v1169
    %1218 = vst [vmem:[#allocation2 + $0x88] sm:$0xff] %v1170
    %1219 = vst [vmem:[#allocation2 + $0x90] sm:$0xff] %v1171
    %1220 = vst [vmem:[#allocation2 + $0x98] sm:$0xff] %v1172
    %1221 = vst [vmem:[#allocation2 + $0xa0] sm:$0xff] %v1173
    %1222 = vst [vmem:[#allocation2 + $0xa8] sm:$0xff] %v1174
    %1223 = vst [vmem:[#allocation2 + $0xb0] sm:$0xff] %v1175
    %1224 = vst [vmem:[#allocation2 + $0xb8] sm:$0xff] %v1176
    %1225 = vst [vmem:[#allocation2 + $0xc0] sm:$0xff] %v1177
    %1226 = vst [vmem:[#allocation2 + $0xc8] sm:$0xff] %v1178
    %1227 = vst [vmem:[#allocation2 + $0xd0] sm:$0xff] %v1179
    %1228 = vst [vmem:[#allocation2 + $0xd8] sm:$0xff] %v1180
    %1229 = vst [vmem:[#allocation2 + $0xe0] sm:$0xff] %v1181
    %1230 = vst [vmem:[#allocation2 + $0xe8] sm:$0xff] %v1182
    %1231 = vst [vmem:[#allocation2 + $0xf0] sm:$0xff] %v1183
    %1232 = vst [vmem:[#allocation2 + $0xf8] sm:$0xff] %v1184
    %1233 = vst [vmem:[#allocation2 + $0x100] sm:$0xff] %v1185
    %1234 = vst [vmem:[#allocation2 + $0x108] sm:$0xff] %v1186
    %1235 = vst [vmem:[#allocation2 + $0x110] sm:$0xff] %v1187
    %1236 = vst [vmem:[#allocation2 + $0x118] sm:$0xff] %v1188
    %1237 = vst [vmem:[#allocation2 + $0x120] sm:$0xff] %v1189
    %1238 = vst [vmem:[#allocation2 + $0x128] sm:$0xff] %v1190
    %1239 = vst [vmem:[#allocation2 + $0x130] sm:$0xff] %v1191
    %1240 = vst [vmem:[#allocation2 + $0x138] sm:$0xff] %v1192
    %1241 = vst [vmem:[#allocation2 + $0x140] sm:$0xff] %v1193
    %1242 = vst [vmem:[#allocation2 + $0x148] sm:$0xff] %v1194
    %1243 = vst [vmem:[#allocation2 + $0x150] sm:$0xff] %v1195
    %1244 = vst [vmem:[#allocation2 + $0x158] sm:$0xff] %v1196
    %1245 = vst [vmem:[#allocation2 + $0x160] sm:$0xff] %v1197
    %1246 = vst [vmem:[#allocation2 + $0x168] sm:$0xff] %v1198
    %1247 = vst [vmem:[#allocation2 + $0x170] sm:$0xff] %v1199
    %1248 = vst [vmem:[#allocation2 + $0x178] sm:$0xff] %v1200
    %s1249 = scalar_lea.vmem %s0, 12
    %v1250 = vld [vmem:[%s1249] sm:$0xf]
    %v1251 = vld [vmem:[%s1249 + $0x4] sm:$0xf]
    %v1252 = vld [vmem:[%s1249 + $0x8] sm:$0xf]
    %v1253 = vld [vmem:[%s1249 + $0xc] sm:$0xf]
    %v1254 = vld [vmem:[%s1249 + $0x10] sm:$0xf]
    %v1255 = vld [vmem:[%s1249 + $0x14] sm:$0xf]
    %v1256 = vld [vmem:[%s1249 + $0x18] sm:$0xf]
    %v1257 = vld [vmem:[%s1249 + $0x1c] sm:$0xf]
    %v1258 = vld [vmem:[%s1249 + $0x20] sm:$0xf]
    %v1259 = vld [vmem:[%s1249 + $0x24] sm:$0xf]
    %v1260 = vld [vmem:[%s1249 + $0x28] sm:$0xf]
    %v1261 = vld [vmem:[%s1249 + $0x2c] sm:$0xf]
    %v1262 = vld [vmem:[%s1249 + $0x30] sm:$0xf]
    %v1263 = vld [vmem:[%s1249 + $0x34] sm:$0xf]
    %v1264 = vld [vmem:[%s1249 + $0x38] sm:$0xf]
    %v1265 = vld [vmem:[%s1249 + $0x3c] sm:$0xf]
    %v1266 = vld [vmem:[%s1249 + $0x40] sm:$0xf]
    %v1267 = vld [vmem:[%s1249 + $0x44] sm:$0xf]
    %v1268 = vld [vmem:[%s1249 + $0x48] sm:$0xf]
    %v1269 = vld [vmem:[%s1249 + $0x4c] sm:$0xf]
    %v1270 = vld [vmem:[%s1249 + $0x50] sm:$0xf]
    %v1271 = vld [vmem:[%s1249 + $0x54] sm:$0xf]
    %v1272 = vld [vmem:[%s1249 + $0x58] sm:$0xf]
    %v1273 = vld [vmem:[%s1249 + $0x5c] sm:$0xf]
    %s1274 = scalar_lea.vmem %s1, 96
    %v1275 = vld [vmem:[%s1274] sm:$0xff]
    %v1276 = vld [vmem:[%s1274 + $0x8] sm:$0xff]
    %v1277 = vld [vmem:[%s1274 + $0x10] sm:$0xff]
    %v1278 = vld [vmem:[%s1274 + $0x18] sm:$0x33]
    %v1303 = vunpack.c.l.b16 %v1250
    %v1304 = vunpack.c.l.b16 %v1251
    %v1305 = vunpack.c.l.b16 %v1252
    %v1306 = vunpack.c.l.b16 %v1253
    %v1307 = vunpack.c.l.b16 %v1254
    %v1308 = vunpack.c.l.b16 %v1255
    %v1309 = vunpack.c.l.b16 %v1256
    %v1310 = vunpack.c.l.b16 %v1257
    %v1311 = vunpack.c.l.b16 %v1258
    %v1312 = vunpack.c.l.b16 %v1259
    %v1313 = vunpack.c.l.b16 %v1260
    %v1314 = vunpack.c.l.b16 %v1261
    %v1315 = vunpack.c.l.b16 %v1262
    %v1316 = vunpack.c.l.b16 %v1263
    %v1317 = vunpack.c.l.b16 %v1264
    %v1318 = vunpack.c.l.b16 %v1265
    %v1319 = vunpack.c.l.b16 %v1266
    %v1320 = vunpack.c.l.b16 %v1267
    %v1321 = vunpack.c.l.b16 %v1268
    %v1322 = vunpack.c.l.b16 %v1269
    %v1323 = vunpack.c.l.b16 %v1270
    %v1324 = vunpack.c.l.b16 %v1271
    %v1325 = vunpack.c.l.b16 %v1272
    %v1326 = vunpack.c.l.b16 %v1273
    %v1327 = vpack.c.b16 %v1304, %v1303
    %v1328 = vpack.c.b16 %v1306, %v1305
    %v1329 = vpack.c.b16 %v1308, %v1307
    %v1330 = vpack.c.b16 %v1310, %v1309
    %v1331 = vpack.c.b16 %v1312, %v1311
    %v1332 = vpack.c.b16 %v1314, %v1313
    %v1333 = vpack.c.b16 %v1316, %v1315
    %v1334 = vpack.c.b16 %v1318, %v1317
    %v1335 = vpack.c.b16 %v1320, %v1319
    %v1336 = vpack.c.b16 %v1322, %v1321
    %v1337 = vpack.c.b16 %v1324, %v1323
    %v1338 = vpack.c.b16 %v1326, %v1325
    %v1343 = vunpack.c.l.b16 %v1275
    %v1344 = vunpack.c.h.b16 %v1275
    %v1345 = vunpack.c.l.b16 %v1276
    %v1346 = vunpack.c.h.b16 %v1276
    %v1347 = vunpack.c.l.b16 %v1277
    %v1348 = vunpack.c.h.b16 %v1277
    %v1349 = vunpack.c.l.b16 %v1278
    %v1350 = vunpack.c.h.b16 %v1278
    %v1351 = vpack.c.b16 %v1345, %v1343
    %v1352 = vpack.c.b16 %v1346, %v1344
    %v1353 = vpack.c.b16 %v1349, %v1347
    %v1354 = vpack.c.b16 %v1350, %v1348
    %v1358 = vsel %vm155, %v1327, 0
    %v1361 = vsel %vm155, %v1328, 0
    %v1364 = vsel %vm155, %v1329, 0
    %v1367 = vsel %vm155, %v1330, 0
    %v1370 = vsel %vm155, %v1331, 0
    %v1373 = vsel %vm155, %v1332, 0
    %v1376 = vsel %vm155, %v1333, 0
    %v1379 = vsel %vm155, %v1334, 0
    %v1382 = vsel %vm155, %v1335, 0
    %v1385 = vsel %vm155, %v1336, 0
    %v1388 = vsel %vm155, %v1337, 0
    %v1391 = vsel %vm155, %v1338, 0
    %v1394 = vsel %vm192, %v1353, 0
    %v1397 = vsel %vm192, %v1354, 0
    %1399 = vmatpush.bf16.msra.mxu0 0
    %1400 = vmatpush.bf16.msra.mxu0 0
    %1401 = vmatpush.bf16.msra.mxu0 0
    %1402 = vmatpush.bf16.msra.mxu0 0
    %1403 = vmatpush.bf16.msra.mxu0 0
    %1404 = vmatpush.bf16.msra.mxu0 0
    %1405 = vmatpush.bf16.msra.mxu0 %v1394
    %1406 = vmatpush.bf16.msra.mxu0 %v1351
    %1407 = vmatmul.bf16.gmra.mxu0 %v1358
    %v1408 = vpop.f32.mrf.mxu0
    %v1409 = vadd.f32 0.0, %v1408
    %v1410 = vpop.f32.mrf.mxu0
    %v1411 = vadd.f32 0.0, %v1410
    %1412 = vmatmul.bf16.gmra.mxu0 %v1361
    %v1413 = vpop.f32.mrf.mxu0
    %v1414 = vadd.f32 0.0, %v1413
    %v1415 = vpop.f32.mrf.mxu0
    %v1416 = vadd.f32 0.0, %v1415
    %1417 = vmatmul.bf16.gmra.mxu0 %v1364
    %v1418 = vpop.f32.mrf.mxu0
    %v1419 = vadd.f32 0.0, %v1418
    %v1420 = vpop.f32.mrf.mxu0
    %v1421 = vadd.f32 0.0, %v1420
    %1422 = vmatmul.bf16.gmra.mxu0 %v1367
    %v1423 = vpop.f32.mrf.mxu0
    %v1424 = vadd.f32 0.0, %v1423
    %v1425 = vpop.f32.mrf.mxu0
    %v1426 = vadd.f32 0.0, %v1425
    %1427 = vmatmul.bf16.gmra.mxu0 %v1370
    %v1428 = vpop.f32.mrf.mxu0
    %v1429 = vadd.f32 0.0, %v1428
    %v1430 = vpop.f32.mrf.mxu0
    %v1431 = vadd.f32 0.0, %v1430
    %1432 = vmatmul.bf16.gmra.mxu0 %v1373
    %v1433 = vpop.f32.mrf.mxu0
    %v1434 = vadd.f32 0.0, %v1433
    %v1435 = vpop.f32.mrf.mxu0
    %v1436 = vadd.f32 0.0, %v1435
    %1437 = vmatmul.bf16.gmra.mxu0 %v1376
    %v1438 = vpop.f32.mrf.mxu0
    %v1439 = vadd.f32 0.0, %v1438
    %v1440 = vpop.f32.mrf.mxu0
    %v1441 = vadd.f32 0.0, %v1440
    %1442 = vmatmul.bf16.gmra.mxu0 %v1379
    %v1443 = vpop.f32.mrf.mxu0
    %v1444 = vadd.f32 0.0, %v1443
    %v1445 = vpop.f32.mrf.mxu0
    %v1446 = vadd.f32 0.0, %v1445
    %1447 = vmatmul.bf16.gmra.mxu0 %v1382
    %v1448 = vpop.f32.mrf.mxu0
    %v1449 = vadd.f32 0.0, %v1448
    %v1450 = vpop.f32.mrf.mxu0
    %v1451 = vadd.f32 0.0, %v1450
    %1452 = vmatmul.bf16.gmra.mxu0 %v1385
    %v1453 = vpop.f32.mrf.mxu0
    %v1454 = vadd.f32 0.0, %v1453
    %v1455 = vpop.f32.mrf.mxu0
    %v1456 = vadd.f32 0.0, %v1455
    %1457 = vmatmul.bf16.gmra.mxu0 %v1388
    %v1458 = vpop.f32.mrf.mxu0
    %v1459 = vadd.f32 0.0, %v1458
    %v1460 = vpop.f32.mrf.mxu0
    %v1461 = vadd.f32 0.0, %v1460
    %1462 = vmatmul.bf16.gmra.mxu0 %v1391
    %v1463 = vpop.f32.mrf.mxu0
    %v1464 = vadd.f32 0.0, %v1463
    %v1465 = vpop.f32.mrf.mxu0
    %v1466 = vadd.f32 0.0, %v1465
    %1467 = vdwg.mxu0
    %1468 = vmatpush.bf16.msra.mxu0 0
    %1469 = vmatpush.bf16.msra.mxu0 0
    %1470 = vmatpush.bf16.msra.mxu0 0
    %1471 = vmatpush.bf16.msra.mxu0 0
    %1472 = vmatpush.bf16.msra.mxu0 0
    %1473 = vmatpush.bf16.msra.mxu0 0
    %1474 = vmatpush.bf16.msra.mxu0 %v1397
    %1475 = vmatpush.bf16.msra.mxu0 %v1352
    %1476 = vmatmul.bf16.gmra.mxu0 %v1358
    %v1477 = vpop.f32.mrf.mxu0
    %v1478 = vadd.f32 0.0, %v1477
    %v1479 = vpop.f32.mrf.mxu0
    %v1480 = vadd.f32 0.0, %v1479
    %1481 = vmatmul.bf16.gmra.mxu0 %v1361
    %v1482 = vpop.f32.mrf.mxu0
    %v1483 = vadd.f32 0.0, %v1482
    %v1484 = vpop.f32.mrf.mxu0
    %v1485 = vadd.f32 0.0, %v1484
    %1486 = vmatmul.bf16.gmra.mxu0 %v1364
    %v1487 = vpop.f32.mrf.mxu0
    %v1488 = vadd.f32 0.0, %v1487
    %v1489 = vpop.f32.mrf.mxu0
    %v1490 = vadd.f32 0.0, %v1489
    %1491 = vmatmul.bf16.gmra.mxu0 %v1367
    %v1492 = vpop.f32.mrf.mxu0
    %v1493 = vadd.f32 0.0, %v1492
    %v1494 = vpop.f32.mrf.mxu0
    %v1495 = vadd.f32 0.0, %v1494
    %1496 = vmatmul.bf16.gmra.mxu0 %v1370
    %v1497 = vpop.f32.mrf.mxu0
    %v1498 = vadd.f32 0.0, %v1497
    %v1499 = vpop.f32.mrf.mxu0
    %v1500 = vadd.f32 0.0, %v1499
    %1501 = vmatmul.bf16.gmra.mxu0 %v1373
    %v1502 = vpop.f32.mrf.mxu0
    %v1503 = vadd.f32 0.0, %v1502
    %v1504 = vpop.f32.mrf.mxu0
    %v1505 = vadd.f32 0.0, %v1504
    %1506 = vmatmul.bf16.gmra.mxu0 %v1376
    %v1507 = vpop.f32.mrf.mxu0
    %v1508 = vadd.f32 0.0, %v1507
    %v1509 = vpop.f32.mrf.mxu0
    %v1510 = vadd.f32 0.0, %v1509
    %1511 = vmatmul.bf16.gmra.mxu0 %v1379
    %v1512 = vpop.f32.mrf.mxu0
    %v1513 = vadd.f32 0.0, %v1512
    %v1514 = vpop.f32.mrf.mxu0
    %v1515 = vadd.f32 0.0, %v1514
    %1516 = vmatmul.bf16.gmra.mxu0 %v1382
    %v1517 = vpop.f32.mrf.mxu0
    %v1518 = vadd.f32 0.0, %v1517
    %v1519 = vpop.f32.mrf.mxu0
    %v1520 = vadd.f32 0.0, %v1519
    %1521 = vmatmul.bf16.gmra.mxu0 %v1385
    %v1522 = vpop.f32.mrf.mxu0
    %v1523 = vadd.f32 0.0, %v1522
    %v1524 = vpop.f32.mrf.mxu0
    %v1525 = vadd.f32 0.0, %v1524
    %1526 = vmatmul.bf16.gmra.mxu0 %v1388
    %v1527 = vpop.f32.mrf.mxu0
    %v1528 = vadd.f32 0.0, %v1527
    %v1529 = vpop.f32.mrf.mxu0
    %v1530 = vadd.f32 0.0, %v1529
    %1531 = vmatmul.bf16.gmra.mxu0 %v1391
    %v1532 = vpop.f32.mrf.mxu0
    %v1533 = vadd.f32 0.0, %v1532
    %v1534 = vpop.f32.mrf.mxu0
    %v1535 = vadd.f32 0.0, %v1534
    %1536 = vdwg.mxu0
    %v1537 = vld [vmem:[#allocation2] sm:$0xff]
    %v1538 = vld [vmem:[#allocation2 + $0x8] sm:$0xff]
    %v1539 = vld [vmem:[#allocation2 + $0x10] sm:$0xff]
    %v1540 = vld [vmem:[#allocation2 + $0x18] sm:$0xff]
    %v1541 = vld [vmem:[#allocation2 + $0x20] sm:$0xff]
    %v1542 = vld [vmem:[#allocation2 + $0x28] sm:$0xff]
    %v1543 = vld [vmem:[#allocation2 + $0x30] sm:$0xff]
    %v1544 = vld [vmem:[#allocation2 + $0x38] sm:$0xff]
    %v1545 = vld [vmem:[#allocation2 + $0x40] sm:$0xff]
    %v1546 = vld [vmem:[#allocation2 + $0x48] sm:$0xff]
    %v1547 = vld [vmem:[#allocation2 + $0x50] sm:$0xff]
    %v1548 = vld [vmem:[#allocation2 + $0x58] sm:$0xff]
    %v1549 = vld [vmem:[#allocation2 + $0x60] sm:$0xff]
    %v1550 = vld [vmem:[#allocation2 + $0x68] sm:$0xff]
    %v1551 = vld [vmem:[#allocation2 + $0x70] sm:$0xff]
    %v1552 = vld [vmem:[#allocation2 + $0x78] sm:$0xff]
    %v1553 = vld [vmem:[#allocation2 + $0x80] sm:$0xff]
    %v1554 = vld [vmem:[#allocation2 + $0x88] sm:$0xff]
    %v1555 = vld [vmem:[#allocation2 + $0x90] sm:$0xff]
    %v1556 = vld [vmem:[#allocation2 + $0x98] sm:$0xff]
    %v1557 = vld [vmem:[#allocation2 + $0xa0] sm:$0xff]
    %v1558 = vld [vmem:[#allocation2 + $0xa8] sm:$0xff]
    %v1559 = vld [vmem:[#allocation2 + $0xb0] sm:$0xff]
    %v1560 = vld [vmem:[#allocation2 + $0xb8] sm:$0xff]
    %v1561 = vld [vmem:[#allocation2 + $0xc0] sm:$0xff]
    %v1562 = vld [vmem:[#allocation2 + $0xc8] sm:$0xff]
    %v1563 = vld [vmem:[#allocation2 + $0xd0] sm:$0xff]
    %v1564 = vld [vmem:[#allocation2 + $0xd8] sm:$0xff]
    %v1565 = vld [vmem:[#allocation2 + $0xe0] sm:$0xff]
    %v1566 = vld [vmem:[#allocation2 + $0xe8] sm:$0xff]
    %v1567 = vld [vmem:[#allocation2 + $0xf0] sm:$0xff]
    %v1568 = vld [vmem:[#allocation2 + $0xf8] sm:$0xff]
    %v1569 = vld [vmem:[#allocation2 + $0x100] sm:$0xff]
    %v1570 = vld [vmem:[#allocation2 + $0x108] sm:$0xff]
    %v1571 = vld [vmem:[#allocation2 + $0x110] sm:$0xff]
    %v1572 = vld [vmem:[#allocation2 + $0x118] sm:$0xff]
    %v1573 = vld [vmem:[#allocation2 + $0x120] sm:$0xff]
    %v1574 = vld [vmem:[#allocation2 + $0x128] sm:$0xff]
    %v1575 = vld [vmem:[#allocation2 + $0x130] sm:$0xff]
    %v1576 = vld [vmem:[#allocation2 + $0x138] sm:$0xff]
    %v1577 = vld [vmem:[#allocation2 + $0x140] sm:$0xff]
    %v1578 = vld [vmem:[#allocation2 + $0x148] sm:$0xff]
    %v1579 = vld [vmem:[#allocation2 + $0x150] sm:$0xff]
    %v1580 = vld [vmem:[#allocation2 + $0x158] sm:$0xff]
    %v1581 = vld [vmem:[#allocation2 + $0x160] sm:$0xff]
    %v1582 = vld [vmem:[#allocation2 + $0x168] sm:$0xff]
    %v1583 = vld [vmem:[#allocation2 + $0x170] sm:$0xff]
    %v1584 = vld [vmem:[#allocation2 + $0x178] sm:$0xff]
    %v1585 = vadd.f32 %v1537, %v1409
    %v1586 = vadd.f32 %v1538, %v1478
    %v1587 = vadd.f32 %v1539, %v1411
    %v1588 = vadd.f32 %v1540, %v1480
    %v1589 = vadd.f32 %v1541, %v1414
    %v1590 = vadd.f32 %v1542, %v1483
    %v1591 = vadd.f32 %v1543, %v1416
    %v1592 = vadd.f32 %v1544, %v1485
    %v1593 = vadd.f32 %v1545, %v1419
    %v1594 = vadd.f32 %v1546, %v1488
    %v1595 = vadd.f32 %v1547, %v1421
    %v1596 = vadd.f32 %v1548, %v1490
    %v1597 = vadd.f32 %v1549, %v1424
    %v1598 = vadd.f32 %v1550, %v1493
    %v1599 = vadd.f32 %v1551, %v1426
    %v1600 = vadd.f32 %v1552, %v1495
    %v1601 = vadd.f32 %v1553, %v1429
    %v1602 = vadd.f32 %v1554, %v1498
    %v1603 = vadd.f32 %v1555, %v1431
    %v1604 = vadd.f32 %v1556, %v1500
    %v1605 = vadd.f32 %v1557, %v1434
    %v1606 = vadd.f32 %v1558, %v1503
    %v1607 = vadd.f32 %v1559, %v1436
    %v1608 = vadd.f32 %v1560, %v1505
    %v1609 = vadd.f32 %v1561, %v1439
    %v1610 = vadd.f32 %v1562, %v1508
    %v1611 = vadd.f32 %v1563, %v1441
    %v1612 = vadd.f32 %v1564, %v1510
    %v1613 = vadd.f32 %v1565, %v1444
    %v1614 = vadd.f32 %v1566, %v1513
    %v1615 = vadd.f32 %v1567, %v1446
    %v1616 = vadd.f32 %v1568, %v1515
    %v1617 = vadd.f32 %v1569, %v1449
    %v1618 = vadd.f32 %v1570, %v1518
    %v1619 = vadd.f32 %v1571, %v1451
    %v1620 = vadd.f32 %v1572, %v1520
    %v1621 = vadd.f32 %v1573, %v1454
    %v1622 = vadd.f32 %v1574, %v1523
    %v1623 = vadd.f32 %v1575, %v1456
    %v1624 = vadd.f32 %v1576, %v1525
    %v1625 = vadd.f32 %v1577, %v1459
    %v1626 = vadd.f32 %v1578, %v1528
    %v1627 = vadd.f32 %v1579, %v1461
    %v1628 = vadd.f32 %v1580, %v1530
    %v1629 = vadd.f32 %v1581, %v1464
    %v1630 = vadd.f32 %v1582, %v1533
    %v1631 = vadd.f32 %v1583, %v1466
    %v1632 = vadd.f32 %v1584, %v1535
    %1633 = vst [vmem:[#allocation2] sm:$0xff] %v1585
    %1634 = vst [vmem:[#allocation2 + $0x8] sm:$0xff] %v1586
    %1635 = vst [vmem:[#allocation2 + $0x10] sm:$0xff] %v1587
    %1636 = vst [vmem:[#allocation2 + $0x18] sm:$0xff] %v1588
    %1637 = vst [vmem:[#allocation2 + $0x20] sm:$0xff] %v1589
    %1638 = vst [vmem:[#allocation2 + $0x28] sm:$0xff] %v1590
    %1639 = vst [vmem:[#allocation2 + $0x30] sm:$0xff] %v1591
    %1640 = vst [vmem:[#allocation2 + $0x38] sm:$0xff] %v1592
    %1641 = vst [vmem:[#allocation2 + $0x40] sm:$0xff] %v1593
    %1642 = vst [vmem:[#allocation2 + $0x48] sm:$0xff] %v1594
    %1643 = vst [vmem:[#allocation2 + $0x50] sm:$0xff] %v1595
    %1644 = vst [vmem:[#allocation2 + $0x58] sm:$0xff] %v1596
    %1645 = vst [vmem:[#allocation2 + $0x60] sm:$0xff] %v1597
    %1646 = vst [vmem:[#allocation2 + $0x68] sm:$0xff] %v1598
    %1647 = vst [vmem:[#allocation2 + $0x70] sm:$0xff] %v1599
    %1648 = vst [vmem:[#allocation2 + $0x78] sm:$0xff] %v1600
    %1649 = vst [vmem:[#allocation2 + $0x80] sm:$0xff] %v1601
    %1650 = vst [vmem:[#allocation2 + $0x88] sm:$0xff] %v1602
    %1651 = vst [vmem:[#allocation2 + $0x90] sm:$0xff] %v1603
    %1652 = vst [vmem:[#allocation2 + $0x98] sm:$0xff] %v1604
    %1653 = vst [vmem:[#allocation2 + $0xa0] sm:$0xff] %v1605
    %1654 = vst [vmem:[#allocation2 + $0xa8] sm:$0xff] %v1606
    %1655 = vst [vmem:[#allocation2 + $0xb0] sm:$0xff] %v1607
    %1656 = vst [vmem:[#allocation2 + $0xb8] sm:$0xff] %v1608
    %1657 = vst [vmem:[#allocation2 + $0xc0] sm:$0xff] %v1609
    %1658 = vst [vmem:[#allocation2 + $0xc8] sm:$0xff] %v1610
    %1659 = vst [vmem:[#allocation2 + $0xd0] sm:$0xff] %v1611
    %1660 = vst [vmem:[#allocation2 + $0xd8] sm:$0xff] %v1612
    %1661 = vst [vmem:[#allocation2 + $0xe0] sm:$0xff] %v1613
    %1662 = vst [vmem:[#allocation2 + $0xe8] sm:$0xff] %v1614
    %1663 = vst [vmem:[#allocation2 + $0xf0] sm:$0xff] %v1615
    %1664 = vst [vmem:[#allocation2 + $0xf8] sm:$0xff] %v1616
    %1665 = vst [vmem:[#allocation2 + $0x100] sm:$0xff] %v1617
    %1666 = vst [vmem:[#allocation2 + $0x108] sm:$0xff] %v1618
    %1667 = vst [vmem:[#allocation2 + $0x110] sm:$0xff] %v1619
    %1668 = vst [vmem:[#allocation2 + $0x118] sm:$0xff] %v1620
    %1669 = vst [vmem:[#allocation2 + $0x120] sm:$0xff] %v1621
    %1670 = vst [vmem:[#allocation2 + $0x128] sm:$0xff] %v1622
    %1671 = vst [vmem:[#allocation2 + $0x130] sm:$0xff] %v1623
    %1672 = vst [vmem:[#allocation2 + $0x138] sm:$0xff] %v1624
    %1673 = vst [vmem:[#allocation2 + $0x140] sm:$0xff] %v1625
    %1674 = vst [vmem:[#allocation2 + $0x148] sm:$0xff] %v1626
    %1675 = vst [vmem:[#allocation2 + $0x150] sm:$0xff] %v1627
    %1676 = vst [vmem:[#allocation2 + $0x158] sm:$0xff] %v1628
    %1677 = vst [vmem:[#allocation2 + $0x160] sm:$0xff] %v1629
    %1678 = vst [vmem:[#allocation2 + $0x168] sm:$0xff] %v1630
    %1679 = vst [vmem:[#allocation2 + $0x170] sm:$0xff] %v1631
    %1680 = vst [vmem:[#allocation2 + $0x178] sm:$0xff] %v1632
    %s1681 = scalar_lea.vmem %s0, 16
    %v1682 = vld [vmem:[%s1681] sm:$0xf]
    %v1683 = vld [vmem:[%s1681 + $0x4] sm:$0xf]
    %v1684 = vld [vmem:[%s1681 + $0x8] sm:$0xf]
    %v1685 = vld [vmem:[%s1681 + $0xc] sm:$0xf]
    %v1686 = vld [vmem:[%s1681 + $0x10] sm:$0xf]
    %v1687 = vld [vmem:[%s1681 + $0x14] sm:$0xf]
    %v1688 = vld [vmem:[%s1681 + $0x18] sm:$0xf]
    %v1689 = vld [vmem:[%s1681 + $0x1c] sm:$0xf]
    %v1690 = vld [vmem:[%s1681 + $0x20] sm:$0xf]
    %v1691 = vld [vmem:[%s1681 + $0x24] sm:$0xf]
    %v1692 = vld [vmem:[%s1681 + $0x28] sm:$0xf]
    %v1693 = vld [vmem:[%s1681 + $0x2c] sm:$0xf]
    %v1694 = vld [vmem:[%s1681 + $0x30] sm:$0xf]
    %v1695 = vld [vmem:[%s1681 + $0x34] sm:$0xf]
    %v1696 = vld [vmem:[%s1681 + $0x38] sm:$0xf]
    %v1697 = vld [vmem:[%s1681 + $0x3c] sm:$0xf]
    %v1698 = vld [vmem:[%s1681 + $0x40] sm:$0xf]
    %v1699 = vld [vmem:[%s1681 + $0x44] sm:$0xf]
    %v1700 = vld [vmem:[%s1681 + $0x48] sm:$0xf]
    %v1701 = vld [vmem:[%s1681 + $0x4c] sm:$0xf]
    %v1702 = vld [vmem:[%s1681 + $0x50] sm:$0xf]
    %v1703 = vld [vmem:[%s1681 + $0x54] sm:$0xf]
    %v1704 = vld [vmem:[%s1681 + $0x58] sm:$0xf]
    %v1705 = vld [vmem:[%s1681 + $0x5c] sm:$0xf]
    %s1706 = scalar_lea.vmem %s1, 128
    %v1707 = vld [vmem:[%s1706] sm:$0xff]
    %v1708 = vld [vmem:[%s1706 + $0x8] sm:$0xff]
    %v1709 = vld [vmem:[%s1706 + $0x10] sm:$0xff]
    %v1710 = vld [vmem:[%s1706 + $0x18] sm:$0x33]
    %v1735 = vunpack.c.l.b16 %v1682
    %v1736 = vunpack.c.l.b16 %v1683
    %v1737 = vunpack.c.l.b16 %v1684
    %v1738 = vunpack.c.l.b16 %v1685
    %v1739 = vunpack.c.l.b16 %v1686
    %v1740 = vunpack.c.l.b16 %v1687
    %v1741 = vunpack.c.l.b16 %v1688
    %v1742 = vunpack.c.l.b16 %v1689
    %v1743 = vunpack.c.l.b16 %v1690
    %v1744 = vunpack.c.l.b16 %v1691
    %v1745 = vunpack.c.l.b16 %v1692
    %v1746 = vunpack.c.l.b16 %v1693
    %v1747 = vunpack.c.l.b16 %v1694
    %v1748 = vunpack.c.l.b16 %v1695
    %v1749 = vunpack.c.l.b16 %v1696
    %v1750 = vunpack.c.l.b16 %v1697
    %v1751 = vunpack.c.l.b16 %v1698
    %v1752 = vunpack.c.l.b16 %v1699
    %v1753 = vunpack.c.l.b16 %v1700
    %v1754 = vunpack.c.l.b16 %v1701
    %v1755 = vunpack.c.l.b16 %v1702
    %v1756 = vunpack.c.l.b16 %v1703
    %v1757 = vunpack.c.l.b16 %v1704
    %v1758 = vunpack.c.l.b16 %v1705
    %v1759 = vpack.c.b16 %v1736, %v1735
    %v1760 = vpack.c.b16 %v1738, %v1737
    %v1761 = vpack.c.b16 %v1740, %v1739
    %v1762 = vpack.c.b16 %v1742, %v1741
    %v1763 = vpack.c.b16 %v1744, %v1743
    %v1764 = vpack.c.b16 %v1746, %v1745
    %v1765 = vpack.c.b16 %v1748, %v1747
    %v1766 = vpack.c.b16 %v1750, %v1749
    %v1767 = vpack.c.b16 %v1752, %v1751
    %v1768 = vpack.c.b16 %v1754, %v1753
    %v1769 = vpack.c.b16 %v1756, %v1755
    %v1770 = vpack.c.b16 %v1758, %v1757
    %v1775 = vunpack.c.l.b16 %v1707
    %v1776 = vunpack.c.h.b16 %v1707
    %v1777 = vunpack.c.l.b16 %v1708
    %v1778 = vunpack.c.h.b16 %v1708
    %v1779 = vunpack.c.l.b16 %v1709
    %v1780 = vunpack.c.h.b16 %v1709
    %v1781 = vunpack.c.l.b16 %v1710
    %v1782 = vunpack.c.h.b16 %v1710
    %v1783 = vpack.c.b16 %v1777, %v1775
    %v1784 = vpack.c.b16 %v1778, %v1776
    %v1785 = vpack.c.b16 %v1781, %v1779
    %v1786 = vpack.c.b16 %v1782, %v1780
    %v1790 = vsel %vm155, %v1759, 0
    %v1793 = vsel %vm155, %v1760, 0
    %v1796 = vsel %vm155, %v1761, 0
    %v1799 = vsel %vm155, %v1762, 0
    %v1802 = vsel %vm155, %v1763, 0
    %v1805 = vsel %vm155, %v1764, 0
    %v1808 = vsel %vm155, %v1765, 0
    %v1811 = vsel %vm155, %v1766, 0
    %v1814 = vsel %vm155, %v1767, 0
    %v1817 = vsel %vm155, %v1768, 0
    %v1820 = vsel %vm155, %v1769, 0
    %v1823 = vsel %vm155, %v1770, 0
    %v1826 = vsel %vm192, %v1785, 0
    %v1829 = vsel %vm192, %v1786, 0
    %1831 = vmatpush.bf16.msra.mxu0 0
    %1832 = vmatpush.bf16.msra.mxu0 0
    %1833 = vmatpush.bf16.msra.mxu0 0
    %1834 = vmatpush.bf16.msra.mxu0 0
    %1835 = vmatpush.bf16.msra.mxu0 0
    %1836 = vmatpush.bf16.msra.mxu0 0
    %1837 = vmatpush.bf16.msra.mxu0 %v1826
    %1838 = vmatpush.bf16.msra.mxu0 %v1783
    %1839 = vmatmul.bf16.gmra.mxu0 %v1790
    %v1840 = vpop.f32.mrf.mxu0
    %v1841 = vadd.f32 0.0, %v1840
    %v1842 = vpop.f32.mrf.mxu0
    %v1843 = vadd.f32 0.0, %v1842
    %1844 = vmatmul.bf16.gmra.mxu0 %v1793
    %v1845 = vpop.f32.mrf.mxu0
    %v1846 = vadd.f32 0.0, %v1845
    %v1847 = vpop.f32.mrf.mxu0
    %v1848 = vadd.f32 0.0, %v1847
    %1849 = vmatmul.bf16.gmra.mxu0 %v1796
    %v1850 = vpop.f32.mrf.mxu0
    %v1851 = vadd.f32 0.0, %v1850
    %v1852 = vpop.f32.mrf.mxu0
    %v1853 = vadd.f32 0.0, %v1852
    %1854 = vmatmul.bf16.gmra.mxu0 %v1799
    %v1855 = vpop.f32.mrf.mxu0
    %v1856 = vadd.f32 0.0, %v1855
    %v1857 = vpop.f32.mrf.mxu0
    %v1858 = vadd.f32 0.0, %v1857
    %1859 = vmatmul.bf16.gmra.mxu0 %v1802
    %v1860 = vpop.f32.mrf.mxu0
    %v1861 = vadd.f32 0.0, %v1860
    %v1862 = vpop.f32.mrf.mxu0
    %v1863 = vadd.f32 0.0, %v1862
    %1864 = vmatmul.bf16.gmra.mxu0 %v1805
    %v1865 = vpop.f32.mrf.mxu0
    %v1866 = vadd.f32 0.0, %v1865
    %v1867 = vpop.f32.mrf.mxu0
    %v1868 = vadd.f32 0.0, %v1867
    %1869 = vmatmul.bf16.gmra.mxu0 %v1808
    %v1870 = vpop.f32.mrf.mxu0
    %v1871 = vadd.f32 0.0, %v1870
    %v1872 = vpop.f32.mrf.mxu0
    %v1873 = vadd.f32 0.0, %v1872
    %1874 = vmatmul.bf16.gmra.mxu0 %v1811
    %v1875 = vpop.f32.mrf.mxu0
    %v1876 = vadd.f32 0.0, %v1875
    %v1877 = vpop.f32.mrf.mxu0
    %v1878 = vadd.f32 0.0, %v1877
    %1879 = vmatmul.bf16.gmra.mxu0 %v1814
    %v1880 = vpop.f32.mrf.mxu0
    %v1881 = vadd.f32 0.0, %v1880
    %v1882 = vpop.f32.mrf.mxu0
    %v1883 = vadd.f32 0.0, %v1882
    %1884 = vmatmul.bf16.gmra.mxu0 %v1817
    %v1885 = vpop.f32.mrf.mxu0
    %v1886 = vadd.f32 0.0, %v1885
    %v1887 = vpop.f32.mrf.mxu0
    %v1888 = vadd.f32 0.0, %v1887
    %1889 = vmatmul.bf16.gmra.mxu0 %v1820
    %v1890 = vpop.f32.mrf.mxu0
    %v1891 = vadd.f32 0.0, %v1890
    %v1892 = vpop.f32.mrf.mxu0
    %v1893 = vadd.f32 0.0, %v1892
    %1894 = vmatmul.bf16.gmra.mxu0 %v1823
    %v1895 = vpop.f32.mrf.mxu0
    %v1896 = vadd.f32 0.0, %v1895
    %v1897 = vpop.f32.mrf.mxu0
    %v1898 = vadd.f32 0.0, %v1897
    %1899 = vdwg.mxu0
    %1900 = vmatpush.bf16.msra.mxu0 0
    %1901 = vmatpush.bf16.msra.mxu0 0
    %1902 = vmatpush.bf16.msra.mxu0 0
    %1903 = vmatpush.bf16.msra.mxu0 0
    %1904 = vmatpush.bf16.msra.mxu0 0
    %1905 = vmatpush.bf16.msra.mxu0 0
    %1906 = vmatpush.bf16.msra.mxu0 %v1829
    %1907 = vmatpush.bf16.msra.mxu0 %v1784
    %1908 = vmatmul.bf16.gmra.mxu0 %v1790
    %v1909 = vpop.f32.mrf.mxu0
    %v1910 = vadd.f32 0.0, %v1909
    %v1911 = vpop.f32.mrf.mxu0
    %v1912 = vadd.f32 0.0, %v1911
    %1913 = vmatmul.bf16.gmra.mxu0 %v1793
    %v1914 = vpop.f32.mrf.mxu0
    %v1915 = vadd.f32 0.0, %v1914
    %v1916 = vpop.f32.mrf.mxu0
    %v1917 = vadd.f32 0.0, %v1916
    %1918 = vmatmul.bf16.gmra.mxu0 %v1796
    %v1919 = vpop.f32.mrf.mxu0
    %v1920 = vadd.f32 0.0, %v1919
    %v1921 = vpop.f32.mrf.mxu0
    %v1922 = vadd.f32 0.0, %v1921
    %1923 = vmatmul.bf16.gmra.mxu0 %v1799
    %v1924 = vpop.f32.mrf.mxu0
    %v1925 = vadd.f32 0.0, %v1924
    %v1926 = vpop.f32.mrf.mxu0
    %v1927 = vadd.f32 0.0, %v1926
    %1928 = vmatmul.bf16.gmra.mxu0 %v1802
    %v1929 = vpop.f32.mrf.mxu0
    %v1930 = vadd.f32 0.0, %v1929
    %v1931 = vpop.f32.mrf.mxu0
    %v1932 = vadd.f32 0.0, %v1931
    %1933 = vmatmul.bf16.gmra.mxu0 %v1805
    %v1934 = vpop.f32.mrf.mxu0
    %v1935 = vadd.f32 0.0, %v1934
    %v1936 = vpop.f32.mrf.mxu0
    %v1937 = vadd.f32 0.0, %v1936
    %1938 = vmatmul.bf16.gmra.mxu0 %v1808
    %v1939 = vpop.f32.mrf.mxu0
    %v1940 = vadd.f32 0.0, %v1939
    %v1941 = vpop.f32.mrf.mxu0
    %v1942 = vadd.f32 0.0, %v1941
    %1943 = vmatmul.bf16.gmra.mxu0 %v1811
    %v1944 = vpop.f32.mrf.mxu0
    %v1945 = vadd.f32 0.0, %v1944
    %v1946 = vpop.f32.mrf.mxu0
    %v1947 = vadd.f32 0.0, %v1946
    %1948 = vmatmul.bf16.gmra.mxu0 %v1814
    %v1949 = vpop.f32.mrf.mxu0
    %v1950 = vadd.f32 0.0, %v1949
    %v1951 = vpop.f32.mrf.mxu0
    %v1952 = vadd.f32 0.0, %v1951
    %1953 = vmatmul.bf16.gmra.mxu0 %v1817
    %v1954 = vpop.f32.mrf.mxu0
    %v1955 = vadd.f32 0.0, %v1954
    %v1956 = vpop.f32.mrf.mxu0
    %v1957 = vadd.f32 0.0, %v1956
    %1958 = vmatmul.bf16.gmra.mxu0 %v1820
    %v1959 = vpop.f32.mrf.mxu0
    %v1960 = vadd.f32 0.0, %v1959
    %v1961 = vpop.f32.mrf.mxu0
    %v1962 = vadd.f32 0.0, %v1961
    %1963 = vmatmul.bf16.gmra.mxu0 %v1823
    %v1964 = vpop.f32.mrf.mxu0
    %v1965 = vadd.f32 0.0, %v1964
    %v1966 = vpop.f32.mrf.mxu0
    %v1967 = vadd.f32 0.0, %v1966
    %1968 = vdwg.mxu0
    %v1969 = vld [vmem:[#allocation2] sm:$0xff]
    %v1970 = vld [vmem:[#allocation2 + $0x8] sm:$0xff]
    %v1971 = vld [vmem:[#allocation2 + $0x10] sm:$0xff]
    %v1972 = vld [vmem:[#allocation2 + $0x18] sm:$0xff]
    %v1973 = vld [vmem:[#allocation2 + $0x20] sm:$0xff]
    %v1974 = vld [vmem:[#allocation2 + $0x28] sm:$0xff]
    %v1975 = vld [vmem:[#allocation2 + $0x30] sm:$0xff]
    %v1976 = vld [vmem:[#allocation2 + $0x38] sm:$0xff]
    %v1977 = vld [vmem:[#allocation2 + $0x40] sm:$0xff]
    %v1978 = vld [vmem:[#allocation2 + $0x48] sm:$0xff]
    %v1979 = vld [vmem:[#allocation2 + $0x50] sm:$0xff]
    %v1980 = vld [vmem:[#allocation2 + $0x58] sm:$0xff]
    %v1981 = vld [vmem:[#allocation2 + $0x60] sm:$0xff]
    %v1982 = vld [vmem:[#allocation2 + $0x68] sm:$0xff]
    %v1983 = vld [vmem:[#allocation2 + $0x70] sm:$0xff]
    %v1984 = vld [vmem:[#allocation2 + $0x78] sm:$0xff]
    %v1985 = vld [vmem:[#allocation2 + $0x80] sm:$0xff]
    %v1986 = vld [vmem:[#allocation2 + $0x88] sm:$0xff]
    %v1987 = vld [vmem:[#allocation2 + $0x90] sm:$0xff]
    %v1988 = vld [vmem:[#allocation2 + $0x98] sm:$0xff]
    %v1989 = vld [vmem:[#allocation2 + $0xa0] sm:$0xff]
    %v1990 = vld [vmem:[#allocation2 + $0xa8] sm:$0xff]
    %v1991 = vld [vmem:[#allocation2 + $0xb0] sm:$0xff]
    %v1992 = vld [vmem:[#allocation2 + $0xb8] sm:$0xff]
    %v1993 = vld [vmem:[#allocation2 + $0xc0] sm:$0xff]
    %v1994 = vld [vmem:[#allocation2 + $0xc8] sm:$0xff]
    %v1995 = vld [vmem:[#allocation2 + $0xd0] sm:$0xff]
    %v1996 = vld [vmem:[#allocation2 + $0xd8] sm:$0xff]
    %v1997 = vld [vmem:[#allocation2 + $0xe0] sm:$0xff]
    %v1998 = vld [vmem:[#allocation2 + $0xe8] sm:$0xff]
    %v1999 = vld [vmem:[#allocation2 + $0xf0] sm:$0xff]
    %v2000 = vld [vmem:[#allocation2 + $0xf8] sm:$0xff]
    %v2001 = vld [vmem:[#allocation2 + $0x100] sm:$0xff]
    %v2002 = vld [vmem:[#allocation2 + $0x108] sm:$0xff]
    %v2003 = vld [vmem:[#allocation2 + $0x110] sm:$0xff]
    %v2004 = vld [vmem:[#allocation2 + $0x118] sm:$0xff]
    %v2005 = vld [vmem:[#allocation2 + $0x120] sm:$0xff]
    %v2006 = vld [vmem:[#allocation2 + $0x128] sm:$0xff]
    %v2007 = vld [vmem:[#allocation2 + $0x130] sm:$0xff]
    %v2008 = vld [vmem:[#allocation2 + $0x138] sm:$0xff]
    %v2009 = vld [vmem:[#allocation2 + $0x140] sm:$0xff]
    %v2010 = vld [vmem:[#allocation2 + $0x148] sm:$0xff]
    %v2011 = vld [vmem:[#allocation2 + $0x150] sm:$0xff]
    %v2012 = vld [vmem:[#allocation2 + $0x158] sm:$0xff]
    %v2013 = vld [vmem:[#allocation2 + $0x160] sm:$0xff]
    %v2014 = vld [vmem:[#allocation2 + $0x168] sm:$0xff]
    %v2015 = vld [vmem:[#allocation2 + $0x170] sm:$0xff]
    %v2016 = vld [vmem:[#allocation2 + $0x178] sm:$0xff]
    %v2017 = vadd.f32 %v1969, %v1841
    %v2018 = vadd.f32 %v1970, %v1910
    %v2019 = vadd.f32 %v1971, %v1843
    %v2020 = vadd.f32 %v1972, %v1912
    %v2021 = vadd.f32 %v1973, %v1846
    %v2022 = vadd.f32 %v1974, %v1915
    %v2023 = vadd.f32 %v1975, %v1848
    %v2024 = vadd.f32 %v1976, %v1917
    %v2025 = vadd.f32 %v1977, %v1851
    %v2026 = vadd.f32 %v1978, %v1920
    %v2027 = vadd.f32 %v1979, %v1853
    %v2028 = vadd.f32 %v1980, %v1922
    %v2029 = vadd.f32 %v1981, %v1856
    %v2030 = vadd.f32 %v1982, %v1925
    %v2031 = vadd.f32 %v1983, %v1858
    %v2032 = vadd.f32 %v1984, %v1927
    %v2033 = vadd.f32 %v1985, %v1861
    %v2034 = vadd.f32 %v1986, %v1930
    %v2035 = vadd.f32 %v1987, %v1863
    %v2036 = vadd.f32 %v1988, %v1932
    %v2037 = vadd.f32 %v1989, %v1866
    %v2038 = vadd.f32 %v1990, %v1935
    %v2039 = vadd.f32 %v1991, %v1868
    %v2040 = vadd.f32 %v1992, %v1937
    %v2041 = vadd.f32 %v1993, %v1871
    %v2042 = vadd.f32 %v1994, %v1940
    %v2043 = vadd.f32 %v1995, %v1873
    %v2044 = vadd.f32 %v1996, %v1942
    %v2045 = vadd.f32 %v1997, %v1876
    %v2046 = vadd.f32 %v1998, %v1945
    %v2047 = vadd.f32 %v1999, %v1878
    %v2048 = vadd.f32 %v2000, %v1947
    %v2049 = vadd.f32 %v2001, %v1881
    %v2050 = vadd.f32 %v2002, %v1950
    %v2051 = vadd.f32 %v2003, %v1883
    %v2052 = vadd.f32 %v2004, %v1952
    %v2053 = vadd.f32 %v2005, %v1886
    %v2054 = vadd.f32 %v2006, %v1955
    %v2055 = vadd.f32 %v2007, %v1888
    %v2056 = vadd.f32 %v2008, %v1957
    %v2057 = vadd.f32 %v2009, %v1891
    %v2058 = vadd.f32 %v2010, %v1960
    %v2059 = vadd.f32 %v2011, %v1893
    %v2060 = vadd.f32 %v2012, %v1962
    %v2061 = vadd.f32 %v2013, %v1896
    %v2062 = vadd.f32 %v2014, %v1965
    %v2063 = vadd.f32 %v2015, %v1898
    %v2064 = vadd.f32 %v2016, %v1967
    %2065 = vst [vmem:[#allocation2] sm:$0xff] %v2017
    %2066 = vst [vmem:[#allocation2 + $0x8] sm:$0xff] %v2018
    %2067 = vst [vmem:[#allocation2 + $0x10] sm:$0xff] %v2019
    %2068 = vst [vmem:[#allocation2 + $0x18] sm:$0xff] %v2020
    %2069 = vst [vmem:[#allocation2 + $0x20] sm:$0xff] %v2021
    %2070 = vst [vmem:[#allocation2 + $0x28] sm:$0xff] %v2022
    %2071 = vst [vmem:[#allocation2 + $0x30] sm:$0xff] %v2023
    %2072 = vst [vmem:[#allocation2 + $0x38] sm:$0xff] %v2024
    %2073 = vst [vmem:[#allocation2 + $0x40] sm:$0xff] %v2025
    %2074 = vst [vmem:[#allocation2 + $0x48] sm:$0xff] %v2026
    %2075 = vst [vmem:[#allocation2 + $0x50] sm:$0xff] %v2027
    %2076 = vst [vmem:[#allocation2 + $0x58] sm:$0xff] %v2028
    %2077 = vst [vmem:[#allocation2 + $0x60] sm:$0xff] %v2029
    %2078 = vst [vmem:[#allocation2 + $0x68] sm:$0xff] %v2030
    %2079 = vst [vmem:[#allocation2 + $0x70] sm:$0xff] %v2031
    %2080 = vst [vmem:[#allocation2 + $0x78] sm:$0xff] %v2032
    %2081 = vst [vmem:[#allocation2 + $0x80] sm:$0xff] %v2033
    %2082 = vst [vmem:[#allocation2 + $0x88] sm:$0xff] %v2034
    %2083 = vst [vmem:[#allocation2 + $0x90] sm:$0xff] %v2035
    %2084 = vst [vmem:[#allocation2 + $0x98] sm:$0xff] %v2036
    %2085 = vst [vmem:[#allocation2 + $0xa0] sm:$0xff] %v2037
    %2086 = vst [vmem:[#allocation2 + $0xa8] sm:$0xff] %v2038
    %2087 = vst [vmem:[#allocation2 + $0xb0] sm:$0xff] %v2039
    %2088 = vst [vmem:[#allocation2 + $0xb8] sm:$0xff] %v2040
    %2089 = vst [vmem:[#allocation2 + $0xc0] sm:$0xff] %v2041
    %2090 = vst [vmem:[#allocation2 + $0xc8] sm:$0xff] %v2042
    %2091 = vst [vmem:[#allocation2 + $0xd0] sm:$0xff] %v2043
    %2092 = vst [vmem:[#allocation2 + $0xd8] sm:$0xff] %v2044
    %2093 = vst [vmem:[#allocation2 + $0xe0] sm:$0xff] %v2045
    %2094 = vst [vmem:[#allocation2 + $0xe8] sm:$0xff] %v2046
    %2095 = vst [vmem:[#allocation2 + $0xf0] sm:$0xff] %v2047
    %2096 = vst [vmem:[#allocation2 + $0xf8] sm:$0xff] %v2048
    %2097 = vst [vmem:[#allocation2 + $0x100] sm:$0xff] %v2049
    %2098 = vst [vmem:[#allocation2 + $0x108] sm:$0xff] %v2050
    %2099 = vst [vmem:[#allocation2 + $0x110] sm:$0xff] %v2051
    %2100 = vst [vmem:[#allocation2 + $0x118] sm:$0xff] %v2052
    %2101 = vst [vmem:[#allocation2 + $0x120] sm:$0xff] %v2053
    %2102 = vst [vmem:[#allocation2 + $0x128] sm:$0xff] %v2054
    %2103 = vst [vmem:[#allocation2 + $0x130] sm:$0xff] %v2055
    %2104 = vst [vmem:[#allocation2 + $0x138] sm:$0xff] %v2056
    %2105 = vst [vmem:[#allocation2 + $0x140] sm:$0xff] %v2057
    %2106 = vst [vmem:[#allocation2 + $0x148] sm:$0xff] %v2058
    %2107 = vst [vmem:[#allocation2 + $0x150] sm:$0xff] %v2059
    %2108 = vst [vmem:[#allocation2 + $0x158] sm:$0xff] %v2060
    %2109 = vst [vmem:[#allocation2 + $0x160] sm:$0xff] %v2061
    %2110 = vst [vmem:[#allocation2 + $0x168] sm:$0xff] %v2062
    %2111 = vst [vmem:[#allocation2 + $0x170] sm:$0xff] %v2063
    %2112 = vst [vmem:[#allocation2 + $0x178] sm:$0xff] %v2064
    %v2113 = vld [vmem:[#allocation2] sm:$0xff]
    %v2114 = vld [vmem:[#allocation2 + $0x10] sm:$0xff]
    %v2115 = vld [vmem:[#allocation2 + $0x20] sm:$0xff]
    %v2116 = vld [vmem:[#allocation2 + $0x30] sm:$0xff]
    %v2117 = vld [vmem:[#allocation2 + $0x40] sm:$0xff]
    %v2118 = vld [vmem:[#allocation2 + $0x50] sm:$0xff]
    %v2119 = vld [vmem:[#allocation2 + $0x60] sm:$0xff]
    %v2120 = vld [vmem:[#allocation2 + $0x70] sm:$0xff]
    %v2121 = vld [vmem:[#allocation2 + $0x80] sm:$0xff]
    %v2122 = vld [vmem:[#allocation2 + $0x90] sm:$0xff]
    %v2123 = vld [vmem:[#allocation2 + $0xa0] sm:$0xff]
    %v2124 = vld [vmem:[#allocation2 + $0xb0] sm:$0xff]
    %v2125 = vld [vmem:[#allocation2 + $0xc0] sm:$0xff]
    %v2126 = vld [vmem:[#allocation2 + $0xd0] sm:$0xff]
    %v2127 = vld [vmem:[#allocation2 + $0xe0] sm:$0xff]
    %v2128 = vld [vmem:[#allocation2 + $0xf0] sm:$0xff]
    %v2129 = vld [vmem:[#allocation2 + $0x100] sm:$0xff]
    %v2130 = vld [vmem:[#allocation2 + $0x110] sm:$0xff]
    %v2131 = vld [vmem:[#allocation2 + $0x120] sm:$0xff]
    %v2132 = vld [vmem:[#allocation2 + $0x130] sm:$0xff]
    %v2133 = vld [vmem:[#allocation2 + $0x140] sm:$0xff]
    %v2134 = vld [vmem:[#allocation2 + $0x150] sm:$0xff]
    %v2135 = vld [vmem:[#allocation2 + $0x160] sm:$0xff]
    %v2136 = vld [vmem:[#allocation2 + $0x170] sm:$0xff]
    %v2137 = vld [vmem:[#allocation2 + $0x8] sm:$0xff]
    %v2138 = vld [vmem:[#allocation2 + $0x18] sm:$0xff]
    %v2139 = vld [vmem:[#allocation2 + $0x28] sm:$0xff]
    %v2140 = vld [vmem:[#allocation2 + $0x38] sm:$0xff]
    %v2141 = vld [vmem:[#allocation2 + $0x48] sm:$0xff]
    %v2142 = vld [vmem:[#allocation2 + $0x58] sm:$0xff]
    %v2143 = vld [vmem:[#allocation2 + $0x68] sm:$0xff]
    %v2144 = vld [vmem:[#allocation2 + $0x78] sm:$0xff]
    %v2145 = vld [vmem:[#allocation2 + $0x88] sm:$0xff]
    %v2146 = vld [vmem:[#allocation2 + $0x98] sm:$0xff]
    %v2147 = vld [vmem:[#allocation2 + $0xa8] sm:$0xff]
    %v2148 = vld [vmem:[#allocation2 + $0xb8] sm:$0xff]
    %v2149 = vld [vmem:[#allocation2 + $0xc8] sm:$0xff]
    %v2150 = vld [vmem:[#allocation2 + $0xd8] sm:$0xff]
    %v2151 = vld [vmem:[#allocation2 + $0xe8] sm:$0xff]
    %v2152 = vld [vmem:[#allocation2 + $0xf8] sm:$0xff]
    %v2153 = vld [vmem:[#allocation2 + $0x108] sm:$0xff]
    %v2154 = vld [vmem:[#allocation2 + $0x118] sm:$0xff]
    %v2155 = vld [vmem:[#allocation2 + $0x128] sm:$0xff]
    %v2156 = vld [vmem:[#allocation2 + $0x138] sm:$0xff]
    %v2157 = vld [vmem:[#allocation2 + $0x148] sm:$0xff]
    %v2158 = vld [vmem:[#allocation2 + $0x158] sm:$0xff]
    %v2159 = vld [vmem:[#allocation2 + $0x168] sm:$0xff]
    %v2160 = vld [vmem:[#allocation2 + $0x178] sm:$0xff]
    %v2161 = vmax.f32 %v2113, %v2137
    %v2162 = vmax.f32 %v2114, %v2138
    %v2163 = vmax.f32 %v2115, %v2139
    %v2164 = vmax.f32 %v2116, %v2140
    %v2165 = vmax.f32 %v2117, %v2141
    %v2166 = vmax.f32 %v2118, %v2142
    %v2167 = vmax.f32 %v2119, %v2143
    %v2168 = vmax.f32 %v2120, %v2144
    %v2169 = vmax.f32 %v2121, %v2145
    %v2170 = vmax.f32 %v2122, %v2146
    %v2171 = vmax.f32 %v2123, %v2147
    %v2172 = vmax.f32 %v2124, %v2148
    %v2173 = vmax.f32 %v2125, %v2149
    %v2174 = vmax.f32 %v2126, %v2150
    %v2175 = vmax.f32 %v2127, %v2151
    %v2176 = vmax.f32 %v2128, %v2152
    %v2177 = vmax.f32 %v2129, %v2153
    %v2178 = vmax.f32 %v2130, %v2154
    %v2179 = vmax.f32 %v2131, %v2155
    %v2180 = vmax.f32 %v2132, %v2156
    %v2181 = vmax.f32 %v2133, %v2157
    %v2182 = vmax.f32 %v2134, %v2158
    %v2183 = vmax.f32 %v2135, %v2159
    %v2184 = vmax.f32 %v2136, %v2160
    %v2185 = vld [vmem:[%s2] sm:$0x1]
    %v2186 = vmax.f32 %v2161, %v2162
    %v2188 = vperm.slane %v2185, 0
    %v2190 = vadd.f32 %v2186, %v2188
    %v2191 = vmax.f32 %v2190, 0.0
    %v2192 = vpack.c.bf16 %v2191, %v2191
    %2193 = vst [vmem:[#allocation4] sm:$0xf] %v2192
    %v2194 = vmax.f32 %v2163, %v2164
    %v2195 = vadd.f32 %v2194, %v2188
    %v2196 = vmax.f32 %v2195, 0.0
    %v2197 = vpack.c.bf16 %v2196, %v2196
    %s2198 = scalar_lea.vmem [#allocation4], 4
    %2199 = vst [vmem:[%s2198] sm:$0xf] %v2197
    %v2200 = vmax.f32 %v2165, %v2166
    %v2201 = vadd.f32 %v2200, %v2188
    %v2202 = vmax.f32 %v2201, 0.0
    %v2203 = vpack.c.bf16 %v2202, %v2202
    %s2204 = scalar_lea.vmem [#allocation4], 8
    %2205 = vst [vmem:[%s2204] sm:$0xf] %v2203
    %v2206 = vmax.f32 %v2167, %v2168
    %v2207 = vadd.f32 %v2206, %v2188
    %v2208 = vmax.f32 %v2207, 0.0
    %v2209 = vpack.c.bf16 %v2208, %v2208
    %s2210 = scalar_lea.vmem [#allocation4], 12
    %2211 = vst [vmem:[%s2210] sm:$0xf] %v2209
    %v2212 = vmax.f32 %v2169, %v2170
    %v2213 = vadd.f32 %v2212, %v2188
    %v2214 = vmax.f32 %v2213, 0.0
    %v2215 = vpack.c.bf16 %v2214, %v2214
    %s2216 = scalar_lea.vmem [#allocation4], 16
    %2217 = vst [vmem:[%s2216] sm:$0xf] %v2215
    %v2218 = vmax.f32 %v2171, %v2172
    %v2219 = vadd.f32 %v2218, %v2188
    %v2220 = vmax.f32 %v2219, 0.0
    %v2221 = vpack.c.bf16 %v2220, %v2220
    %s2222 = scalar_lea.vmem [#allocation4], 20
    %2223 = vst [vmem:[%s2222] sm:$0xf] %v2221
    %v2224 = vmax.f32 %v2173, %v2174
    %v2225 = vadd.f32 %v2224, %v2188
    %v2226 = vmax.f32 %v2225, 0.0
    %v2227 = vpack.c.bf16 %v2226, %v2226
    %s2228 = scalar_lea.vmem [#allocation4], 24
    %2229 = vst [vmem:[%s2228] sm:$0xf] %v2227
    %v2230 = vmax.f32 %v2175, %v2176
    %v2231 = vadd.f32 %v2230, %v2188
    %v2232 = vmax.f32 %v2231, 0.0
    %v2233 = vpack.c.bf16 %v2232, %v2232
    %s2234 = scalar_lea.vmem [#allocation4], 28
    %2235 = vst [vmem:[%s2234] sm:$0xf] %v2233
    %v2236 = vmax.f32 %v2177, %v2178
    %v2237 = vadd.f32 %v2236, %v2188
    %v2238 = vmax.f32 %v2237, 0.0
    %v2239 = vpack.c.bf16 %v2238, %v2238
    %s2240 = scalar_lea.vmem [#allocation4], 32
    %2241 = vst [vmem:[%s2240] sm:$0xf] %v2239
    %v2242 = vmax.f32 %v2179, %v2180
    %v2243 = vadd.f32 %v2242, %v2188
    %v2244 = vmax.f32 %v2243, 0.0
    %v2245 = vpack.c.bf16 %v2244, %v2244
    %s2246 = scalar_lea.vmem [#allocation4], 36
    %2247 = vst [vmem:[%s2246] sm:$0xf] %v2245
    %v2248 = vmax.f32 %v2181, %v2182
    %v2249 = vadd.f32 %v2248, %v2188
    %v2250 = vmax.f32 %v2249, 0.0
    %v2251 = vpack.c.bf16 %v2250, %v2250
    %s2252 = scalar_lea.vmem [#allocation4], 40
    %2253 = vst [vmem:[%s2252] sm:$0xf] %v2251
    %v2254 = vmax.f32 %v2183, %v2184
    %v2255 = vadd.f32 %v2254, %v2188
    %v2256 = vmax.f32 %v2255, 0.0
    %v2257 = vpack.c.bf16 %v2256, %v2256
    %s2258 = scalar_lea.vmem [#allocation4], 44
    %2259 = vst [vmem:[%s2258] sm:$0xf] %v2257
    %v2260 = vld [vmem:[#allocation4] sm:$0xf]
    %v2261 = vld [vmem:[#allocation4 + $0x4] sm:$0xf]
    %v2262 = vld [vmem:[#allocation4 + $0x8] sm:$0xf]
    %v2263 = vld [vmem:[#allocation4 + $0xc] sm:$0xf]
    %v2264 = vld [vmem:[#allocation4 + $0x10] sm:$0xf]
    %v2265 = vld [vmem:[#allocation4 + $0x14] sm:$0xf]
    %v2266 = vld [vmem:[#allocation4 + $0x18] sm:$0xf]
    %v2267 = vld [vmem:[#allocation4 + $0x1c] sm:$0xf]
    %v2268 = vld [vmem:[#allocation5] sm:$0xff]
    %v2269 = vld [vmem:[#allocation5 + $0x8] sm:$0xff]
    %v2270 = vld [vmem:[#allocation5 + $0x10] sm:$0xff]
    %v2271 = vld [vmem:[#allocation5 + $0x18] sm:$0xff]
    %v2272 = vld [vmem:[#allocation5 + $0x20] sm:$0xff]
    %v2273 = vld [vmem:[#allocation5 + $0x28] sm:$0xff]
    %v2274 = vld [vmem:[#allocation5 + $0x30] sm:$0xff]
    %v2275 = vld [vmem:[#allocation5 + $0x38] sm:$0xff]
    %v2276 = vld [vmem:[#allocation5 + $0x40] sm:$0xff]
    %v2277 = vld [vmem:[#allocation5 + $0x48] sm:$0xff]
    %v2278 = vld [vmem:[#allocation5 + $0x50] sm:$0xff]
    %v2279 = vld [vmem:[#allocation5 + $0x58] sm:$0xff]
    %v2280 = vld [vmem:[#allocation5 + $0x60] sm:$0xff]
    %v2281 = vld [vmem:[#allocation5 + $0x68] sm:$0xff]
    %v2282 = vld [vmem:[#allocation5 + $0x70] sm:$0xff]
    %v2283 = vld [vmem:[#allocation5 + $0x78] sm:$0xff]
    %v2292 = vunpack.c.l.b16 %v2260
    %v2293 = vunpack.c.l.b16 %v2261
    %v2294 = vunpack.c.l.b16 %v2262
    %v2295 = vunpack.c.l.b16 %v2263
    %v2296 = vunpack.c.l.b16 %v2264
    %v2297 = vunpack.c.l.b16 %v2265
    %v2298 = vunpack.c.l.b16 %v2266
    %v2299 = vunpack.c.l.b16 %v2267
    %v2300 = vpack.c.b16 %v2293, %v2292
    %v2301 = vpack.c.b16 %v2295, %v2294
    %v2302 = vpack.c.b16 %v2297, %v2296
    %v2303 = vpack.c.b16 %v2299, %v2298
    %v2324 = vunpack.c.l.b16 %v2268
    %v2325 = vunpack.c.h.b16 %v2268
    %v2326 = vunpack.c.l.b16 %v2269
    %v2327 = vunpack.c.h.b16 %v2269
    %v2328 = vunpack.c.l.b16 %v2270
    %v2329 = vunpack.c.h.b16 %v2270
    %v2330 = vunpack.c.l.b16 %v2271
    %v2331 = vunpack.c.h.b16 %v2271
    %v2332 = vunpack.c.l.b16 %v2272
    %v2333 = vunpack.c.h.b16 %v2272
    %v2334 = vunpack.c.l.b16 %v2273
    %v2335 = vunpack.c.h.b16 %v2273
    %v2336 = vunpack.c.l.b16 %v2274
    %v2337 = vunpack.c.h.b16 %v2274
    %v2338 = vunpack.c.l.b16 %v2275
    %v2339 = vunpack.c.h.b16 %v2275
    %v2340 = vunpack.c.l.b16 %v2276
    %v2341 = vunpack.c.h.b16 %v2276
    %v2342 = vunpack.c.l.b16 %v2277
    %v2343 = vunpack.c.h.b16 %v2277
    %v2344 = vunpack.c.l.b16 %v2278
    %v2345 = vunpack.c.h.b16 %v2278
    %v2346 = vunpack.c.l.b16 %v2279
    %v2347 = vunpack.c.h.b16 %v2279
    %v2348 = vunpack.c.l.b16 %v2280
    %v2349 = vunpack.c.h.b16 %v2280
    %v2350 = vunpack.c.l.b16 %v2281
    %v2351 = vunpack.c.h.b16 %v2281
    %v2352 = vunpack.c.l.b16 %v2282
    %v2353 = vunpack.c.h.b16 %v2282
    %v2354 = vunpack.c.l.b16 %v2283
    %v2355 = vunpack.c.h.b16 %v2283
    %v2356 = vpack.c.b16 %v2326, %v2324
    %v2357 = vpack.c.b16 %v2327, %v2325
    %v2358 = vpack.c.b16 %v2330, %v2328
    %v2359 = vpack.c.b16 %v2331, %v2329
    %v2360 = vpack.c.b16 %v2334, %v2332
    %v2361 = vpack.c.b16 %v2335, %v2333
    %v2362 = vpack.c.b16 %v2338, %v2336
    %v2363 = vpack.c.b16 %v2339, %v2337
    %v2364 = vpack.c.b16 %v2342, %v2340
    %v2365 = vpack.c.b16 %v2343, %v2341
    %v2366 = vpack.c.b16 %v2346, %v2344
    %v2367 = vpack.c.b16 %v2347, %v2345
    %v2368 = vpack.c.b16 %v2350, %v2348
    %v2369 = vpack.c.b16 %v2351, %v2349
    %v2370 = vpack.c.b16 %v2354, %v2352
    %v2371 = vpack.c.b16 %v2355, %v2353
    %2388 = vmatpush.bf16.msra.mxu0 %v2370
    %2389 = vmatpush.bf16.msra.mxu0 %v2368
    %2390 = vmatpush.bf16.msra.mxu0 %v2366
    %2391 = vmatpush.bf16.msra.mxu0 %v2364
    %2392 = vmatpush.bf16.msra.mxu0 %v2362
    %2393 = vmatpush.bf16.msra.mxu0 %v2360
    %2394 = vmatpush.bf16.msra.mxu0 %v2358
    %2395 = vmatpush.bf16.msra.mxu0 %v2356
    %2396 = vmatmul.bf16.gmra.mxu0 %v2300
    %v2397 = vpop.f32.mrf.mxu0
    %v2398 = vadd.f32 0.0, %v2397
    %v2399 = vpop.f32.mrf.mxu0
    %v2400 = vadd.f32 0.0, %v2399
    %2401 = vmatmul.bf16.gmra.mxu0 %v2301
    %v2402 = vpop.f32.mrf.mxu0
    %v2403 = vadd.f32 0.0, %v2402
    %v2404 = vpop.f32.mrf.mxu0
    %v2405 = vadd.f32 0.0, %v2404
    %2406 = vmatmul.bf16.gmra.mxu0 %v2302
    %v2407 = vpop.f32.mrf.mxu0
    %v2408 = vadd.f32 0.0, %v2407
    %v2409 = vpop.f32.mrf.mxu0
    %v2410 = vadd.f32 0.0, %v2409
    %2411 = vmatmul.bf16.gmra.mxu0 %v2303
    %v2412 = vpop.f32.mrf.mxu0
    %v2413 = vadd.f32 0.0, %v2412
    %v2414 = vpop.f32.mrf.mxu0
    %v2415 = vadd.f32 0.0, %v2414
    %2416 = vdwg.mxu0
    %2417 = vmatpush.bf16.msra.mxu0 %v2371
    %2418 = vmatpush.bf16.msra.mxu0 %v2369
    %2419 = vmatpush.bf16.msra.mxu0 %v2367
    %2420 = vmatpush.bf16.msra.mxu0 %v2365
    %2421 = vmatpush.bf16.msra.mxu0 %v2363
    %2422 = vmatpush.bf16.msra.mxu0 %v2361
    %2423 = vmatpush.bf16.msra.mxu0 %v2359
    %2424 = vmatpush.bf16.msra.mxu0 %v2357
    %2425 = vmatmul.bf16.gmra.mxu0 %v2300
    %v2426 = vpop.f32.mrf.mxu0
    %v2427 = vadd.f32 0.0, %v2426
    %v2428 = vpop.f32.mrf.mxu0
    %v2429 = vadd.f32 0.0, %v2428
    %2430 = vmatmul.bf16.gmra.mxu0 %v2301
    %v2431 = vpop.f32.mrf.mxu0
    %v2432 = vadd.f32 0.0, %v2431
    %v2433 = vpop.f32.mrf.mxu0
    %v2434 = vadd.f32 0.0, %v2433
    %2435 = vmatmul.bf16.gmra.mxu0 %v2302
    %v2436 = vpop.f32.mrf.mxu0
    %v2437 = vadd.f32 0.0, %v2436
    %v2438 = vpop.f32.mrf.mxu0
    %v2439 = vadd.f32 0.0, %v2438
    %2440 = vmatmul.bf16.gmra.mxu0 %v2303
    %v2441 = vpop.f32.mrf.mxu0
    %v2442 = vadd.f32 0.0, %v2441
    %v2443 = vpop.f32.mrf.mxu0
    %v2444 = vadd.f32 0.0, %v2443
    %2445 = vdwg.mxu0
    %2446 = vst [vmem:[#allocation3] sm:$0xff] %v2398
    %2447 = vst [vmem:[#allocation3 + $0x8] sm:$0xff] %v2427
    %2448 = vst [vmem:[#allocation3 + $0x10] sm:$0xff] %v2400
    %2449 = vst [vmem:[#allocation3 + $0x18] sm:$0xff] %v2429
    %2450 = vst [vmem:[#allocation3 + $0x20] sm:$0xff] %v2403
    %2451 = vst [vmem:[#allocation3 + $0x28] sm:$0xff] %v2432
    %2452 = vst [vmem:[#allocation3 + $0x30] sm:$0xff] %v2405
    %2453 = vst [vmem:[#allocation3 + $0x38] sm:$0xff] %v2434
    %2454 = vst [vmem:[#allocation3 + $0x40] sm:$0xff] %v2408
    %2455 = vst [vmem:[#allocation3 + $0x48] sm:$0xff] %v2437
    %2456 = vst [vmem:[#allocation3 + $0x50] sm:$0xff] %v2410
    %2457 = vst [vmem:[#allocation3 + $0x58] sm:$0xff] %v2439
    %2458 = vst [vmem:[#allocation3 + $0x60] sm:$0xff] %v2413
    %2459 = vst [vmem:[#allocation3 + $0x68] sm:$0xff] %v2442
    %2460 = vst [vmem:[#allocation3 + $0x70] sm:$0xff] %v2415
    %2461 = vst [vmem:[#allocation3 + $0x78] sm:$0xff] %v2444
    %v2462 = vld [vmem:[%s2198] sm:$0xf]
    %v2463 = vld [vmem:[%s2198 + $0x4] sm:$0xf]
    %v2464 = vld [vmem:[%s2198 + $0x8] sm:$0xf]
    %v2465 = vld [vmem:[%s2198 + $0xc] sm:$0xf]
    %v2466 = vld [vmem:[%s2198 + $0x10] sm:$0xf]
    %v2467 = vld [vmem:[%s2198 + $0x14] sm:$0xf]
    %v2468 = vld [vmem:[%s2198 + $0x18] sm:$0xf]
    %v2469 = vld [vmem:[%s2198 + $0x1c] sm:$0xf]
    %s2470 = scalar_lea.vmem [#allocation5], 128
    %v2471 = vld [vmem:[%s2470] sm:$0xff]
    %v2472 = vld [vmem:[%s2470 + $0x8] sm:$0xff]
    %v2473 = vld [vmem:[%s2470 + $0x10] sm:$0xff]
    %v2474 = vld [vmem:[%s2470 + $0x18] sm:$0xff]
    %v2475 = vld [vmem:[%s2470 + $0x20] sm:$0xff]
    %v2476 = vld [vmem:[%s2470 + $0x28] sm:$0xff]
    %v2477 = vld [vmem:[%s2470 + $0x30] sm:$0xff]
    %v2478 = vld [vmem:[%s2470 + $0x38] sm:$0xff]
    %v2479 = vld [vmem:[%s2470 + $0x40] sm:$0xff]
    %v2480 = vld [vmem:[%s2470 + $0x48] sm:$0xff]
    %v2481 = vld [vmem:[%s2470 + $0x50] sm:$0xff]
    %v2482 = vld [vmem:[%s2470 + $0x58] sm:$0xff]
    %v2483 = vld [vmem:[%s2470 + $0x60] sm:$0xff]
    %v2484 = vld [vmem:[%s2470 + $0x68] sm:$0xff]
    %v2485 = vld [vmem:[%s2470 + $0x70] sm:$0xff]
    %v2486 = vld [vmem:[%s2470 + $0x78] sm:$0xff]
    %v2495 = vunpack.c.l.b16 %v2462
    %v2496 = vunpack.c.l.b16 %v2463
    %v2497 = vunpack.c.l.b16 %v2464
    %v2498 = vunpack.c.l.b16 %v2465
    %v2499 = vunpack.c.l.b16 %v2466
    %v2500 = vunpack.c.l.b16 %v2467
    %v2501 = vunpack.c.l.b16 %v2468
    %v2502 = vunpack.c.l.b16 %v2469
    %v2503 = vpack.c.b16 %v2496, %v2495
    %v2504 = vpack.c.b16 %v2498, %v2497
    %v2505 = vpack.c.b16 %v2500, %v2499
    %v2506 = vpack.c.b16 %v2502, %v2501
    %v2527 = vunpack.c.l.b16 %v2471
    %v2528 = vunpack.c.h.b16 %v2471
    %v2529 = vunpack.c.l.b16 %v2472
    %v2530 = vunpack.c.h.b16 %v2472
    %v2531 = vunpack.c.l.b16 %v2473
    %v2532 = vunpack.c.h.b16 %v2473
    %v2533 = vunpack.c.l.b16 %v2474
    %v2534 = vunpack.c.h.b16 %v2474
    %v2535 = vunpack.c.l.b16 %v2475
    %v2536 = vunpack.c.h.b16 %v2475
    %v2537 = vunpack.c.l.b16 %v2476
    %v2538 = vunpack.c.h.b16 %v2476
    %v2539 = vunpack.c.l.b16 %v2477
    %v2540 = vunpack.c.h.b16 %v2477
    %v2541 = vunpack.c.l.b16 %v2478
    %v2542 = vunpack.c.h.b16 %v2478
    %v2543 = vunpack.c.l.b16 %v2479
    %v2544 = vunpack.c.h.b16 %v2479
    %v2545 = vunpack.c.l.b16 %v2480
    %v2546 = vunpack.c.h.b16 %v2480
    %v2547 = vunpack.c.l.b16 %v2481
    %v2548 = vunpack.c.h.b16 %v2481
    %v2549 = vunpack.c.l.b16 %v2482
    %v2550 = vunpack.c.h.b16 %v2482
    %v2551 = vunpack.c.l.b16 %v2483
    %v2552 = vunpack.c.h.b16 %v2483
    %v2553 = vunpack.c.l.b16 %v2484
    %v2554 = vunpack.c.h.b16 %v2484
    %v2555 = vunpack.c.l.b16 %v2485
    %v2556 = vunpack.c.h.b16 %v2485
    %v2557 = vunpack.c.l.b16 %v2486
    %v2558 = vunpack.c.h.b16 %v2486
    %v2559 = vpack.c.b16 %v2529, %v2527
    %v2560 = vpack.c.b16 %v2530, %v2528
    %v2561 = vpack.c.b16 %v2533, %v2531
    %v2562 = vpack.c.b16 %v2534, %v2532
    %v2563 = vpack.c.b16 %v2537, %v2535
    %v2564 = vpack.c.b16 %v2538, %v2536
    %v2565 = vpack.c.b16 %v2541, %v2539
    %v2566 = vpack.c.b16 %v2542, %v2540
    %v2567 = vpack.c.b16 %v2545, %v2543
    %v2568 = vpack.c.b16 %v2546, %v2544
    %v2569 = vpack.c.b16 %v2549, %v2547
    %v2570 = vpack.c.b16 %v2550, %v2548
    %v2571 = vpack.c.b16 %v2553, %v2551
    %v2572 = vpack.c.b16 %v2554, %v2552
    %v2573 = vpack.c.b16 %v2557, %v2555
    %v2574 = vpack.c.b16 %v2558, %v2556
    %2591 = vmatpush.bf16.msra.mxu0 %v2573
    %2592 = vmatpush.bf16.msra.mxu0 %v2571
    %2593 = vmatpush.bf16.msra.mxu0 %v2569
    %2594 = vmatpush.bf16.msra.mxu0 %v2567
    %2595 = vmatpush.bf16.msra.mxu0 %v2565
    %2596 = vmatpush.bf16.msra.mxu0 %v2563
    %2597 = vmatpush.bf16.msra.mxu0 %v2561
    %2598 = vmatpush.bf16.msra.mxu0 %v2559
    %2599 = vmatmul.bf16.gmra.mxu0 %v2503
    %v2600 = vpop.f32.mrf.mxu0
    %v2601 = vadd.f32 0.0, %v2600
    %v2602 = vpop.f32.mrf.mxu0
    %v2603 = vadd.f32 0.0, %v2602
    %2604 = vmatmul.bf16.gmra.mxu0 %v2504
    %v2605 = vpop.f32.mrf.mxu0
    %v2606 = vadd.f32 0.0, %v2605
    %v2607 = vpop.f32.mrf.mxu0
    %v2608 = vadd.f32 0.0, %v2607
    %2609 = vmatmul.bf16.gmra.mxu0 %v2505
    %v2610 = vpop.f32.mrf.mxu0
    %v2611 = vadd.f32 0.0, %v2610
    %v2612 = vpop.f32.mrf.mxu0
    %v2613 = vadd.f32 0.0, %v2612
    %2614 = vmatmul.bf16.gmra.mxu0 %v2506
    %v2615 = vpop.f32.mrf.mxu0
    %v2616 = vadd.f32 0.0, %v2615
    %v2617 = vpop.f32.mrf.mxu0
    %v2618 = vadd.f32 0.0, %v2617
    %2619 = vdwg.mxu0
    %2620 = vmatpush.bf16.msra.mxu0 %v2574
    %2621 = vmatpush.bf16.msra.mxu0 %v2572
    %2622 = vmatpush.bf16.msra.mxu0 %v2570
    %2623 = vmatpush.bf16.msra.mxu0 %v2568
    %2624 = vmatpush.bf16.msra.mxu0 %v2566
    %2625 = vmatpush.bf16.msra.mxu0 %v2564
    %2626 = vmatpush.bf16.msra.mxu0 %v2562
    %2627 = vmatpush.bf16.msra.mxu0 %v2560
    %2628 = vmatmul.bf16.gmra.mxu0 %v2503
    %v2629 = vpop.f32.mrf.mxu0
    %v2630 = vadd.f32 0.0, %v2629
    %v2631 = vpop.f32.mrf.mxu0
    %v2632 = vadd.f32 0.0, %v2631
    %2633 = vmatmul.bf16.gmra.mxu0 %v2504
    %v2634 = vpop.f32.mrf.mxu0
    %v2635 = vadd.f32 0.0, %v2634
    %v2636 = vpop.f32.mrf.mxu0
    %v2637 = vadd.f32 0.0, %v2636
    %2638 = vmatmul.bf16.gmra.mxu0 %v2505
    %v2639 = vpop.f32.mrf.mxu0
    %v2640 = vadd.f32 0.0, %v2639
    %v2641 = vpop.f32.mrf.mxu0
    %v2642 = vadd.f32 0.0, %v2641
    %2643 = vmatmul.bf16.gmra.mxu0 %v2506
    %v2644 = vpop.f32.mrf.mxu0
    %v2645 = vadd.f32 0.0, %v2644
    %v2646 = vpop.f32.mrf.mxu0
    %v2647 = vadd.f32 0.0, %v2646
    %2648 = vdwg.mxu0
    %v2649 = vld [vmem:[#allocation3] sm:$0xff]
    %v2650 = vld [vmem:[#allocation3 + $0x8] sm:$0xff]
    %v2651 = vld [vmem:[#allocation3 + $0x10] sm:$0xff]
    %v2652 = vld [vmem:[#allocation3 + $0x18] sm:$0xff]
    %v2653 = vld [vmem:[#allocation3 + $0x20] sm:$0xff]
    %v2654 = vld [vmem:[#allocation3 + $0x28] sm:$0xff]
    %v2655 = vld [vmem:[#allocation3 + $0x30] sm:$0xff]
    %v2656 = vld [vmem:[#allocation3 + $0x38] sm:$0xff]
    %v2657 = vld [vmem:[#allocation3 + $0x40] sm:$0xff]
    %v2658 = vld [vmem:[#allocation3 + $0x48] sm:$0xff]
    %v2659 = vld [vmem:[#allocation3 + $0x50] sm:$0xff]
    %v2660 = vld [vmem:[#allocation3 + $0x58] sm:$0xff]
    %v2661 = vld [vmem:[#allocation3 + $0x60] sm:$0xff]
    %v2662 = vld [vmem:[#allocation3 + $0x68] sm:$0xff]
    %v2663 = vld [vmem:[#allocation3 + $0x70] sm:$0xff]
    %v2664 = vld [vmem:[#allocation3 + $0x78] sm:$0xff]
    %v2665 = vadd.f32 %v2649, %v2601
    %v2666 = vadd.f32 %v2650, %v2630
    %v2667 = vadd.f32 %v2651, %v2603
    %v2668 = vadd.f32 %v2652, %v2632
    %v2669 = vadd.f32 %v2653, %v2606
    %v2670 = vadd.f32 %v2654, %v2635
    %v2671 = vadd.f32 %v2655, %v2608
    %v2672 = vadd.f32 %v2656, %v2637
    %v2673 = vadd.f32 %v2657, %v2611
    %v2674 = vadd.f32 %v2658, %v2640
    %v2675 = vadd.f32 %v2659, %v2613
    %v2676 = vadd.f32 %v2660, %v2642
    %v2677 = vadd.f32 %v2661, %v2616
    %v2678 = vadd.f32 %v2662, %v2645
    %v2679 = vadd.f32 %v2663, %v2618
    %v2680 = vadd.f32 %v2664, %v2647
    %2681 = vst [vmem:[#allocation3] sm:$0xff] %v2665
    %2682 = vst [vmem:[#allocation3 + $0x8] sm:$0xff] %v2666
    %2683 = vst [vmem:[#allocation3 + $0x10] sm:$0xff] %v2667
    %2684 = vst [vmem:[#allocation3 + $0x18] sm:$0xff] %v2668
    %2685 = vst [vmem:[#allocation3 + $0x20] sm:$0xff] %v2669
    %2686 = vst [vmem:[#allocation3 + $0x28] sm:$0xff] %v2670
    %2687 = vst [vmem:[#allocation3 + $0x30] sm:$0xff] %v2671
    %2688 = vst [vmem:[#allocation3 + $0x38] sm:$0xff] %v2672
    %2689 = vst [vmem:[#allocation3 + $0x40] sm:$0xff] %v2673
    %2690 = vst [vmem:[#allocation3 + $0x48] sm:$0xff] %v2674
    %2691 = vst [vmem:[#allocation3 + $0x50] sm:$0xff] %v2675
    %2692 = vst [vmem:[#allocation3 + $0x58] sm:$0xff] %v2676
    %2693 = vst [vmem:[#allocation3 + $0x60] sm:$0xff] %v2677
    %2694 = vst [vmem:[#allocation3 + $0x68] sm:$0xff] %v2678
    %2695 = vst [vmem:[#allocation3 + $0x70] sm:$0xff] %v2679
    %2696 = vst [vmem:[#allocation3 + $0x78] sm:$0xff] %v2680
    %v2697 = vld [vmem:[%s2204] sm:$0xf]
    %v2698 = vld [vmem:[%s2204 + $0x4] sm:$0xf]
    %v2699 = vld [vmem:[%s2204 + $0x8] sm:$0xf]
    %v2700 = vld [vmem:[%s2204 + $0xc] sm:$0xf]
    %v2701 = vld [vmem:[%s2204 + $0x10] sm:$0xf]
    %v2702 = vld [vmem:[%s2204 + $0x14] sm:$0xf]
    %v2703 = vld [vmem:[%s2204 + $0x18] sm:$0xf]
    %v2704 = vld [vmem:[%s2204 + $0x1c] sm:$0xf]
    %s2705 = scalar_lea.vmem [#allocation5], 256
    %v2706 = vld [vmem:[%s2705] sm:$0xff]
    %v2707 = vld [vmem:[%s2705 + $0x8] sm:$0xff]
    %v2708 = vld [vmem:[%s2705 + $0x10] sm:$0xff]
    %v2709 = vld [vmem:[%s2705 + $0x18] sm:$0xff]
    %v2710 = vld [vmem:[%s2705 + $0x20] sm:$0xff]
    %v2711 = vld [vmem:[%s2705 + $0x28] sm:$0xff]
    %v2712 = vld [vmem:[%s2705 + $0x30] sm:$0xff]
    %v2713 = vld [vmem:[%s2705 + $0x38] sm:$0xff]
    %v2714 = vld [vmem:[%s2705 + $0x40] sm:$0xff]
    %v2715 = vld [vmem:[%s2705 + $0x48] sm:$0xff]
    %v2716 = vld [vmem:[%s2705 + $0x50] sm:$0xff]
    %v2717 = vld [vmem:[%s2705 + $0x58] sm:$0xff]
    %v2718 = vld [vmem:[%s2705 + $0x60] sm:$0xff]
    %v2719 = vld [vmem:[%s2705 + $0x68] sm:$0xff]
    %v2720 = vld [vmem:[%s2705 + $0x70] sm:$0xff]
    %v2721 = vld [vmem:[%s2705 + $0x78] sm:$0xff]
    %v2730 = vunpack.c.l.b16 %v2697
    %v2731 = vunpack.c.l.b16 %v2698
    %v2732 = vunpack.c.l.b16 %v2699
    %v2733 = vunpack.c.l.b16 %v2700
    %v2734 = vunpack.c.l.b16 %v2701
    %v2735 = vunpack.c.l.b16 %v2702
    %v2736 = vunpack.c.l.b16 %v2703
    %v2737 = vunpack.c.l.b16 %v2704
    %v2738 = vpack.c.b16 %v2731, %v2730
    %v2739 = vpack.c.b16 %v2733, %v2732
    %v2740 = vpack.c.b16 %v2735, %v2734
    %v2741 = vpack.c.b16 %v2737, %v2736
    %v2762 = vunpack.c.l.b16 %v2706
    %v2763 = vunpack.c.h.b16 %v2706
    %v2764 = vunpack.c.l.b16 %v2707
    %v2765 = vunpack.c.h.b16 %v2707
    %v2766 = vunpack.c.l.b16 %v2708
    %v2767 = vunpack.c.h.b16 %v2708
    %v2768 = vunpack.c.l.b16 %v2709
    %v2769 = vunpack.c.h.b16 %v2709
    %v2770 = vunpack.c.l.b16 %v2710
    %v2771 = vunpack.c.h.b16 %v2710
    %v2772 = vunpack.c.l.b16 %v2711
    %v2773 = vunpack.c.h.b16 %v2711
    %v2774 = vunpack.c.l.b16 %v2712
    %v2775 = vunpack.c.h.b16 %v2712
    %v2776 = vunpack.c.l.b16 %v2713
    %v2777 = vunpack.c.h.b16 %v2713
    %v2778 = vunpack.c.l.b16 %v2714
    %v2779 = vunpack.c.h.b16 %v2714
    %v2780 = vunpack.c.l.b16 %v2715
    %v2781 = vunpack.c.h.b16 %v2715
    %v2782 = vunpack.c.l.b16 %v2716
    %v2783 = vunpack.c.h.b16 %v2716
    %v2784 = vunpack.c.l.b16 %v2717
    %v2785 = vunpack.c.h.b16 %v2717
    %v2786 = vunpack.c.l.b16 %v2718
    %v2787 = vunpack.c.h.b16 %v2718
    %v2788 = vunpack.c.l.b16 %v2719
    %v2789 = vunpack.c.h.b16 %v2719
    %v2790 = vunpack.c.l.b16 %v2720
    %v2791 = vunpack.c.h.b16 %v2720
    %v2792 = vunpack.c.l.b16 %v2721
    %v2793 = vunpack.c.h.b16 %v2721
    %v2794 = vpack.c.b16 %v2764, %v2762
    %v2795 = vpack.c.b16 %v2765, %v2763
    %v2796 = vpack.c.b16 %v2768, %v2766
    %v2797 = vpack.c.b16 %v2769, %v2767
    %v2798 = vpack.c.b16 %v2772, %v2770
    %v2799 = vpack.c.b16 %v2773, %v2771
    %v2800 = vpack.c.b16 %v2776, %v2774
    %v2801 = vpack.c.b16 %v2777, %v2775
    %v2802 = vpack.c.b16 %v2780, %v2778
    %v2803 = vpack.c.b16 %v2781, %v2779
    %v2804 = vpack.c.b16 %v2784, %v2782
    %v2805 = vpack.c.b16 %v2785, %v2783
    %v2806 = vpack.c.b16 %v2788, %v2786
    %v2807 = vpack.c.b16 %v2789, %v2787
    %v2808 = vpack.c.b16 %v2792, %v2790
    %v2809 = vpack.c.b16 %v2793, %v2791
    %2826 = vmatpush.bf16.msra.mxu0 %v2808
    %2827 = vmatpush.bf16.msra.mxu0 %v2806
    %2828 = vmatpush.bf16.msra.mxu0 %v2804
    %2829 = vmatpush.bf16.msra.mxu0 %v2802
    %2830 = vmatpush.bf16.msra.mxu0 %v2800
    %2831 = vmatpush.bf16.msra.mxu0 %v2798
    %2832 = vmatpush.bf16.msra.mxu0 %v2796
    %2833 = vmatpush.bf16.msra.mxu0 %v2794
    %2834 = vmatmul.bf16.gmra.mxu0 %v2738
    %v2835 = vpop.f32.mrf.mxu0
    %v2836 = vadd.f32 0.0, %v2835
    %v2837 = vpop.f32.mrf.mxu0
    %v2838 = vadd.f32 0.0, %v2837
    %2839 = vmatmul.bf16.gmra.mxu0 %v2739
    %v2840 = vpop.f32.mrf.mxu0
    %v2841 = vadd.f32 0.0, %v2840
    %v2842 = vpop.f32.mrf.mxu0
    %v2843 = vadd.f32 0.0, %v2842
    %2844 = vmatmul.bf16.gmra.mxu0 %v2740
    %v2845 = vpop.f32.mrf.mxu0
    %v2846 = vadd.f32 0.0, %v2845
    %v2847 = vpop.f32.mrf.mxu0
    %v2848 = vadd.f32 0.0, %v2847
    %2849 = vmatmul.bf16.gmra.mxu0 %v2741
    %v2850 = vpop.f32.mrf.mxu0
    %v2851 = vadd.f32 0.0, %v2850
    %v2852 = vpop.f32.mrf.mxu0
    %v2853 = vadd.f32 0.0, %v2852
    %2854 = vdwg.mxu0
    %2855 = vmatpush.bf16.msra.mxu0 %v2809
    %2856 = vmatpush.bf16.msra.mxu0 %v2807
    %2857 = vmatpush.bf16.msra.mxu0 %v2805
    %2858 = vmatpush.bf16.msra.mxu0 %v2803
    %2859 = vmatpush.bf16.msra.mxu0 %v2801
    %2860 = vmatpush.bf16.msra.mxu0 %v2799
    %2861 = vmatpush.bf16.msra.mxu0 %v2797
    %2862 = vmatpush.bf16.msra.mxu0 %v2795
    %2863 = vmatmul.bf16.gmra.mxu0 %v2738
    %v2864 = vpop.f32.mrf.mxu0
    %v2865 = vadd.f32 0.0, %v2864
    %v2866 = vpop.f32.mrf.mxu0
    %v2867 = vadd.f32 0.0, %v2866
    %2868 = vmatmul.bf16.gmra.mxu0 %v2739
    %v2869 = vpop.f32.mrf.mxu0
    %v2870 = vadd.f32 0.0, %v2869
    %v2871 = vpop.f32.mrf.mxu0
    %v2872 = vadd.f32 0.0, %v2871
    %2873 = vmatmul.bf16.gmra.mxu0 %v2740
    %v2874 = vpop.f32.mrf.mxu0
    %v2875 = vadd.f32 0.0, %v2874
    %v2876 = vpop.f32.mrf.mxu0
    %v2877 = vadd.f32 0.0, %v2876
    %2878 = vmatmul.bf16.gmra.mxu0 %v2741
    %v2879 = vpop.f32.mrf.mxu0
    %v2880 = vadd.f32 0.0, %v2879
    %v2881 = vpop.f32.mrf.mxu0
    %v2882 = vadd.f32 0.0, %v2881
    %2883 = vdwg.mxu0
    %v2884 = vld [vmem:[#allocation3] sm:$0xff]
    %v2885 = vld [vmem:[#allocation3 + $0x8] sm:$0xff]
    %v2886 = vld [vmem:[#allocation3 + $0x10] sm:$0xff]
    %v2887 = vld [vmem:[#allocation3 + $0x18] sm:$0xff]
    %v2888 = vld [vmem:[#allocation3 + $0x20] sm:$0xff]
    %v2889 = vld [vmem:[#allocation3 + $0x28] sm:$0xff]
    %v2890 = vld [vmem:[#allocation3 + $0x30] sm:$0xff]
    %v2891 = vld [vmem:[#allocation3 + $0x38] sm:$0xff]
    %v2892 = vld [vmem:[#allocation3 + $0x40] sm:$0xff]
    %v2893 = vld [vmem:[#allocation3 + $0x48] sm:$0xff]
    %v2894 = vld [vmem:[#allocation3 + $0x50] sm:$0xff]
    %v2895 = vld [vmem:[#allocation3 + $0x58] sm:$0xff]
    %v2896 = vld [vmem:[#allocation3 + $0x60] sm:$0xff]
    %v2897 = vld [vmem:[#allocation3 + $0x68] sm:$0xff]
    %v2898 = vld [vmem:[#allocation3 + $0x70] sm:$0xff]
    %v2899 = vld [vmem:[#allocation3 + $0x78] sm:$0xff]
    %v2900 = vadd.f32 %v2884, %v2836
    %v2901 = vadd.f32 %v2885, %v2865
    %v2902 = vadd.f32 %v2886, %v2838
    %v2903 = vadd.f32 %v2887, %v2867
    %v2904 = vadd.f32 %v2888, %v2841
    %v2905 = vadd.f32 %v2889, %v2870
    %v2906 = vadd.f32 %v2890, %v2843
    %v2907 = vadd.f32 %v2891, %v2872
    %v2908 = vadd.f32 %v2892, %v2846
    %v2909 = vadd.f32 %v2893, %v2875
    %v2910 = vadd.f32 %v2894, %v2848
    %v2911 = vadd.f32 %v2895, %v2877
    %v2912 = vadd.f32 %v2896, %v2851
    %v2913 = vadd.f32 %v2897, %v2880
    %v2914 = vadd.f32 %v2898, %v2853
    %v2915 = vadd.f32 %v2899, %v2882
    %2916 = vst [vmem:[#allocation3] sm:$0xff] %v2900
    %2917 = vst [vmem:[#allocation3 + $0x8] sm:$0xff] %v2901
    %2918 = vst [vmem:[#allocation3 + $0x10] sm:$0xff] %v2902
    %2919 = vst [vmem:[#allocation3 + $0x18] sm:$0xff] %v2903
    %2920 = vst [vmem:[#allocation3 + $0x20] sm:$0xff] %v2904
    %2921 = vst [vmem:[#allocation3 + $0x28] sm:$0xff] %v2905
    %2922 = vst [vmem:[#allocation3 + $0x30] sm:$0xff] %v2906
    %2923 = vst [vmem:[#allocation3 + $0x38] sm:$0xff] %v2907
    %2924 = vst [vmem:[#allocation3 + $0x40] sm:$0xff] %v2908
    %2925 = vst [vmem:[#allocation3 + $0x48] sm:$0xff] %v2909
    %2926 = vst [vmem:[#allocation3 + $0x50] sm:$0xff] %v2910
    %2927 = vst [vmem:[#allocation3 + $0x58] sm:$0xff] %v2911
    %2928 = vst [vmem:[#allocation3 + $0x60] sm:$0xff] %v2912
    %2929 = vst [vmem:[#allocation3 + $0x68] sm:$0xff] %v2913
    %2930 = vst [vmem:[#allocation3 + $0x70] sm:$0xff] %v2914
    %2931 = vst [vmem:[#allocation3 + $0x78] sm:$0xff] %v2915
    %v2932 = vld [vmem:[%s2210] sm:$0xf]
    %v2933 = vld [vmem:[%s2210 + $0x4] sm:$0xf]
    %v2934 = vld [vmem:[%s2210 + $0x8] sm:$0xf]
    %v2935 = vld [vmem:[%s2210 + $0xc] sm:$0xf]
    %v2936 = vld [vmem:[%s2210 + $0x10] sm:$0xf]
    %v2937 = vld [vmem:[%s2210 + $0x14] sm:$0xf]
    %v2938 = vld [vmem:[%s2210 + $0x18] sm:$0xf]
    %v2939 = vld [vmem:[%s2210 + $0x1c] sm:$0xf]
    %s2940 = scalar_lea.vmem [#allocation5], 384
    %v2941 = vld [vmem:[%s2940] sm:$0xff]
    %v2942 = vld [vmem:[%s2940 + $0x8] sm:$0xff]
    %v2943 = vld [vmem:[%s2940 + $0x10] sm:$0xff]
    %v2944 = vld [vmem:[%s2940 + $0x18] sm:$0xff]
    %v2945 = vld [vmem:[%s2940 + $0x20] sm:$0xff]
    %v2946 = vld [vmem:[%s2940 + $0x28] sm:$0xff]
    %v2947 = vld [vmem:[%s2940 + $0x30] sm:$0xff]
    %v2948 = vld [vmem:[%s2940 + $0x38] sm:$0xff]
    %v2949 = vld [vmem:[%s2940 + $0x40] sm:$0xff]
    %v2950 = vld [vmem:[%s2940 + $0x48] sm:$0xff]
    %v2951 = vld [vmem:[%s2940 + $0x50] sm:$0xff]
    %v2952 = vld [vmem:[%s2940 + $0x58] sm:$0xff]
    %v2953 = vld [vmem:[%s2940 + $0x60] sm:$0xff]
    %v2954 = vld [vmem:[%s2940 + $0x68] sm:$0xff]
    %v2955 = vld [vmem:[%s2940 + $0x70] sm:$0xff]
    %v2956 = vld [vmem:[%s2940 + $0x78] sm:$0xff]
    %v2965 = vunpack.c.l.b16 %v2932
    %v2966 = vunpack.c.l.b16 %v2933
    %v2967 = vunpack.c.l.b16 %v2934
    %v2968 = vunpack.c.l.b16 %v2935
    %v2969 = vunpack.c.l.b16 %v2936
    %v2970 = vunpack.c.l.b16 %v2937
    %v2971 = vunpack.c.l.b16 %v2938
    %v2972 = vunpack.c.l.b16 %v2939
    %v2973 = vpack.c.b16 %v2966, %v2965
    %v2974 = vpack.c.b16 %v2968, %v2967
    %v2975 = vpack.c.b16 %v2970, %v2969
    %v2976 = vpack.c.b16 %v2972, %v2971
    %v2997 = vunpack.c.l.b16 %v2941
    %v2998 = vunpack.c.h.b16 %v2941
    %v2999 = vunpack.c.l.b16 %v2942
    %v3000 = vunpack.c.h.b16 %v2942
    %v3001 = vunpack.c.l.b16 %v2943
    %v3002 = vunpack.c.h.b16 %v2943
    %v3003 = vunpack.c.l.b16 %v2944
    %v3004 = vunpack.c.h.b16 %v2944
    %v3005 = vunpack.c.l.b16 %v2945
    %v3006 = vunpack.c.h.b16 %v2945
    %v3007 = vunpack.c.l.b16 %v2946
    %v3008 = vunpack.c.h.b16 %v2946
    %v3009 = vunpack.c.l.b16 %v2947
    %v3010 = vunpack.c.h.b16 %v2947
    %v3011 = vunpack.c.l.b16 %v2948
    %v3012 = vunpack.c.h.b16 %v2948
    %v3013 = vunpack.c.l.b16 %v2949
    %v3014 = vunpack.c.h.b16 %v2949
    %v3015 = vunpack.c.l.b16 %v2950
    %v3016 = vunpack.c.h.b16 %v2950
    %v3017 = vunpack.c.l.b16 %v2951
    %v3018 = vunpack.c.h.b16 %v2951
    %v3019 = vunpack.c.l.b16 %v2952
    %v3020 = vunpack.c.h.b16 %v2952
    %v3021 = vunpack.c.l.b16 %v2953
    %v3022 = vunpack.c.h.b16 %v2953
    %v3023 = vunpack.c.l.b16 %v2954
    %v3024 = vunpack.c.h.b16 %v2954
    %v3025 = vunpack.c.l.b16 %v2955
    %v3026 = vunpack.c.h.b16 %v2955
    %v3027 = vunpack.c.l.b16 %v2956
    %v3028 = vunpack.c.h.b16 %v2956
    %v3029 = vpack.c.b16 %v2999, %v2997
    %v3030 = vpack.c.b16 %v3000, %v2998
    %v3031 = vpack.c.b16 %v3003, %v3001
    %v3032 = vpack.c.b16 %v3004, %v3002
    %v3033 = vpack.c.b16 %v3007, %v3005
    %v3034 = vpack.c.b16 %v3008, %v3006
    %v3035 = vpack.c.b16 %v3011, %v3009
    %v3036 = vpack.c.b16 %v3012, %v3010
    %v3037 = vpack.c.b16 %v3015, %v3013
    %v3038 = vpack.c.b16 %v3016, %v3014
    %v3039 = vpack.c.b16 %v3019, %v3017
    %v3040 = vpack.c.b16 %v3020, %v3018
    %v3041 = vpack.c.b16 %v3023, %v3021
    %v3042 = vpack.c.b16 %v3024, %v3022
    %v3043 = vpack.c.b16 %v3027, %v3025
    %v3044 = vpack.c.b16 %v3028, %v3026
    %3061 = vmatpush.bf16.msra.mxu0 %v3043
    %3062 = vmatpush.bf16.msra.mxu0 %v3041
    %3063 = vmatpush.bf16.msra.mxu0 %v3039
    %3064 = vmatpush.bf16.msra.mxu0 %v3037
    %3065 = vmatpush.bf16.msra.mxu0 %v3035
    %3066 = vmatpush.bf16.msra.mxu0 %v3033
    %3067 = vmatpush.bf16.msra.mxu0 %v3031
    %3068 = vmatpush.bf16.msra.mxu0 %v3029
    %3069 = vmatmul.bf16.gmra.mxu0 %v2973
    %v3070 = vpop.f32.mrf.mxu0
    %v3071 = vadd.f32 0.0, %v3070
    %v3072 = vpop.f32.mrf.mxu0
    %v3073 = vadd.f32 0.0, %v3072
    %3074 = vmatmul.bf16.gmra.mxu0 %v2974
    %v3075 = vpop.f32.mrf.mxu0
    %v3076 = vadd.f32 0.0, %v3075
    %v3077 = vpop.f32.mrf.mxu0
    %v3078 = vadd.f32 0.0, %v3077
    %3079 = vmatmul.bf16.gmra.mxu0 %v2975
    %v3080 = vpop.f32.mrf.mxu0
    %v3081 = vadd.f32 0.0, %v3080
    %v3082 = vpop.f32.mrf.mxu0
    %v3083 = vadd.f32 0.0, %v3082
    %3084 = vmatmul.bf16.gmra.mxu0 %v2976
    %v3085 = vpop.f32.mrf.mxu0
    %v3086 = vadd.f32 0.0, %v3085
    %v3087 = vpop.f32.mrf.mxu0
    %v3088 = vadd.f32 0.0, %v3087
    %3089 = vdwg.mxu0
    %3090 = vmatpush.bf16.msra.mxu0 %v3044
    %3091 = vmatpush.bf16.msra.mxu0 %v3042
    %3092 = vmatpush.bf16.msra.mxu0 %v3040
    %3093 = vmatpush.bf16.msra.mxu0 %v3038
    %3094 = vmatpush.bf16.msra.mxu0 %v3036
    %3095 = vmatpush.bf16.msra.mxu0 %v3034
    %3096 = vmatpush.bf16.msra.mxu0 %v3032
    %3097 = vmatpush.bf16.msra.mxu0 %v3030
    %3098 = vmatmul.bf16.gmra.mxu0 %v2973
    %v3099 = vpop.f32.mrf.mxu0
    %v3100 = vadd.f32 0.0, %v3099
    %v3101 = vpop.f32.mrf.mxu0
    %v3102 = vadd.f32 0.0, %v3101
    %3103 = vmatmul.bf16.gmra.mxu0 %v2974
    %v3104 = vpop.f32.mrf.mxu0
    %v3105 = vadd.f32 0.0, %v3104
    %v3106 = vpop.f32.mrf.mxu0
    %v3107 = vadd.f32 0.0, %v3106
    %3108 = vmatmul.bf16.gmra.mxu0 %v2975
    %v3109 = vpop.f32.mrf.mxu0
    %v3110 = vadd.f32 0.0, %v3109
    %v3111 = vpop.f32.mrf.mxu0
    %v3112 = vadd.f32 0.0, %v3111
    %3113 = vmatmul.bf16.gmra.mxu0 %v2976
    %v3114 = vpop.f32.mrf.mxu0
    %v3115 = vadd.f32 0.0, %v3114
    %v3116 = vpop.f32.mrf.mxu0
    %v3117 = vadd.f32 0.0, %v3116
    %3118 = vdwg.mxu0
    %v3119 = vld [vmem:[#allocation3] sm:$0xff]
    %v3120 = vld [vmem:[#allocation3 + $0x8] sm:$0xff]
    %v3121 = vld [vmem:[#allocation3 + $0x10] sm:$0xff]
    %v3122 = vld [vmem:[#allocation3 + $0x18] sm:$0xff]
    %v3123 = vld [vmem:[#allocation3 + $0x20] sm:$0xff]
    %v3124 = vld [vmem:[#allocation3 + $0x28] sm:$0xff]
    %v3125 = vld [vmem:[#allocation3 + $0x30] sm:$0xff]
    %v3126 = vld [vmem:[#allocation3 + $0x38] sm:$0xff]
    %v3127 = vld [vmem:[#allocation3 + $0x40] sm:$0xff]
    %v3128 = vld [vmem:[#allocation3 + $0x48] sm:$0xff]
    %v3129 = vld [vmem:[#allocation3 + $0x50] sm:$0xff]
    %v3130 = vld [vmem:[#allocation3 + $0x58] sm:$0xff]
    %v3131 = vld [vmem:[#allocation3 + $0x60] sm:$0xff]
    %v3132 = vld [vmem:[#allocation3 + $0x68] sm:$0xff]
    %v3133 = vld [vmem:[#allocation3 + $0x70] sm:$0xff]
    %v3134 = vld [vmem:[#allocation3 + $0x78] sm:$0xff]
    %v3135 = vadd.f32 %v3119, %v3071
    %v3136 = vadd.f32 %v3120, %v3100
    %v3137 = vadd.f32 %v3121, %v3073
    %v3138 = vadd.f32 %v3122, %v3102
    %v3139 = vadd.f32 %v3123, %v3076
    %v3140 = vadd.f32 %v3124, %v3105
    %v3141 = vadd.f32 %v3125, %v3078
    %v3142 = vadd.f32 %v3126, %v3107
    %v3143 = vadd.f32 %v3127, %v3081
    %v3144 = vadd.f32 %v3128, %v3110
    %v3145 = vadd.f32 %v3129, %v3083
    %v3146 = vadd.f32 %v3130, %v3112
    %v3147 = vadd.f32 %v3131, %v3086
    %v3148 = vadd.f32 %v3132, %v3115
    %v3149 = vadd.f32 %v3133, %v3088
    %v3150 = vadd.f32 %v3134, %v3117
    %3151 = vst [vmem:[#allocation3] sm:$0xff] %v3135
    %3152 = vst [vmem:[#allocation3 + $0x8] sm:$0xff] %v3136
    %3153 = vst [vmem:[#allocation3 + $0x10] sm:$0xff] %v3137
    %3154 = vst [vmem:[#allocation3 + $0x18] sm:$0xff] %v3138
    %3155 = vst [vmem:[#allocation3 + $0x20] sm:$0xff] %v3139
    %3156 = vst [vmem:[#allocation3 + $0x28] sm:$0xff] %v3140
    %3157 = vst [vmem:[#allocation3 + $0x30] sm:$0xff] %v3141
    %3158 = vst [vmem:[#allocation3 + $0x38] sm:$0xff] %v3142
    %3159 = vst [vmem:[#allocation3 + $0x40] sm:$0xff] %v3143
    %3160 = vst [vmem:[#allocation3 + $0x48] sm:$0xff] %v3144
    %3161 = vst [vmem:[#allocation3 + $0x50] sm:$0xff] %v3145
    %3162 = vst [vmem:[#allocation3 + $0x58] sm:$0xff] %v3146
    %3163 = vst [vmem:[#allocation3 + $0x60] sm:$0xff] %v3147
    %3164 = vst [vmem:[#allocation3 + $0x68] sm:$0xff] %v3148
    %3165 = vst [vmem:[#allocation3 + $0x70] sm:$0xff] %v3149
    %3166 = vst [vmem:[#allocation3 + $0x78] sm:$0xff] %v3150
    %v3167 = vld [vmem:[%s2216] sm:$0xf]
    %v3168 = vld [vmem:[%s2216 + $0x4] sm:$0xf]
    %v3169 = vld [vmem:[%s2216 + $0x8] sm:$0xf]
    %v3170 = vld [vmem:[%s2216 + $0xc] sm:$0xf]
    %v3171 = vld [vmem:[%s2216 + $0x10] sm:$0xf]
    %v3172 = vld [vmem:[%s2216 + $0x14] sm:$0xf]
    %v3173 = vld [vmem:[%s2216 + $0x18] sm:$0xf]
    %v3174 = vld [vmem:[%s2216 + $0x1c] sm:$0xf]
    %s3175 = scalar_lea.vmem [#allocation5], 512
    %v3176 = vld [vmem:[%s3175] sm:$0xff]
    %v3177 = vld [vmem:[%s3175 + $0x8] sm:$0xff]
    %v3178 = vld [vmem:[%s3175 + $0x10] sm:$0xff]
    %v3179 = vld [vmem:[%s3175 + $0x18] sm:$0xff]
    %v3180 = vld [vmem:[%s3175 + $0x20] sm:$0xff]
    %v3181 = vld [vmem:[%s3175 + $0x28] sm:$0xff]
    %v3182 = vld [vmem:[%s3175 + $0x30] sm:$0xff]
    %v3183 = vld [vmem:[%s3175 + $0x38] sm:$0xff]
    %v3184 = vld [vmem:[%s3175 + $0x40] sm:$0xff]
    %v3185 = vld [vmem:[%s3175 + $0x48] sm:$0xff]
    %v3186 = vld [vmem:[%s3175 + $0x50] sm:$0xff]
    %v3187 = vld [vmem:[%s3175 + $0x58] sm:$0xff]
    %v3188 = vld [vmem:[%s3175 + $0x60] sm:$0xff]
    %v3189 = vld [vmem:[%s3175 + $0x68] sm:$0xff]
    %v3190 = vld [vmem:[%s3175 + $0x70] sm:$0xff]
    %v3191 = vld [vmem:[%s3175 + $0x78] sm:$0xff]
    %v3200 = vunpack.c.l.b16 %v3167
    %v3201 = vunpack.c.l.b16 %v3168
    %v3202 = vunpack.c.l.b16 %v3169
    %v3203 = vunpack.c.l.b16 %v3170
    %v3204 = vunpack.c.l.b16 %v3171
    %v3205 = vunpack.c.l.b16 %v3172
    %v3206 = vunpack.c.l.b16 %v3173
    %v3207 = vunpack.c.l.b16 %v3174
    %v3208 = vpack.c.b16 %v3201, %v3200
    %v3209 = vpack.c.b16 %v3203, %v3202
    %v3210 = vpack.c.b16 %v3205, %v3204
    %v3211 = vpack.c.b16 %v3207, %v3206
    %v3232 = vunpack.c.l.b16 %v3176
    %v3233 = vunpack.c.h.b16 %v3176
    %v3234 = vunpack.c.l.b16 %v3177
    %v3235 = vunpack.c.h.b16 %v3177
    %v3236 = vunpack.c.l.b16 %v3178
    %v3237 = vunpack.c.h.b16 %v3178
    %v3238 = vunpack.c.l.b16 %v3179
    %v3239 = vunpack.c.h.b16 %v3179
    %v3240 = vunpack.c.l.b16 %v3180
    %v3241 = vunpack.c.h.b16 %v3180
    %v3242 = vunpack.c.l.b16 %v3181
    %v3243 = vunpack.c.h.b16 %v3181
    %v3244 = vunpack.c.l.b16 %v3182
    %v3245 = vunpack.c.h.b16 %v3182
    %v3246 = vunpack.c.l.b16 %v3183
    %v3247 = vunpack.c.h.b16 %v3183
    %v3248 = vunpack.c.l.b16 %v3184
    %v3249 = vunpack.c.h.b16 %v3184
    %v3250 = vunpack.c.l.b16 %v3185
    %v3251 = vunpack.c.h.b16 %v3185
    %v3252 = vunpack.c.l.b16 %v3186
    %v3253 = vunpack.c.h.b16 %v3186
    %v3254 = vunpack.c.l.b16 %v3187
    %v3255 = vunpack.c.h.b16 %v3187
    %v3256 = vunpack.c.l.b16 %v3188
    %v3257 = vunpack.c.h.b16 %v3188
    %v3258 = vunpack.c.l.b16 %v3189
    %v3259 = vunpack.c.h.b16 %v3189
    %v3260 = vunpack.c.l.b16 %v3190
    %v3261 = vunpack.c.h.b16 %v3190
    %v3262 = vunpack.c.l.b16 %v3191
    %v3263 = vunpack.c.h.b16 %v3191
    %v3264 = vpack.c.b16 %v3234, %v3232
    %v3265 = vpack.c.b16 %v3235, %v3233
    %v3266 = vpack.c.b16 %v3238, %v3236
    %v3267 = vpack.c.b16 %v3239, %v3237
    %v3268 = vpack.c.b16 %v3242, %v3240
    %v3269 = vpack.c.b16 %v3243, %v3241
    %v3270 = vpack.c.b16 %v3246, %v3244
    %v3271 = vpack.c.b16 %v3247, %v3245
    %v3272 = vpack.c.b16 %v3250, %v3248
    %v3273 = vpack.c.b16 %v3251, %v3249
    %v3274 = vpack.c.b16 %v3254, %v3252
    %v3275 = vpack.c.b16 %v3255, %v3253
    %v3276 = vpack.c.b16 %v3258, %v3256
    %v3277 = vpack.c.b16 %v3259, %v3257
    %v3278 = vpack.c.b16 %v3262, %v3260
    %v3279 = vpack.c.b16 %v3263, %v3261
    %3296 = vmatpush.bf16.msra.mxu0 %v3278
    %3297 = vmatpush.bf16.msra.mxu0 %v3276
    %3298 = vmatpush.bf16.msra.mxu0 %v3274
    %3299 = vmatpush.bf16.msra.mxu0 %v3272
    %3300 = vmatpush.bf16.msra.mxu0 %v3270
    %3301 = vmatpush.bf16.msra.mxu0 %v3268
    %3302 = vmatpush.bf16.msra.mxu0 %v3266
    %3303 = vmatpush.bf16.msra.mxu0 %v3264
    %3304 = vmatmul.bf16.gmra.mxu0 %v3208
    %v3305 = vpop.f32.mrf.mxu0
    %v3306 = vadd.f32 0.0, %v3305
    %v3307 = vpop.f32.mrf.mxu0
    %v3308 = vadd.f32 0.0, %v3307
    %3309 = vmatmul.bf16.gmra.mxu0 %v3209
    %v3310 = vpop.f32.mrf.mxu0
    %v3311 = vadd.f32 0.0, %v3310
    %v3312 = vpop.f32.mrf.mxu0
    %v3313 = vadd.f32 0.0, %v3312
    %3314 = vmatmul.bf16.gmra.mxu0 %v3210
    %v3315 = vpop.f32.mrf.mxu0
    %v3316 = vadd.f32 0.0, %v3315
    %v3317 = vpop.f32.mrf.mxu0
    %v3318 = vadd.f32 0.0, %v3317
    %3319 = vmatmul.bf16.gmra.mxu0 %v3211
    %v3320 = vpop.f32.mrf.mxu0
    %v3321 = vadd.f32 0.0, %v3320
    %v3322 = vpop.f32.mrf.mxu0
    %v3323 = vadd.f32 0.0, %v3322
    %3324 = vdwg.mxu0
    %3325 = vmatpush.bf16.msra.mxu0 %v3279
    %3326 = vmatpush.bf16.msra.mxu0 %v3277
    %3327 = vmatpush.bf16.msra.mxu0 %v3275
    %3328 = vmatpush.bf16.msra.mxu0 %v3273
    %3329 = vmatpush.bf16.msra.mxu0 %v3271
    %3330 = vmatpush.bf16.msra.mxu0 %v3269
    %3331 = vmatpush.bf16.msra.mxu0 %v3267
    %3332 = vmatpush.bf16.msra.mxu0 %v3265
    %3333 = vmatmul.bf16.gmra.mxu0 %v3208
    %v3334 = vpop.f32.mrf.mxu0
    %v3335 = vadd.f32 0.0, %v3334
    %v3336 = vpop.f32.mrf.mxu0
    %v3337 = vadd.f32 0.0, %v3336
    %3338 = vmatmul.bf16.gmra.mxu0 %v3209
    %v3339 = vpop.f32.mrf.mxu0
    %v3340 = vadd.f32 0.0, %v3339
    %v3341 = vpop.f32.mrf.mxu0
    %v3342 = vadd.f32 0.0, %v3341
    %3343 = vmatmul.bf16.gmra.mxu0 %v3210
    %v3344 = vpop.f32.mrf.mxu0
    %v3345 = vadd.f32 0.0, %v3344
    %v3346 = vpop.f32.mrf.mxu0
    %v3347 = vadd.f32 0.0, %v3346
    %3348 = vmatmul.bf16.gmra.mxu0 %v3211
    %v3349 = vpop.f32.mrf.mxu0
    %v3350 = vadd.f32 0.0, %v3349
    %v3351 = vpop.f32.mrf.mxu0
    %v3352 = vadd.f32 0.0, %v3351
    %3353 = vdwg.mxu0
    %v3354 = vld [vmem:[#allocation3] sm:$0xff]
    %v3355 = vld [vmem:[#allocation3 + $0x8] sm:$0xff]
    %v3356 = vld [vmem:[#allocation3 + $0x10] sm:$0xff]
    %v3357 = vld [vmem:[#allocation3 + $0x18] sm:$0xff]
    %v3358 = vld [vmem:[#allocation3 + $0x20] sm:$0xff]
    %v3359 = vld [vmem:[#allocation3 + $0x28] sm:$0xff]
    %v3360 = vld [vmem:[#allocation3 + $0x30] sm:$0xff]
    %v3361 = vld [vmem:[#allocation3 + $0x38] sm:$0xff]
    %v3362 = vld [vmem:[#allocation3 + $0x40] sm:$0xff]
    %v3363 = vld [vmem:[#allocation3 + $0x48] sm:$0xff]
    %v3364 = vld [vmem:[#allocation3 + $0x50] sm:$0xff]
    %v3365 = vld [vmem:[#allocation3 + $0x58] sm:$0xff]
    %v3366 = vld [vmem:[#allocation3 + $0x60] sm:$0xff]
    %v3367 = vld [vmem:[#allocation3 + $0x68] sm:$0xff]
    %v3368 = vld [vmem:[#allocation3 + $0x70] sm:$0xff]
    %v3369 = vld [vmem:[#allocation3 + $0x78] sm:$0xff]
    %v3370 = vadd.f32 %v3354, %v3306
    %v3371 = vadd.f32 %v3355, %v3335
    %v3372 = vadd.f32 %v3356, %v3308
    %v3373 = vadd.f32 %v3357, %v3337
    %v3374 = vadd.f32 %v3358, %v3311
    %v3375 = vadd.f32 %v3359, %v3340
    %v3376 = vadd.f32 %v3360, %v3313
    %v3377 = vadd.f32 %v3361, %v3342
    %v3378 = vadd.f32 %v3362, %v3316
    %v3379 = vadd.f32 %v3363, %v3345
    %v3380 = vadd.f32 %v3364, %v3318
    %v3381 = vadd.f32 %v3365, %v3347
    %v3382 = vadd.f32 %v3366, %v3321
    %v3383 = vadd.f32 %v3367, %v3350
    %v3384 = vadd.f32 %v3368, %v3323
    %v3385 = vadd.f32 %v3369, %v3352
    %3386 = vst [vmem:[#allocation3] sm:$0xff] %v3370
    %3387 = vst [vmem:[#allocation3 + $0x8] sm:$0xff] %v3371
    %3388 = vst [vmem:[#allocation3 + $0x10] sm:$0xff] %v3372
    %3389 = vst [vmem:[#allocation3 + $0x18] sm:$0xff] %v3373
    %3390 = vst [vmem:[#allocation3 + $0x20] sm:$0xff] %v3374
    %3391 = vst [vmem:[#allocation3 + $0x28] sm:$0xff] %v3375
    %3392 = vst [vmem:[#allocation3 + $0x30] sm:$0xff] %v3376
    %3393 = vst [vmem:[#allocation3 + $0x38] sm:$0xff] %v3377
    %3394 = vst [vmem:[#allocation3 + $0x40] sm:$0xff] %v3378
    %3395 = vst [vmem:[#allocation3 + $0x48] sm:$0xff] %v3379
    %3396 = vst [vmem:[#allocation3 + $0x50] sm:$0xff] %v3380
    %3397 = vst [vmem:[#allocation3 + $0x58] sm:$0xff] %v3381
    %3398 = vst [vmem:[#allocation3 + $0x60] sm:$0xff] %v3382
    %3399 = vst [vmem:[#allocation3 + $0x68] sm:$0xff] %v3383
    %3400 = vst [vmem:[#allocation3 + $0x70] sm:$0xff] %v3384
    %3401 = vst [vmem:[#allocation3 + $0x78] sm:$0xff] %v3385
    %v3402 = vld [vmem:[#allocation3] sm:$0xff]
    %v3403 = vld [vmem:[#allocation3 + $0x10] sm:$0xff]
    %v3404 = vld [vmem:[#allocation3 + $0x20] sm:$0xff]
    %v3405 = vld [vmem:[#allocation3 + $0x30] sm:$0xff]
    %v3406 = vld [vmem:[#allocation3 + $0x40] sm:$0xff]
    %v3407 = vld [vmem:[#allocation3 + $0x50] sm:$0xff]
    %v3408 = vld [vmem:[#allocation3 + $0x60] sm:$0xff]
    %v3409 = vld [vmem:[#allocation3 + $0x70] sm:$0xff]
    %v3410 = vld [vmem:[#allocation3 + $0x8] sm:$0xff]
    %v3411 = vld [vmem:[#allocation3 + $0x18] sm:$0xff]
    %v3412 = vld [vmem:[#allocation3 + $0x28] sm:$0xff]
    %v3413 = vld [vmem:[#allocation3 + $0x38] sm:$0xff]
    %v3414 = vld [vmem:[#allocation3 + $0x48] sm:$0xff]
    %v3415 = vld [vmem:[#allocation3 + $0x58] sm:$0xff]
    %v3416 = vld [vmem:[#allocation3 + $0x68] sm:$0xff]
    %v3417 = vld [vmem:[#allocation3 + $0x78] sm:$0xff]
    %v3418 = vmax.f32 %v3402, %v3410
    %v3419 = vmax.f32 %v3403, %v3411
    %v3420 = vmax.f32 %v3404, %v3412
    %v3421 = vmax.f32 %v3405, %v3413
    %v3422 = vmax.f32 %v3406, %v3414
    %v3423 = vmax.f32 %v3407, %v3415
    %v3424 = vmax.f32 %v3408, %v3416
    %v3425 = vmax.f32 %v3409, %v3417
    %v3426 = vld [vmem:[%s4] sm:$0x1]
    %v3427 = vmax.f32 %v3418, %v3419
    %v3429 = vperm.slane %v3426, 0
    %v3431 = vadd.f32 %v3427, %v3429
    %v3432 = vmax.f32 %v3431, 0.0
    %v3433 = vpack.c.bf16 %v3432, %v3432
    %v3434 = vmax.f32 %v3420, %v3421
    %v3435 = vadd.f32 %v3434, %v3429
    %v3436 = vmax.f32 %v3435, 0.0
    %v3437 = vpack.c.bf16 %v3436, %v3436
    %v3438 = vmax.f32 %v3422, %v3423
    %v3439 = vadd.f32 %v3438, %v3429
    %v3440 = vmax.f32 %v3439, 0.0
    %v3441 = vpack.c.bf16 %v3440, %v3440
    %v3442 = vmax.f32 %v3424, %v3425
    %v3443 = vadd.f32 %v3442, %v3429
    %v3444 = vmax.f32 %v3443, 0.0
    %v3445 = vpack.c.bf16 %v3444, %v3444
    %v3446 = vld [vmem:[%s5] sm:$0xf]
    %v3447 = vld [vmem:[%s5 + $0x4] sm:$0xf]
    %v3448 = vld [vmem:[%s5 + $0x8] sm:$0xf]
    %v3449 = vld [vmem:[%s5 + $0xc] sm:$0xf]
    %v3450 = vld [vmem:[%s5 + $0x10] sm:$0xf]
    %v3451 = vld [vmem:[%s5 + $0x14] sm:$0xf]
    %v3452 = vld [vmem:[%s5 + $0x18] sm:$0xf]
    %v3453 = vld [vmem:[%s5 + $0x1c] sm:$0xf]
    %v3454 = vld [vmem:[%s5 + $0x20] sm:$0xf]
    %v3455 = vld [vmem:[%s5 + $0x24] sm:$0xf]
    %v3456 = vld [vmem:[%s5 + $0x28] sm:$0xf]
    %v3457 = vld [vmem:[%s5 + $0x2c] sm:$0xf]
    %v3458 = vld [vmem:[%s5 + $0x30] sm:$0xf]
    %v3459 = vld [vmem:[%s5 + $0x34] sm:$0xf]
    %v3460 = vld [vmem:[%s5 + $0x38] sm:$0xf]
    %v3461 = vld [vmem:[%s5 + $0x3c] sm:$0xf]
    %v3462 = vld [vmem:[%s5 + $0x40] sm:$0xf]
    %v3463 = vld [vmem:[%s5 + $0x44] sm:$0xf]
    %v3464 = vld [vmem:[%s5 + $0x48] sm:$0xf]
    %v3465 = vld [vmem:[%s5 + $0x4c] sm:$0xf]
    %v3466 = vld [vmem:[%s5 + $0x50] sm:$0xf]
    %v3467 = vld [vmem:[%s5 + $0x54] sm:$0xf]
    %v3468 = vld [vmem:[%s5 + $0x58] sm:$0xf]
    %v3469 = vld [vmem:[%s5 + $0x5c] sm:$0xf]
    %v3470 = vld [vmem:[%s5 + $0x60] sm:$0xf]
    %v3471 = vld [vmem:[%s5 + $0x64] sm:$0xf]
    %v3472 = vld [vmem:[%s5 + $0x68] sm:$0xf]
    %v3473 = vld [vmem:[%s5 + $0x6c] sm:$0xf]
    %v3474 = vld [vmem:[%s5 + $0x70] sm:$0xf]
    %v3475 = vld [vmem:[%s5 + $0x74] sm:$0xf]
    %v3476 = vld [vmem:[%s5 + $0x78] sm:$0xf]
    %v3477 = vld [vmem:[%s5 + $0x7c] sm:$0xf]
    %v3478 = vld [vmem:[%s5 + $0x80] sm:$0xf]
    %v3479 = vld [vmem:[%s5 + $0x84] sm:$0xf]
    %v3480 = vld [vmem:[%s5 + $0x88] sm:$0xf]
    %v3481 = vld [vmem:[%s5 + $0x8c] sm:$0xf]
    %v3482 = vld [vmem:[%s5 + $0x90] sm:$0xf]
    %v3483 = vld [vmem:[%s5 + $0x94] sm:$0xf]
    %v3484 = vld [vmem:[%s5 + $0x98] sm:$0xf]
    %v3485 = vld [vmem:[%s5 + $0x9c] sm:$0xf]
    %v3486 = vld [vmem:[%s5 + $0xa0] sm:$0xf]
    %v3487 = vld [vmem:[%s5 + $0xa4] sm:$0xf]
    %v3488 = vld [vmem:[%s5 + $0xa8] sm:$0xf]
    %v3489 = vld [vmem:[%s5 + $0xac] sm:$0xf]
    %v3490 = vld [vmem:[%s5 + $0xb0] sm:$0xf]
    %v3491 = vld [vmem:[%s5 + $0xb4] sm:$0xf]
    %v3492 = vld [vmem:[%s5 + $0xb8] sm:$0xf]
    %v3493 = vld [vmem:[%s5 + $0xbc] sm:$0xf]
    %v3494 = vld [vmem:[%s5 + $0xc0] sm:$0xf]
    %v3495 = vld [vmem:[%s5 + $0xc4] sm:$0xf]
    %v3496 = vld [vmem:[%s5 + $0xc8] sm:$0xf]
    %v3497 = vld [vmem:[%s5 + $0xcc] sm:$0xf]
    %v3498 = vld [vmem:[%s5 + $0xd0] sm:$0xf]
    %v3499 = vld [vmem:[%s5 + $0xd4] sm:$0xf]
    %v3500 = vld [vmem:[%s5 + $0xd8] sm:$0xf]
    %v3501 = vld [vmem:[%s5 + $0xdc] sm:$0xf]
    %v3502 = vld [vmem:[%s5 + $0xe0] sm:$0xf]
    %v3503 = vld [vmem:[%s5 + $0xe4] sm:$0xf]
    %v3504 = vld [vmem:[%s5 + $0xe8] sm:$0xf]
    %v3505 = vld [vmem:[%s5 + $0xec] sm:$0xf]
    %v3506 = vld [vmem:[%s5 + $0xf0] sm:$0xf]
    %v3507 = vld [vmem:[%s5 + $0xf4] sm:$0xf]
    %v3508 = vld [vmem:[%s5 + $0xf8] sm:$0xf]
    %v3509 = vld [vmem:[%s5 + $0xfc] sm:$0xf]
    %v3510 = vld [vmem:[%s6] sm:$0x1]
    %v3512 = vperm.slane %v3510, 0
    %v3578 = vunpack.c.l.b16 %v3446
    %v3579 = vunpack.c.l.b16 %v3447
    %v3580 = vunpack.c.l.b16 %v3448
    %v3581 = vunpack.c.l.b16 %v3449
    %v3582 = vunpack.c.l.b16 %v3450
    %v3583 = vunpack.c.l.b16 %v3451
    %v3584 = vunpack.c.l.b16 %v3452
    %v3585 = vunpack.c.l.b16 %v3453
    %v3586 = vunpack.c.l.b16 %v3454
    %v3587 = vunpack.c.l.b16 %v3455
    %v3588 = vunpack.c.l.b16 %v3456
    %v3589 = vunpack.c.l.b16 %v3457
    %v3590 = vunpack.c.l.b16 %v3458
    %v3591 = vunpack.c.l.b16 %v3459
    %v3592 = vunpack.c.l.b16 %v3460
    %v3593 = vunpack.c.l.b16 %v3461
    %v3594 = vunpack.c.l.b16 %v3462
    %v3595 = vunpack.c.l.b16 %v3463
    %v3596 = vunpack.c.l.b16 %v3464
    %v3597 = vunpack.c.l.b16 %v3465
    %v3598 = vunpack.c.l.b16 %v3466
    %v3599 = vunpack.c.l.b16 %v3467
    %v3600 = vunpack.c.l.b16 %v3468
    %v3601 = vunpack.c.l.b16 %v3469
    %v3602 = vunpack.c.l.b16 %v3470
    %v3603 = vunpack.c.l.b16 %v3471
    %v3604 = vunpack.c.l.b16 %v3472
    %v3605 = vunpack.c.l.b16 %v3473
    %v3606 = vunpack.c.l.b16 %v3474
    %v3607 = vunpack.c.l.b16 %v3475
    %v3608 = vunpack.c.l.b16 %v3476
    %v3609 = vunpack.c.l.b16 %v3477
    %v3610 = vunpack.c.l.b16 %v3478
    %v3611 = vunpack.c.l.b16 %v3479
    %v3612 = vunpack.c.l.b16 %v3480
    %v3613 = vunpack.c.l.b16 %v3481
    %v3614 = vunpack.c.l.b16 %v3482
    %v3615 = vunpack.c.l.b16 %v3483
    %v3616 = vunpack.c.l.b16 %v3484
    %v3617 = vunpack.c.l.b16 %v3485
    %v3618 = vunpack.c.l.b16 %v3486
    %v3619 = vunpack.c.l.b16 %v3487
    %v3620 = vunpack.c.l.b16 %v3488
    %v3621 = vunpack.c.l.b16 %v3489
    %v3622 = vunpack.c.l.b16 %v3490
    %v3623 = vunpack.c.l.b16 %v3491
    %v3624 = vunpack.c.l.b16 %v3492
    %v3625 = vunpack.c.l.b16 %v3493
    %v3626 = vunpack.c.l.b16 %v3494
    %v3627 = vunpack.c.l.b16 %v3495
    %v3628 = vunpack.c.l.b16 %v3496
    %v3629 = vunpack.c.l.b16 %v3497
    %v3630 = vunpack.c.l.b16 %v3498
    %v3631 = vunpack.c.l.b16 %v3499
    %v3632 = vunpack.c.l.b16 %v3500
    %v3633 = vunpack.c.l.b16 %v3501
    %v3634 = vunpack.c.l.b16 %v3502
    %v3635 = vunpack.c.l.b16 %v3503
    %v3636 = vunpack.c.l.b16 %v3504
    %v3637 = vunpack.c.l.b16 %v3505
    %v3638 = vunpack.c.l.b16 %v3506
    %v3639 = vunpack.c.l.b16 %v3507
    %v3640 = vunpack.c.l.b16 %v3508
    %v3641 = vunpack.c.l.b16 %v3509
    %v3642 = vpack.c.b16 %v3579, %v3578
    %v3643 = vpack.c.b16 %v3581, %v3580
    %v3644 = vpack.c.b16 %v3583, %v3582
    %v3645 = vpack.c.b16 %v3585, %v3584
    %v3646 = vpack.c.b16 %v3587, %v3586
    %v3647 = vpack.c.b16 %v3589, %v3588
    %v3648 = vpack.c.b16 %v3591, %v3590
    %v3649 = vpack.c.b16 %v3593, %v3592
    %v3650 = vpack.c.b16 %v3595, %v3594
    %v3651 = vpack.c.b16 %v3597, %v3596
    %v3652 = vpack.c.b16 %v3599, %v3598
    %v3653 = vpack.c.b16 %v3601, %v3600
    %v3654 = vpack.c.b16 %v3603, %v3602
    %v3655 = vpack.c.b16 %v3605, %v3604
    %v3656 = vpack.c.b16 %v3607, %v3606
    %v3657 = vpack.c.b16 %v3609, %v3608
    %v3658 = vpack.c.b16 %v3611, %v3610
    %v3659 = vpack.c.b16 %v3613, %v3612
    %v3660 = vpack.c.b16 %v3615, %v3614
    %v3661 = vpack.c.b16 %v3617, %v3616
    %v3662 = vpack.c.b16 %v3619, %v3618
    %v3663 = vpack.c.b16 %v3621, %v3620
    %v3664 = vpack.c.b16 %v3623, %v3622
    %v3665 = vpack.c.b16 %v3625, %v3624
    %v3666 = vpack.c.b16 %v3627, %v3626
    %v3667 = vpack.c.b16 %v3629, %v3628
    %v3668 = vpack.c.b16 %v3631, %v3630
    %v3669 = vpack.c.b16 %v3633, %v3632
    %v3670 = vpack.c.b16 %v3635, %v3634
    %v3671 = vpack.c.b16 %v3637, %v3636
    %v3672 = vpack.c.b16 %v3639, %v3638
    %v3673 = vpack.c.b16 %v3641, %v3640
    %3706 = vmatpush.bf16.msra.mxu0 %v3649
    %3707 = vmatpush.bf16.msra.mxu0 %v3648
    %3708 = vmatpush.bf16.msra.mxu0 %v3647
    %3709 = vmatpush.bf16.msra.mxu0 %v3646
    %3710 = vmatpush.bf16.msra.mxu0 %v3645
    %3711 = vmatpush.bf16.msra.mxu0 %v3644
    %3712 = vmatpush.bf16.msra.mxu0 %v3643
    %3713 = vmatpush.bf16.msra.mxu0 %v3642
    %3714 = vmatmul.bf16.gmra.mxu0 %v3433
    %v3715 = vpop.f32.mrf.mxu0
    %v3716 = vadd.f32 %v3512, %v3715
    %v3717 = vpop.f32.mrf.mxu0
    %3718 = vdwg.mxu0
    %3719 = vmatpush.bf16.msra.mxu0 %v3657
    %3720 = vmatpush.bf16.msra.mxu0 %v3656
    %3721 = vmatpush.bf16.msra.mxu0 %v3655
    %3722 = vmatpush.bf16.msra.mxu0 %v3654
    %3723 = vmatpush.bf16.msra.mxu0 %v3653
    %3724 = vmatpush.bf16.msra.mxu0 %v3652
    %3725 = vmatpush.bf16.msra.mxu0 %v3651
    %3726 = vmatpush.bf16.msra.mxu0 %v3650
    %3727 = vmatmul.bf16.gmra.mxu0 %v3437
    %v3728 = vpop.f32.mrf.mxu0
    %v3729 = vadd.f32 %v3716, %v3728
    %v3730 = vpop.f32.mrf.mxu0
    %3731 = vdwg.mxu0
    %3732 = vmatpush.bf16.msra.mxu0 %v3665
    %3733 = vmatpush.bf16.msra.mxu0 %v3664
    %3734 = vmatpush.bf16.msra.mxu0 %v3663
    %3735 = vmatpush.bf16.msra.mxu0 %v3662
    %3736 = vmatpush.bf16.msra.mxu0 %v3661
    %3737 = vmatpush.bf16.msra.mxu0 %v3660
    %3738 = vmatpush.bf16.msra.mxu0 %v3659
    %3739 = vmatpush.bf16.msra.mxu0 %v3658
    %3740 = vmatmul.bf16.gmra.mxu0 %v3441
    %v3741 = vpop.f32.mrf.mxu0
    %v3742 = vadd.f32 %v3729, %v3741
    %v3743 = vpop.f32.mrf.mxu0
    %3744 = vdwg.mxu0
    %3745 = vmatpush.bf16.msra.mxu0 %v3673
    %3746 = vmatpush.bf16.msra.mxu0 %v3672
    %3747 = vmatpush.bf16.msra.mxu0 %v3671
    %3748 = vmatpush.bf16.msra.mxu0 %v3670
    %3749 = vmatpush.bf16.msra.mxu0 %v3669
    %3750 = vmatpush.bf16.msra.mxu0 %v3668
    %3751 = vmatpush.bf16.msra.mxu0 %v3667
    %3752 = vmatpush.bf16.msra.mxu0 %v3666
    %3753 = vmatmul.bf16.gmra.mxu0 %v3445
    %v3754 = vpop.f32.mrf.mxu0
    %v3755 = vadd.f32 %v3742, %v3754
    %v3756 = vpop.f32.mrf.mxu0
    %3757 = vdwg.mxu0
    %v3758 = vmax.f32 %v3755, 0.0
    %v3759 = vpack.c.bf16 %v3758, %v3758
    %v3760 = vld [vmem:[%s7] sm:$0xf]
    %v3761 = vld [vmem:[%s7 + $0x4] sm:$0xf]
    %v3762 = vld [vmem:[%s7 + $0x8] sm:$0xf]
    %v3763 = vld [vmem:[%s7 + $0xc] sm:$0xf]
    %v3764 = vld [vmem:[%s7 + $0x10] sm:$0xf]
    %v3765 = vld [vmem:[%s7 + $0x14] sm:$0xf]
    %v3766 = vld [vmem:[%s7 + $0x18] sm:$0x1]
    %v3767 = vld [vmem:[%s8] sm:$0x1]
    %v3769 = vperm.slane %v3767, 0
    %v3778 = vunpack.c.l.b16 %v3760
    %v3779 = vunpack.c.l.b16 %v3761
    %v3780 = vunpack.c.l.b16 %v3762
    %v3781 = vunpack.c.l.b16 %v3763
    %v3782 = vunpack.c.l.b16 %v3764
    %v3783 = vunpack.c.l.b16 %v3765
    %v3784 = vunpack.c.l.b16 %v3766
    %v3785 = vpack.c.b16 %v3779, %v3778
    %v3786 = vpack.c.b16 %v3781, %v3780
    %v3787 = vpack.c.b16 %v3783, %v3782
    %v3788 = vpack.c.b16 %v3784, %v3784
    %vm3792 = vcmask 408576
    %v3794 = vsel %vm3792, %v3759, 0
    %vm3796 = vcmask 1040384
    %v3798 = vsel %vm3796, %v3788, 0
    %3800 = vmatpush.bf16.msra.mxu0 0
    %3801 = vmatpush.bf16.msra.mxu0 0
    %3802 = vmatpush.bf16.msra.mxu0 0
    %3803 = vmatpush.bf16.msra.mxu0 0
    %3804 = vmatpush.bf16.msra.mxu0 %v3798
    %3805 = vmatpush.bf16.msra.mxu0 %v3787
    %3806 = vmatpush.bf16.msra.mxu0 %v3786
    %3807 = vmatpush.bf16.msra.mxu0 %v3785
    %3808 = vmatmul.bf16.gmra.mxu0 %v3794
    %v3809 = vpop.f32.mrf.mxu0
    %v3810 = vadd.f32 %v3769, %v3809
    %v3811 = vpop.f32.mrf.mxu0
    %3812 = vdwg.mxu0
    %3813 = vst [vmem:[%s9] sm:$0xff] %v3810
    // Predicated region
    $region42: #{net_forward.1} parent=1 // pred_check
      _
    $region43: #{net_forward.1} parent=1 // pred_check_branch
      %3815 = sbr.rel (0) target = $region45
    $region44: #{net_forward.1} parent=1 // pred_region
      _
    $region45: #{net_forward.1} parent=1 // pred_fallthru
      _
    // Predicated region
    $region46: #{net_forward.1} parent=1 // pred_check
      _
    $region47: #{net_forward.1} parent=1 // pred_check_branch
      %3817 = sbr.rel (0) target = $region49
    $region48: #{net_forward.1} parent=1 // pred_region
      _
    $region49: #{net_forward.1} parent=1 // pred_fallthru
      _
    %3818 = vsyncpa [#allocation6], 1

</llo_original>
